<compile_context>
chip_gen: v7x
topology: tpu7x:2x2x1
jax: 0.10.0
libtpu: 0.0.40
codegen_flags: <defaults>
</compile_context>

<pallas_src>
from functools import partial

import jax
import jax.numpy as jnp
from jax import lax
from jax.experimental import pallas as pl
from jax.experimental.pallas import tpu as pltpu

_EPS = 1e-5
_LANES = 128


# --------------------------------------------------------------------------
# Fused kernel: one image per grid step.
#   conv1(3x3) -> BN1 -> ReLU -> conv2(3x3) -> BN2 -> +identity -> ReLU
# --------------------------------------------------------------------------
def _fused_basic_block_kernel(x_ref, w1_ref, w2_ref, s1_ref, b1_ref,
                              s2_ref, b2_ref, o_ref, xpad_ref, midpad_ref,
                              *, H, W, Cp):

    def im2col_bf16(pad_ref):
        # Build the (H*W, 9*Cp) patch matrix once -> ONE fat MXU matmul.
        cols = []
        for ky in range(3):
            for kx in range(3):
                tap = pad_ref[ky:ky + H, kx:kx + W, :].reshape(H * W, Cp)
                cols.append(tap.astype(jnp.bfloat16))
        return jnp.concatenate(cols, axis=-1)                 # (H*W, 9*Cp) bf16

    x = x_ref[0].astype(jnp.float32)                          # (H, W, Cp); also the residual

    # ---- conv1 + BN1 + ReLU (halo zero-padded in VMEM) -------------------
    xpad_ref[...] = jnp.zeros_like(xpad_ref)
    xpad_ref[1:H + 1, 1:W + 1, :] = x
    acc1 = jnp.dot(im2col_bf16(xpad_ref), w1_ref[...],
                   preferred_element_type=jnp.float32)        # (H*W, Cp) f32
    out1 = jnp.maximum(acc1 * s1_ref[...] + b1_ref[...], 0.0)

    # ---- conv2 + BN2 + residual + ReLU (intermediate stays in VMEM) ------
    midpad_ref[...] = jnp.zeros_like(midpad_ref)
    midpad_ref[1:H + 1, 1:W + 1, :] = out1.reshape(H, W, Cp)
    acc2 = jnp.dot(im2col_bf16(midpad_ref), w2_ref[...],
                   preferred_element_type=jnp.float32)        # (H*W, Cp) f32
    out2 = acc2 * s2_ref[...] + b2_ref[...] + x.reshape(H * W, Cp)
    o_ref[...] = jnp.maximum(out2, 0.0).reshape(1, H, W, Cp)


# --------------------------------------------------------------------------
# Wrapper: NCHW in/out (like PyTorch), folded inference BatchNorm.
# --------------------------------------------------------------------------
def _fold_bn(gamma, beta, mean, var):
    scale = gamma / jnp.sqrt(var + _EPS)
    shift = beta - mean * scale
    return scale, shift


@jax.jit
def basic_block_forward(x_nchw, p):
    N, C, H, W = x_nchw.shape
    Cp = ((C + _LANES - 1) // _LANES) * _LANES   # lane-dense channel padding

    # NCHW -> NHWC, channel-pad, bf16 activations for the MXU.
    x = jnp.transpose(x_nchw, (0, 2, 3, 1)).astype(jnp.float32)
    x = jnp.pad(x, ((0, 0), (0, 0), (0, 0), (0, Cp - C))).astype(jnp.bfloat16)

    def prep_w(w):  # (3,3,Cin,Cout) HWIO -> (9*Cp, Cp) bf16, (ky,kx,cin)-major rows
        w = jnp.pad(w, ((0, 0), (0, 0),
                        (0, Cp - w.shape[2]), (0, Cp - w.shape[3])))
        return w.reshape(9 * Cp, Cp).astype(jnp.bfloat16)

    def prep_sb(gamma, beta, mean, var):
        s, b = _fold_bn(gamma, beta, mean, var)
        s = jnp.pad(s, ((0, Cp - C),)).reshape(1, Cp).astype(jnp.float32)
        b = jnp.pad(b, ((0, Cp - C),)).reshape(1, Cp).astype(jnp.float32)
        return s, b

    w1 = prep_w(p["w1"])
    w2 = prep_w(p["w2"])
    s1, b1 = prep_sb(p["gamma1"], p["beta1"], p["mean1"], p["var1"])
    s2, b2 = prep_sb(p["gamma2"], p["beta2"], p["mean2"], p["var2"])

    kernel = partial(_fused_basic_block_kernel, H=H, W=W, Cp=Cp)
    rep2 = lambda n: (0, 0)

    out = pl.pallas_call(
        kernel,
        grid=(N,),
        in_specs=[
            pl.BlockSpec((1, H, W, Cp), lambda n: (n, 0, 0, 0)),   # x (per image)
            pl.BlockSpec((9 * Cp, Cp), rep2),                      # w1 (resident)
            pl.BlockSpec((9 * Cp, Cp), rep2),                      # w2 (resident)
            pl.BlockSpec((1, Cp), rep2),                           # s1
            pl.BlockSpec((1, Cp), rep2),                           # b1
            pl.BlockSpec((1, Cp), rep2),                           # s2
            pl.BlockSpec((1, Cp), rep2),                           # b2
        ],
        out_specs=pl.BlockSpec((1, H, W, Cp), lambda n: (n, 0, 0, 0)),
        out_shape=jax.ShapeDtypeStruct((N, H, W, Cp), jnp.float32),
        scratch_shapes=[
            pltpu.VMEM((H + 2, W + 2, Cp), jnp.float32),   # padded conv1 input
            pltpu.VMEM((H + 2, W + 2, Cp), jnp.float32),   # padded conv2 input
        ],
        compiler_params=pltpu.CompilerParams(
            dimension_semantics=("parallel",),
            vmem_limit_bytes=32 * 1024 * 1024,
        ),
    )(x, w1, w2, s1, b1, s2, b2)

    out = out[:, :, :, :C]
    return jnp.transpose(out, (0, 3, 1, 2))                        # NHWC -> NCHW


# --------------------------------------------------------------------------
# Pure-JAX reference mirroring the kernel's precision choices
# (bf16 conv operands, f32 accumulation, f32 BN/residual/ReLU).
# --------------------------------------------------------------------------
def _ref_forward(x_nchw, p):
    dn = ("NHWC", "HWIO", "NHWC")
    x = jnp.transpose(x_nchw, (0, 2, 3, 1)).astype(jnp.float32)
    x = x.astype(jnp.bfloat16).astype(jnp.float32)   # kernel receives bf16 x
    s1, b1 = _fold_bn(p["gamma1"], p["beta1"], p["mean1"], p["var1"])
    s2, b2 = _fold_bn(p["gamma2"], p["beta2"], p["mean2"], p["var2"])
    o = lax.conv_general_dilated(x.astype(jnp.bfloat16), p["w1"].astype(jnp.bfloat16),
                                 (1, 1), "SAME", dimension_numbers=dn,
                                 preferred_element_type=jnp.float32)
    o = jnp.maximum(o * s1 + b1, 0.0)
    o = lax.conv_general_dilated(o.astype(jnp.bfloat16), p["w2"].astype(jnp.bfloat16),
                                 (1, 1), "SAME", dimension_numbers=dn,
                                 preferred_element_type=jnp.float32)
    o = jnp.maximum(o * s2 + b2 + x, 0.0)
    return jnp.transpose(o, (0, 3, 1, 2))


# --------------------------------------------------------------------------
# Deterministic parameter construction (shapes from BasicBlock.__init__)
# --------------------------------------------------------------------------
def make_params(key, inplanes, planes):
    ks = jax.random.split(key, 10)
    # conv weights stored as HWIO (kH, kW, Cin, Cout)
    w1 = 0.1 * jax.random.normal(ks[0], (3, 3, inplanes, planes), jnp.float32)
    w2 = 0.1 * jax.random.normal(ks[1], (3, 3, planes, planes), jnp.float32)
    return dict(
        w1=w1, w2=w2,
        gamma1=1.0 + 0.1 * jax.random.normal(ks[2], (planes,), jnp.float32),
        beta1=0.1 * jax.random.normal(ks[3], (planes,), jnp.float32),
        mean1=0.1 * jax.random.normal(ks[4], (planes,), jnp.float32),
        var1=1.0 + 0.1 * jnp.abs(jax.random.normal(ks[5], (planes,), jnp.float32)),
        gamma2=1.0 + 0.1 * jax.random.normal(ks[6], (planes,), jnp.float32),
        beta2=0.1 * jax.random.normal(ks[7], (planes,), jnp.float32),
        mean2=0.1 * jax.random.normal(ks[8], (planes,), jnp.float32),
        var2=1.0 + 0.1 * jnp.abs(jax.random.normal(ks[9], (planes,), jnp.float32)),
    )


if __name__ == "__main__":
    key = jax.random.PRNGKey(0)
    kx, kp = jax.random.split(key)

    N, C, H, W = 2, 4, 16, 16            # inplanes = planes = 4, stride = 1
    x = jax.random.normal(kx, (N, C, H, W), jnp.float32)
    params = make_params(kp, inplanes=C, planes=C)

    out = jax.block_until_ready(basic_block_forward(x, params))
    ref = jax.block_until_ready(_ref_forward(x, params))

    max_err = float(jnp.max(jnp.abs(out - ref)))
    assert out.shape == (N, C, H, W)
    assert max_err < 1e-2, f"mismatch vs reference: {max_err}"

    print("KERNEL_OK")
</pallas_src>

<mosaic_0001>
module attributes {stable_mosaic.version = 11 : i64} {
  func.func @_fused_basic_block_kernel(%arg0: i32, %arg1: memref<1x16x16x128xbf16, #tpu.memory_space<vmem>>, %arg2: memref<1152x128xbf16, #tpu.memory_space<vmem>>, %arg3: memref<1152x128xbf16, #tpu.memory_space<vmem>>, %arg4: memref<1x128xf32, #tpu.memory_space<vmem>>, %arg5: memref<1x128xf32, #tpu.memory_space<vmem>>, %arg6: memref<1x128xf32, #tpu.memory_space<vmem>>, %arg7: memref<1x128xf32, #tpu.memory_space<vmem>>, %arg8: memref<1x16x16x128xf32, #tpu.memory_space<vmem>>, %arg9: memref<18x18x128xf32, #tpu.memory_space<vmem>>, %arg10: memref<18x18x128xf32, #tpu.memory_space<vmem>>) attributes {dimension_semantics = [#tpu.dimension_semantics<parallel>], iteration_bounds = array<i64: 2>, scalar_prefetch = 0 : i64, scratch_operands = 2 : i64, tpu.core_type = #tpu.core_type<tc>, window_params = [{transform_indices = @transform_0, window_bounds = array<i64: 1, 16, 16, 128>}, {pipeline_mode = #tpu.pipeline_mode<synchronous>, transform_indices = @transform_1, window_bounds = array<i64: 1152, 128>}, {pipeline_mode = #tpu.pipeline_mode<synchronous>, transform_indices = @transform_2, window_bounds = array<i64: 1152, 128>}, {pipeline_mode = #tpu.pipeline_mode<synchronous>, transform_indices = @transform_3, window_bounds = array<i64: 1, 128>}, {pipeline_mode = #tpu.pipeline_mode<synchronous>, transform_indices = @transform_4, window_bounds = array<i64: 1, 128>}, {pipeline_mode = #tpu.pipeline_mode<synchronous>, transform_indices = @transform_5, window_bounds = array<i64: 1, 128>}, {pipeline_mode = #tpu.pipeline_mode<synchronous>, transform_indices = @transform_6, window_bounds = array<i64: 1, 128>}, {transform_indices = @transform_7, window_bounds = array<i64: 1, 16, 16, 128>}]} {
    %c0 = arith.constant 0 : index
    %c0_0 = arith.constant 0 : index
    %c0_1 = arith.constant 0 : index
    %c0_2 = arith.constant 0 : index
    %0 = vector.load %arg1[%c0, %c0_0, %c0_1, %c0_2] : memref<1x16x16x128xbf16, #tpu.memory_space<vmem>>, vector<1x16x16x128xbf16>
    %1 = vector.shape_cast %0 : vector<1x16x16x128xbf16> to vector<16x16x128xbf16>
    %2 = arith.extf %1 : vector<16x16x128xbf16> to vector<16x16x128xf32>
    %cst = arith.constant 0.000000e+00 : f32
    %3 = vector.broadcast %cst : f32 to vector<18x18x128xf32>
    %c0_3 = arith.constant 0 : index
    %c0_4 = arith.constant 0 : index
    %c0_5 = arith.constant 0 : index
    %4 = vector.load %arg9[%c0_3, %c0_4, %c0_5] : memref<18x18x128xf32, #tpu.memory_space<vmem>>, vector<18x18x128xf32>
    tpu.vector_store %arg9[%c0_3, %c0_4, %c0_5], %3 {strides = array<i32>} : memref<18x18x128xf32, #tpu.memory_space<vmem>>, vector<18x18x128xf32>,
    %c1 = arith.constant 1 : index
    %c1_6 = arith.constant 1 : index
    %c0_7 = arith.constant 0 : index
    %5 = vector.load %arg9[%c1, %c1_6, %c0_7] : memref<18x18x128xf32, #tpu.memory_space<vmem>>, vector<16x16x128xf32>
    tpu.vector_store %arg9[%c1, %c1_6, %c0_7], %2 {strides = array<i32>} : memref<18x18x128xf32, #tpu.memory_space<vmem>>, vector<16x16x128xf32>,
    %c0_8 = arith.constant 0 : index
    %c0_9 = arith.constant 0 : index
    %c0_10 = arith.constant 0 : index
    %6 = vector.load %arg9[%c0_8, %c0_9, %c0_10] : memref<18x18x128xf32, #tpu.memory_space<vmem>>, vector<16x16x128xf32>
    %7 = vector.shape_cast %6 : vector<16x16x128xf32> to vector<256x128xf32>
    %8 = arith.truncf %7 : vector<256x128xf32> to vector<256x128xbf16>
    %c0_11 = arith.constant 0 : index
    %c1_12 = arith.constant 1 : index
    %c0_13 = arith.constant 0 : index
    %9 = vector.load %arg9[%c0_11, %c1_12, %c0_13] : memref<18x18x128xf32, #tpu.memory_space<vmem>>, vector<16x16x128xf32>
    %10 = vector.shape_cast %9 : vector<16x16x128xf32> to vector<256x128xf32>
    %11 = arith.truncf %10 : vector<256x128xf32> to vector<256x128xbf16>
    %c0_14 = arith.constant 0 : index
    %c2 = arith.constant 2 : index
    %c0_15 = arith.constant 0 : index
    %12 = vector.load %arg9[%c0_14, %c2, %c0_15] : memref<18x18x128xf32, #tpu.memory_space<vmem>>, vector<16x16x128xf32>
    %13 = vector.shape_cast %12 : vector<16x16x128xf32> to vector<256x128xf32>
    %14 = arith.truncf %13 : vector<256x128xf32> to vector<256x128xbf16>
    %c1_16 = arith.constant 1 : index
    %c0_17 = arith.constant 0 : index
    %c0_18 = arith.constant 0 : index
    %15 = vector.load %arg9[%c1_16, %c0_17, %c0_18] : memref<18x18x128xf32, #tpu.memory_space<vmem>>, vector<16x16x128xf32>
    %16 = vector.shape_cast %15 : vector<16x16x128xf32> to vector<256x128xf32>
    %17 = arith.truncf %16 : vector<256x128xf32> to vector<256x128xbf16>
    %c1_19 = arith.constant 1 : index
    %c1_20 = arith.constant 1 : index
    %c0_21 = arith.constant 0 : index
    %18 = vector.load %arg9[%c1_19, %c1_20, %c0_21] : memref<18x18x128xf32, #tpu.memory_space<vmem>>, vector<16x16x128xf32>
    %19 = vector.shape_cast %18 : vector<16x16x128xf32> to vector<256x128xf32>
    %20 = arith.truncf %19 : vector<256x128xf32> to vector<256x128xbf16>
    %c1_22 = arith.constant 1 : index
    %c2_23 = arith.constant 2 : index
    %c0_24 = arith.constant 0 : index
    %21 = vector.load %arg9[%c1_22, %c2_23, %c0_24] : memref<18x18x128xf32, #tpu.memory_space<vmem>>, vector<16x16x128xf32>
    %22 = vector.shape_cast %21 : vector<16x16x128xf32> to vector<256x128xf32>
    %23 = arith.truncf %22 : vector<256x128xf32> to vector<256x128xbf16>
    %c2_25 = arith.constant 2 : index
    %c0_26 = arith.constant 0 : index
    %c0_27 = arith.constant 0 : index
    %24 = vector.load %arg9[%c2_25, %c0_26, %c0_27] : memref<18x18x128xf32, #tpu.memory_space<vmem>>, vector<16x16x128xf32>
    %25 = vector.shape_cast %24 : vector<16x16x128xf32> to vector<256x128xf32>
    %26 = arith.truncf %25 : vector<256x128xf32> to vector<256x128xbf16>
    %c2_28 = arith.constant 2 : index
    %c1_29 = arith.constant 1 : index
    %c0_30 = arith.constant 0 : index
    %27 = vector.load %arg9[%c2_28, %c1_29, %c0_30] : memref<18x18x128xf32, #tpu.memory_space<vmem>>, vector<16x16x128xf32>
    %28 = vector.shape_cast %27 : vector<16x16x128xf32> to vector<256x128xf32>
    %29 = arith.truncf %28 : vector<256x128xf32> to vector<256x128xbf16>
    %c2_31 = arith.constant 2 : index
    %c2_32 = arith.constant 2 : index
    %c0_33 = arith.constant 0 : index
    %30 = vector.load %arg9[%c2_31, %c2_32, %c0_33] : memref<18x18x128xf32, #tpu.memory_space<vmem>>, vector<16x16x128xf32>
    %31 = vector.shape_cast %30 : vector<16x16x128xf32> to vector<256x128xf32>
    %32 = arith.truncf %31 : vector<256x128xf32> to vector<256x128xbf16>
    %33 = tpu.concatenate %8, %11, %14, %17, %20, %23, %26, %29, %32 in 1 : vector<256x128xbf16>, vector<256x128xbf16>, vector<256x128xbf16>, vector<256x128xbf16>, vector<256x128xbf16>, vector<256x128xbf16>, vector<256x128xbf16>, vector<256x128xbf16>, vector<256x128xbf16> -> vector<256x1152xbf16>
    %c0_34 = arith.constant 0 : index
    %c0_35 = arith.constant 0 : index
    %34 = vector.load %arg2[%c0_34, %c0_35] : memref<1152x128xbf16, #tpu.memory_space<vmem>>, vector<1152x128xbf16>
    %cst_36 = arith.constant dense<0.000000e+00> : vector<256x128xf32>
    %35 = tpu.matmul %33, %34, %cst_36 {dimension_numbers = #tpu.dot_dimension_numbers<[1], [0], [0], [1], [0, 0, 1, 1], [], []>} : vector<256x1152xbf16>, vector<1152x128xbf16>, vector<256x128xf32> -> vector<256x128xf32>
    %c0_37 = arith.constant 0 : index
    %c0_38 = arith.constant 0 : index
    %36 = vector.load %arg4[%c0_37, %c0_38] : memref<1x128xf32, #tpu.memory_space<vmem>>, vector<1x128xf32>
    %37 = vector.broadcast %36 : vector<1x128xf32> to vector<256x128xf32>
    %38 = arith.mulf %35, %37 : vector<256x128xf32>
    %c0_39 = arith.constant 0 : index
    %c0_40 = arith.constant 0 : index
    %39 = vector.load %arg5[%c0_39, %c0_40] : memref<1x128xf32, #tpu.memory_space<vmem>>, vector<1x128xf32>
    %40 = vector.broadcast %39 : vector<1x128xf32> to vector<256x128xf32>
    %41 = arith.addf %38, %40 : vector<256x128xf32>
    %cst_41 = arith.constant 0.000000e+00 : f32
    %42 = vector.broadcast %cst_41 : f32 to vector<256x128xf32>
    %43 = arith.maximumf %41, %42 : vector<256x128xf32>
    %cst_42 = arith.constant 0.000000e+00 : f32
    %44 = vector.broadcast %cst_42 : f32 to vector<18x18x128xf32>
    %c0_43 = arith.constant 0 : index
    %c0_44 = arith.constant 0 : index
    %c0_45 = arith.constant 0 : index
    %45 = vector.load %arg10[%c0_43, %c0_44, %c0_45] : memref<18x18x128xf32, #tpu.memory_space<vmem>>, vector<18x18x128xf32>
    tpu.vector_store %arg10[%c0_43, %c0_44, %c0_45], %44 {strides = array<i32>} : memref<18x18x128xf32, #tpu.memory_space<vmem>>, vector<18x18x128xf32>,
    %46 = vector.shape_cast %43 : vector<256x128xf32> to vector<16x16x128xf32>
    %c1_46 = arith.constant 1 : index
    %c1_47 = arith.constant 1 : index
    %c0_48 = arith.constant 0 : index
    %47 = vector.load %arg10[%c1_46, %c1_47, %c0_48] : memref<18x18x128xf32, #tpu.memory_space<vmem>>, vector<16x16x128xf32>
    tpu.vector_store %arg10[%c1_46, %c1_47, %c0_48], %46 {strides = array<i32>} : memref<18x18x128xf32, #tpu.memory_space<vmem>>, vector<16x16x128xf32>,
    %c0_49 = arith.constant 0 : index
    %c0_50 = arith.constant 0 : index
    %c0_51 = arith.constant 0 : index
    %48 = vector.load %arg10[%c0_49, %c0_50, %c0_51] : memref<18x18x128xf32, #tpu.memory_space<vmem>>, vector<16x16x128xf32>
    %49 = vector.shape_cast %48 : vector<16x16x128xf32> to vector<256x128xf32>
    %50 = arith.truncf %49 : vector<256x128xf32> to vector<256x128xbf16>
    %c0_52 = arith.constant 0 : index
    %c1_53 = arith.constant 1 : index
    %c0_54 = arith.constant 0 : index
    %51 = vector.load %arg10[%c0_52, %c1_53, %c0_54] : memref<18x18x128xf32, #tpu.memory_space<vmem>>, vector<16x16x128xf32>
    %52 = vector.shape_cast %51 : vector<16x16x128xf32> to vector<256x128xf32>
    %53 = arith.truncf %52 : vector<256x128xf32> to vector<256x128xbf16>
    %c0_55 = arith.constant 0 : index
    %c2_56 = arith.constant 2 : index
    %c0_57 = arith.constant 0 : index
    %54 = vector.load %arg10[%c0_55, %c2_56, %c0_57] : memref<18x18x128xf32, #tpu.memory_space<vmem>>, vector<16x16x128xf32>
    %55 = vector.shape_cast %54 : vector<16x16x128xf32> to vector<256x128xf32>
    %56 = arith.truncf %55 : vector<256x128xf32> to vector<256x128xbf16>
    %c1_58 = arith.constant 1 : index
    %c0_59 = arith.constant 0 : index
    %c0_60 = arith.constant 0 : index
    %57 = vector.load %arg10[%c1_58, %c0_59, %c0_60] : memref<18x18x128xf32, #tpu.memory_space<vmem>>, vector<16x16x128xf32>
    %58 = vector.shape_cast %57 : vector<16x16x128xf32> to vector<256x128xf32>
    %59 = arith.truncf %58 : vector<256x128xf32> to vector<256x128xbf16>
    %c1_61 = arith.constant 1 : index
    %c1_62 = arith.constant 1 : index
    %c0_63 = arith.constant 0 : index
    %60 = vector.load %arg10[%c1_61, %c1_62, %c0_63] : memref<18x18x128xf32, #tpu.memory_space<vmem>>, vector<16x16x128xf32>
    %61 = vector.shape_cast %60 : vector<16x16x128xf32> to vector<256x128xf32>
    %62 = arith.truncf %61 : vector<256x128xf32> to vector<256x128xbf16>
    %c1_64 = arith.constant 1 : index
    %c2_65 = arith.constant 2 : index
    %c0_66 = arith.constant 0 : index
    %63 = vector.load %arg10[%c1_64, %c2_65, %c0_66] : memref<18x18x128xf32, #tpu.memory_space<vmem>>, vector<16x16x128xf32>
    %64 = vector.shape_cast %63 : vector<16x16x128xf32> to vector<256x128xf32>
    %65 = arith.truncf %64 : vector<256x128xf32> to vector<256x128xbf16>
    %c2_67 = arith.constant 2 : index
    %c0_68 = arith.constant 0 : index
    %c0_69 = arith.constant 0 : index
    %66 = vector.load %arg10[%c2_67, %c0_68, %c0_69] : memref<18x18x128xf32, #tpu.memory_space<vmem>>, vector<16x16x128xf32>
    %67 = vector.shape_cast %66 : vector<16x16x128xf32> to vector<256x128xf32>
    %68 = arith.truncf %67 : vector<256x128xf32> to vector<256x128xbf16>
    %c2_70 = arith.constant 2 : index
    %c1_71 = arith.constant 1 : index
    %c0_72 = arith.constant 0 : index
    %69 = vector.load %arg10[%c2_70, %c1_71, %c0_72] : memref<18x18x128xf32, #tpu.memory_space<vmem>>, vector<16x16x128xf32>
    %70 = vector.shape_cast %69 : vector<16x16x128xf32> to vector<256x128xf32>
    %71 = arith.truncf %70 : vector<256x128xf32> to vector<256x128xbf16>
    %c2_73 = arith.constant 2 : index
    %c2_74 = arith.constant 2 : index
    %c0_75 = arith.constant 0 : index
    %72 = vector.load %arg10[%c2_73, %c2_74, %c0_75] : memref<18x18x128xf32, #tpu.memory_space<vmem>>, vector<16x16x128xf32>
    %73 = vector.shape_cast %72 : vector<16x16x128xf32> to vector<256x128xf32>
    %74 = arith.truncf %73 : vector<256x128xf32> to vector<256x128xbf16>
    %75 = tpu.concatenate %50, %53, %56, %59, %62, %65, %68, %71, %74 in 1 : vector<256x128xbf16>, vector<256x128xbf16>, vector<256x128xbf16>, vector<256x128xbf16>, vector<256x128xbf16>, vector<256x128xbf16>, vector<256x128xbf16>, vector<256x128xbf16>, vector<256x128xbf16> -> vector<256x1152xbf16>
    %c0_76 = arith.constant 0 : index
    %c0_77 = arith.constant 0 : index
    %76 = vector.load %arg3[%c0_76, %c0_77] : memref<1152x128xbf16, #tpu.memory_space<vmem>>, vector<1152x128xbf16>
    %cst_78 = arith.constant dense<0.000000e+00> : vector<256x128xf32>
    %77 = tpu.matmul %75, %76, %cst_78 {dimension_numbers = #tpu.dot_dimension_numbers<[1], [0], [0], [1], [0, 0, 1, 1], [], []>} : vector<256x1152xbf16>, vector<1152x128xbf16>, vector<256x128xf32> -> vector<256x128xf32>
    %c0_79 = arith.constant 0 : index
    %c0_80 = arith.constant 0 : index
    %78 = vector.load %arg6[%c0_79, %c0_80] : memref<1x128xf32, #tpu.memory_space<vmem>>, vector<1x128xf32>
    %79 = vector.broadcast %78 : vector<1x128xf32> to vector<256x128xf32>
    %80 = arith.mulf %77, %79 : vector<256x128xf32>
    %c0_81 = arith.constant 0 : index
    %c0_82 = arith.constant 0 : index
    %81 = vector.load %arg7[%c0_81, %c0_82] : memref<1x128xf32, #tpu.memory_space<vmem>>, vector<1x128xf32>
    %82 = vector.broadcast %81 : vector<1x128xf32> to vector<256x128xf32>
    %83 = arith.addf %80, %82 : vector<256x128xf32>
    %84 = vector.shape_cast %2 : vector<16x16x128xf32> to vector<256x128xf32>
    %85 = arith.addf %83, %84 : vector<256x128xf32>
    %cst_83 = arith.constant 0.000000e+00 : f32
    %86 = vector.broadcast %cst_83 : f32 to vector<256x128xf32>
    %87 = arith.maximumf %85, %86 : vector<256x128xf32>
    %88 = vector.shape_cast %87 : vector<256x128xf32> to vector<1x16x16x128xf32>
    %c0_84 = arith.constant 0 : index
    %c0_85 = arith.constant 0 : index
    %c0_86 = arith.constant 0 : index
    %c0_87 = arith.constant 0 : index
    %89 = vector.load %arg8[%c0_84, %c0_85, %c0_86, %c0_87] : memref<1x16x16x128xf32, #tpu.memory_space<vmem>>, vector<1x16x16x128xf32>
    tpu.vector_store %arg8[%c0_84, %c0_85, %c0_86, %c0_87], %88 {strides = array<i32>} : memref<1x16x16x128xf32, #tpu.memory_space<vmem>>, vector<1x16x16x128xf32>,
    return
  }
  func.func @transform_0(%arg0: i32) -> (i32, i32, i32, i32) {
    %c0_i32 = arith.constant 0 : i32
    %c0_i32_0 = arith.constant 0 : i32
    %c0_i32_1 = arith.constant 0 : i32
    %c0_i32_2 = arith.constant 0 : i32
    return %arg0, %c0_i32, %c0_i32_0, %c0_i32_1 : i32, i32, i32, i32
  }
  func.func @transform_1(%arg0: i32) -> (i32, i32) {
    %c0_i32 = arith.constant 0 : i32
    %c0_i32_0 = arith.constant 0 : i32
    %c0_i32_1 = arith.constant 0 : i32
    return %c0_i32, %c0_i32_0 : i32, i32
  }
  func.func @transform_2(%arg0: i32) -> (i32, i32) {
    %c0_i32 = arith.constant 0 : i32
    %c0_i32_0 = arith.constant 0 : i32
    %c0_i32_1 = arith.constant 0 : i32
    return %c0_i32, %c0_i32_0 : i32, i32
  }
  func.func @transform_3(%arg0: i32) -> (i32, i32) {
    %c0_i32 = arith.constant 0 : i32
    %c0_i32_0 = arith.constant 0 : i32
    %c0_i32_1 = arith.constant 0 : i32
    return %c0_i32, %c0_i32_0 : i32, i32
  }
  func.func @transform_4(%arg0: i32) -> (i32, i32) {
    %c0_i32 = arith.constant 0 : i32
    %c0_i32_0 = arith.constant 0 : i32
    %c0_i32_1 = arith.constant 0 : i32
    return %c0_i32, %c0_i32_0 : i32, i32
  }
  func.func @transform_5(%arg0: i32) -> (i32, i32) {
    %c0_i32 = arith.constant 0 : i32
    %c0_i32_0 = arith.constant 0 : i32
    %c0_i32_1 = arith.constant 0 : i32
    return %c0_i32, %c0_i32_0 : i32, i32
  }
  func.func @transform_6(%arg0: i32) -> (i32, i32) {
    %c0_i32 = arith.constant 0 : i32
    %c0_i32_0 = arith.constant 0 : i32
    %c0_i32_1 = arith.constant 0 : i32
    return %c0_i32, %c0_i32_0 : i32, i32
  }
  func.func @transform_7(%arg0: i32) -> (i32, i32, i32, i32) {
    %c0_i32 = arith.constant 0 : i32
    %c0_i32_0 = arith.constant 0 : i32
    %c0_i32_1 = arith.constant 0 : i32
    %c0_i32_2 = arith.constant 0 : i32
    return %arg0, %c0_i32, %c0_i32_0, %c0_i32_1 : i32, i32, i32, i32
  }
}

</mosaic_0001>

<llo_original>
// kernel: basic_block_forward.1
$region0: #{basic_block_forward.1}
  #allocation0 [shape = 'u32[]', space=smem, size = 0x4, offset = 0x4, fixed_abs, tag = 'smem constant byte address 0x4 - core index']
  #allocation1 [shape = 'u32[144,128]{1,0:T(1,128)}', space=vmem, size = 0x12000, scoped, tag = 'internal scratch']
  #allocation2 [shape = 'f32[18,18,128]{2,1,0:T(8,128)}', space=vmem, size = 0x36000, scoped, tag = 'scratch operand']
  #allocation3 [shape = 'f32[18,18,128]{2,1,0:T(8,128)}', space=vmem, size = 0x36000, scoped, tag = 'scratch operand']
  %s0 = inlined_call_operand.vmem [shape: bf16[2,16,16,128], index: 0, kind: input, shape index: {}]
  %s1 = inlined_call_operand.vmem [shape: bf16[1152,128], index: 1, kind: input, shape index: {}]
  %s2 = inlined_call_operand.vmem [shape: bf16[1152,128], index: 2, kind: input, shape index: {}]
  %s3 = inlined_call_operand.vmem [shape: f32[1,128], index: 3, kind: input, shape index: {}]
  %s4 = inlined_call_operand.vmem [shape: f32[1,128], index: 4, kind: input, shape index: {}]
  %s5 = inlined_call_operand.vmem [shape: f32[1,128], index: 5, kind: input, shape index: {}]
  %s6 = inlined_call_operand.vmem [shape: f32[1,128], index: 6, kind: input, shape index: {}]
  %s7 = inlined_call_operand.vmem [shape: f32[2,16,16,128], index: 7, kind: output, shape index: {}]
  %s8 = sld [smem:[#allocation0]]
  $region61: #{basic_block_forward.1} parent=0
    _
  %s10 = ssub.s32 1, %s8
  %s11 = scalar_select 0, %s10, %s8
  loop: start=0, step=1, limit=4
  $region2: #{basic_block_forward.1} parent=0 // loop_pre_header
    _
  $region3: #{basic_block_forward.1} parent=0 // loop_header
    %s13 = sphi 0, %s17
    %p14 = scmp.ge.s32.totalorder %s13, 4
    %s23 = sphi 0, %s25
    %s26 = sphi 0, %s23
    %s27 = sphi 0, %s26
    %s43 = sphi 0, %s27
    %s47 = sphi 0, %s47
    %s49 = sphi 0, %s47
    %s50 = sphi 0, %s49
    %s64 = sphi 0, %s50
    %s68 = sphi 0, %s68
    %s70 = sphi 0, %s68
    %s71 = sphi 0, %s70
    %s85 = sphi 0, %s71
    %s89 = sphi 0, %s89
    %s91 = sphi 0, %s89
    %s92 = sphi 0, %s91
    %s106 = sphi 0, %s92
    %s110 = sphi 0, %s110
    %s112 = sphi 0, %s110
    %s113 = sphi 0, %s112
    %s127 = sphi 0, %s113
    %s131 = sphi 0, %s131
    %s133 = sphi 0, %s131
    %s134 = sphi 0, %s133
    %s148 = sphi 0, %s134
    %s152 = sphi 0, %s152
    %s154 = sphi 0, %s152
    %s155 = sphi 0, %s154
    %s169 = sphi 0, %s155
    %s175 = sphi 0, %s177
    %s178 = sphi 0, %s175
    %s179 = sphi 0, %s178
    %s195 = sphi 0, %s179
  $region4: #{basic_block_forward.1} parent=0 // loop_header_branch
    %16 = sbr.rel (%p14) target = $region8
  $region5: #{basic_block_forward.1} parent=0 // loop_body
    %s18 = ssub.s32 %s13, 1
    %s19 = ssub.s32 %s13, 2
    %s20 = sadd.s32 %s13, 1
    %s21 = ssub.s32 %s13, %s20
    %p22 = scmp.eq.s32.totalorder %s21, 0
    %s24 = sadd.s32 %s23, 1
    %s25 = scalar_select %p22, %s23, %s24
    %p28 = pneg %p22
    %p29 = scmp.eq.s32.totalorder %s13, 1
    %p30 = por %p28, %p29
    %p31 = scmp.ne.s32.totalorder %s23, %s26
    %p32 = scmp.eq.s32.totalorder %s13, 0
    %p33 = por %p31, %p32
    %p34 = scmp.ne.s32.totalorder %s23, %s26
    %p35 = scmp.eq.s32.totalorder %s18, 1
    %p36 = por %p34, %p35
    %p37 = scmp.ne.s32.totalorder %s26, %s27
    %p38 = scmp.eq.s32.totalorder %s18, 0
    %p39 = por %p37, %p38
    %p40 = scmp.ne.s32.totalorder %s26, %s27
    %p41 = scmp.eq.s32.totalorder %s19, 1
    %p42 = por %p40, %p41
    %p44 = scmp.ne.s32.totalorder %s27, %s43
    %p45 = scmp.eq.s32.totalorder %s19, 0
    %p46 = por %p44, %p45
    %s48 = sadd.s32 %s47, 1
    %p51 = scmp.eq.s32.totalorder %s13, 1
    %p52 = scmp.ne.s32.totalorder %s47, %s49
    %p53 = scmp.eq.s32.totalorder %s13, 0
    %p54 = por %p52, %p53
    %p55 = scmp.ne.s32.totalorder %s47, %s49
    %p56 = scmp.eq.s32.totalorder %s18, 1
    %p57 = por %p55, %p56
    %p58 = scmp.ne.s32.totalorder %s49, %s50
    %p59 = scmp.eq.s32.totalorder %s18, 0
    %p60 = por %p58, %p59
    %p61 = scmp.ne.s32.totalorder %s49, %s50
    %p62 = scmp.eq.s32.totalorder %s19, 1
    %p63 = por %p61, %p62
    %p65 = scmp.ne.s32.totalorder %s50, %s64
    %p66 = scmp.eq.s32.totalorder %s19, 0
    %p67 = por %p65, %p66
    %s69 = sadd.s32 %s68, 1
    %p72 = scmp.eq.s32.totalorder %s13, 1
    %p73 = scmp.ne.s32.totalorder %s68, %s70
    %p74 = scmp.eq.s32.totalorder %s13, 0
    %p75 = por %p73, %p74
    %p76 = scmp.ne.s32.totalorder %s68, %s70
    %p77 = scmp.eq.s32.totalorder %s18, 1
    %p78 = por %p76, %p77
    %p79 = scmp.ne.s32.totalorder %s70, %s71
    %p80 = scmp.eq.s32.totalorder %s18, 0
    %p81 = por %p79, %p80
    %p82 = scmp.ne.s32.totalorder %s70, %s71
    %p83 = scmp.eq.s32.totalorder %s19, 1
    %p84 = por %p82, %p83
    %p86 = scmp.ne.s32.totalorder %s71, %s85
    %p87 = scmp.eq.s32.totalorder %s19, 0
    %p88 = por %p86, %p87
    %s90 = sadd.s32 %s89, 1
    %p93 = scmp.eq.s32.totalorder %s13, 1
    %p94 = scmp.ne.s32.totalorder %s89, %s91
    %p95 = scmp.eq.s32.totalorder %s13, 0
    %p96 = por %p94, %p95
    %p97 = scmp.ne.s32.totalorder %s89, %s91
    %p98 = scmp.eq.s32.totalorder %s18, 1
    %p99 = por %p97, %p98
    %p100 = scmp.ne.s32.totalorder %s91, %s92
    %p101 = scmp.eq.s32.totalorder %s18, 0
    %p102 = por %p100, %p101
    %p103 = scmp.ne.s32.totalorder %s91, %s92
    %p104 = scmp.eq.s32.totalorder %s19, 1
    %p105 = por %p103, %p104
    %p107 = scmp.ne.s32.totalorder %s92, %s106
    %p108 = scmp.eq.s32.totalorder %s19, 0
    %p109 = por %p107, %p108
    %s111 = sadd.s32 %s110, 1
    %p114 = scmp.eq.s32.totalorder %s13, 1
    %p115 = scmp.ne.s32.totalorder %s110, %s112
    %p116 = scmp.eq.s32.totalorder %s13, 0
    %p117 = por %p115, %p116
    %p118 = scmp.ne.s32.totalorder %s110, %s112
    %p119 = scmp.eq.s32.totalorder %s18, 1
    %p120 = por %p118, %p119
    %p121 = scmp.ne.s32.totalorder %s112, %s113
    %p122 = scmp.eq.s32.totalorder %s18, 0
    %p123 = por %p121, %p122
    %p124 = scmp.ne.s32.totalorder %s112, %s113
    %p125 = scmp.eq.s32.totalorder %s19, 1
    %p126 = por %p124, %p125
    %p128 = scmp.ne.s32.totalorder %s113, %s127
    %p129 = scmp.eq.s32.totalorder %s19, 0
    %p130 = por %p128, %p129
    %s132 = sadd.s32 %s131, 1
    %p135 = scmp.eq.s32.totalorder %s13, 1
    %p136 = scmp.ne.s32.totalorder %s131, %s133
    %p137 = scmp.eq.s32.totalorder %s13, 0
    %p138 = por %p136, %p137
    %p139 = scmp.ne.s32.totalorder %s131, %s133
    %p140 = scmp.eq.s32.totalorder %s18, 1
    %p141 = por %p139, %p140
    %p142 = scmp.ne.s32.totalorder %s133, %s134
    %p143 = scmp.eq.s32.totalorder %s18, 0
    %p144 = por %p142, %p143
    %p145 = scmp.ne.s32.totalorder %s133, %s134
    %p146 = scmp.eq.s32.totalorder %s19, 1
    %p147 = por %p145, %p146
    %p149 = scmp.ne.s32.totalorder %s134, %s148
    %p150 = scmp.eq.s32.totalorder %s19, 0
    %p151 = por %p149, %p150
    %s153 = sadd.s32 %s152, 1
    %p156 = scmp.eq.s32.totalorder %s13, 1
    %p157 = scmp.ne.s32.totalorder %s152, %s154
    %p158 = scmp.eq.s32.totalorder %s13, 0
    %p159 = por %p157, %p158
    %p160 = scmp.ne.s32.totalorder %s152, %s154
    %p161 = scmp.eq.s32.totalorder %s18, 1
    %p162 = por %p160, %p161
    %p163 = scmp.ne.s32.totalorder %s154, %s155
    %p164 = scmp.eq.s32.totalorder %s18, 0
    %p165 = por %p163, %p164
    %p166 = scmp.ne.s32.totalorder %s154, %s155
    %p167 = scmp.eq.s32.totalorder %s19, 1
    %p168 = por %p166, %p167
    %p170 = scmp.ne.s32.totalorder %s155, %s169
    %p171 = scmp.eq.s32.totalorder %s19, 0
    %p172 = por %p170, %p171
    %s173 = ssub.s32 %s13, %s20
    %p174 = scmp.eq.s32.totalorder %s173, 0
    %s176 = sadd.s32 %s175, 1
    %s177 = scalar_select %p174, %s175, %s176
    %p180 = pneg %p174
    %p181 = scmp.eq.s32.totalorder %s13, 1
    %p182 = por %p180, %p181
    %p183 = scmp.ne.s32.totalorder %s175, %s178
    %p184 = scmp.eq.s32.totalorder %s13, 0
    %p185 = por %p183, %p184
    %p186 = scmp.ne.s32.totalorder %s175, %s178
    %p187 = scmp.eq.s32.totalorder %s18, 1
    %p188 = por %p186, %p187
    %p189 = scmp.ne.s32.totalorder %s178, %s179
    %p190 = scmp.eq.s32.totalorder %s18, 0
    %p191 = por %p189, %p190
    %p192 = scmp.ne.s32.totalorder %s178, %s179
    %p193 = scmp.eq.s32.totalorder %s19, 1
    %p194 = por %p192, %p193
    %p196 = scmp.ne.s32.totalorder %s179, %s195
    %p197 = scmp.eq.s32.totalorder %s19, 0
    %p198 = por %p196, %p197
    %p199 = scmp.le.s32.totalorder 1, %s13
    %p200 = scmp.lt.s32.totalorder %s13, 3
    %p201 = pnand %p199, %p200
    %p202 = pneg %p201
    // Predicated region
    $region9: #{basic_block_forward.1} parent=5 // pred_check
      _
    $region10: #{basic_block_forward.1} parent=5 // pred_check_branch
      %204 = sbr.rel (%p201) target = $region12
    $region11: #{basic_block_forward.1} parent=5 // pred_region
      %s205 = ssub.s32 %s13, 1
      // Predicated region
      $region13: #{basic_block_forward.1} parent=11 // pred_check
        %p206 = pneg %p60
      $region14: #{basic_block_forward.1} parent=11 // pred_check_branch
        %208 = sbr.rel (%p206) target = $region16
      $region15: #{basic_block_forward.1} parent=11 // pred_region
        _
      $region16: #{basic_block_forward.1} parent=11 // pred_fallthru
        _
      // Predicated region
      $region17: #{basic_block_forward.1} parent=11 // pred_check
        %p209 = pneg %p81
      $region18: #{basic_block_forward.1} parent=11 // pred_check_branch
        %211 = sbr.rel (%p209) target = $region20
      $region19: #{basic_block_forward.1} parent=11 // pred_region
        _
      $region20: #{basic_block_forward.1} parent=11 // pred_fallthru
        _
      // Predicated region
      $region21: #{basic_block_forward.1} parent=11 // pred_check
        %p212 = pneg %p102
      $region22: #{basic_block_forward.1} parent=11 // pred_check_branch
        %214 = sbr.rel (%p212) target = $region24
      $region23: #{basic_block_forward.1} parent=11 // pred_region
        _
      $region24: #{basic_block_forward.1} parent=11 // pred_fallthru
        _
      // Predicated region
      $region25: #{basic_block_forward.1} parent=11 // pred_check
        %p215 = pneg %p123
      $region26: #{basic_block_forward.1} parent=11 // pred_check_branch
        %217 = sbr.rel (%p215) target = $region28
      $region27: #{basic_block_forward.1} parent=11 // pred_region
        _
      $region28: #{basic_block_forward.1} parent=11 // pred_fallthru
        _
      // Predicated region
      $region29: #{basic_block_forward.1} parent=11 // pred_check
        %p218 = pneg %p144
      $region30: #{basic_block_forward.1} parent=11 // pred_check_branch
        %220 = sbr.rel (%p218) target = $region32
      $region31: #{basic_block_forward.1} parent=11 // pred_region
        _
      $region32: #{basic_block_forward.1} parent=11 // pred_fallthru
        _
      // Predicated region
      $region33: #{basic_block_forward.1} parent=11 // pred_check
        %p221 = pneg %p165
      $region34: #{basic_block_forward.1} parent=11 // pred_check_branch
        %223 = sbr.rel (%p221) target = $region36
      $region35: #{basic_block_forward.1} parent=11 // pred_region
        _
      $region36: #{basic_block_forward.1} parent=11 // pred_fallthru
        _
    $region12: #{basic_block_forward.1} parent=5 // pred_fallthru
      _
    %p224 = scmp.lt.s32.totalorder %s13, 2
    // Predicated region
    $region37: #{basic_block_forward.1} parent=5 // pred_check
      %p225 = pneg %p224
    $region38: #{basic_block_forward.1} parent=5 // pred_check_branch
      %227 = sbr.rel (%p225) target = $region40
    $region39: #{basic_block_forward.1} parent=5 // pred_region
      // Predicated region
      $region41: #{basic_block_forward.1} parent=39 // pred_check
        %p228 = pneg %p33
      $region42: #{basic_block_forward.1} parent=39 // pred_check_branch
        %230 = sbr.rel (%p228) target = $region44
      $region43: #{basic_block_forward.1} parent=39 // pred_region
        %p231 = scmp.lt.s32.totalorder %s13, 1
        %s232 = scalar_select %p231, %s13, 1
        %s233 = smul.addr %s232, 32
        %s234 = smul.addr %s233, 4
        %s235 = scalar_lea.vmem %s0, %s234
      $region44: #{basic_block_forward.1} parent=39 // pred_fallthru
        _
    $region40: #{basic_block_forward.1} parent=5 // pred_fallthru
      _
    %p236 = scmp.le.s32.totalorder 1, %s13
    %p237 = scmp.lt.s32.totalorder %s13, 3
    %p238 = pnand %p236, %p237
    %p239 = pneg %p238
    // Predicated region
    $region45: #{basic_block_forward.1} parent=5 // pred_check
      _
    $region46: #{basic_block_forward.1} parent=5 // pred_check_branch
      %241 = sbr.rel (%p238) target = $region48
    $region47: #{basic_block_forward.1} parent=5 // pred_region
      %s242 = ssub.s32 %s13, 1
      %p243 = scmp.lt.s32.totalorder %s18, 1
      %s244 = scalar_select %p243, %s18, 1
      %s245 = smul.addr %s244, 32
      %s246 = smul.addr %s245, 4
      %s247 = scalar_lea.vmem %s0, %s246
      %p248 = pneg %p39
      %p249 = pneg %p36
      %p250 = pneg %p60
      %p251 = pneg %p57
      %p252 = pneg %p81
      %p253 = pneg %p78
      %p254 = pneg %p102
      %p255 = pneg %p99
      %p256 = pneg %p123
      %p257 = pneg %p120
      %p258 = pneg %p144
      %p259 = pneg %p141
      %p260 = pneg %p165
      %p261 = pneg %p162
      %p262 = pneg %p191
      %p263 = pneg %p188
      %p264 = scmp.lt.s32.totalorder %s18, 1
      %s265 = scalar_select %p264, %s18, 1
      %s266 = smul.addr %s265, 32
      %s267 = smul.addr %s266, 8
      %s268 = scalar_lea.vmem %s7, %s267
      %p269 = scmp.lt.s32.totalorder %s18, 1
      %s270 = scalar_select %p269, %s18, 1
      %s271 = smul.addr %s270, 32
      %s272 = smul.addr %s271, 4
      %s273 = scalar_lea.vmem %s0, %s272
      %p274 = scmp.lt.s32.totalorder %s18, 1
      %s275 = scalar_select %p274, %s18, 1
      %s276 = smul.addr %s275, 32
      %s277 = smul.addr %s276, 8
      %s278 = scalar_lea.vmem %s7, %s277
      %v280 = vld [vmem:[%s273] sm:$0xf]
      %v281 = vld [vmem:[%s273 + $0x4] sm:$0xf]
      %v282 = vld [vmem:[%s273 + $0x8] sm:$0xf]
      %v283 = vld [vmem:[%s273 + $0xc] sm:$0xf]
      %v284 = vld [vmem:[%s273 + $0x10] sm:$0xf]
      %v285 = vld [vmem:[%s273 + $0x14] sm:$0xf]
      %v286 = vld [vmem:[%s273 + $0x18] sm:$0xf]
      %v287 = vld [vmem:[%s273 + $0x1c] sm:$0xf]
      %v288 = vld [vmem:[%s273 + $0x20] sm:$0xf]
      %v289 = vld [vmem:[%s273 + $0x24] sm:$0xf]
      %v290 = vld [vmem:[%s273 + $0x28] sm:$0xf]
      %v291 = vld [vmem:[%s273 + $0x2c] sm:$0xf]
      %v292 = vld [vmem:[%s273 + $0x30] sm:$0xf]
      %v293 = vld [vmem:[%s273 + $0x34] sm:$0xf]
      %v294 = vld [vmem:[%s273 + $0x38] sm:$0xf]
      %v295 = vld [vmem:[%s273 + $0x3c] sm:$0xf]
      %v296 = vld [vmem:[%s273 + $0x40] sm:$0xf]
      %v297 = vld [vmem:[%s273 + $0x44] sm:$0xf]
      %v298 = vld [vmem:[%s273 + $0x48] sm:$0xf]
      %v299 = vld [vmem:[%s273 + $0x4c] sm:$0xf]
      %v300 = vld [vmem:[%s273 + $0x50] sm:$0xf]
      %v301 = vld [vmem:[%s273 + $0x54] sm:$0xf]
      %v302 = vld [vmem:[%s273 + $0x58] sm:$0xf]
      %v303 = vld [vmem:[%s273 + $0x5c] sm:$0xf]
      %v304 = vld [vmem:[%s273 + $0x60] sm:$0xf]
      %v305 = vld [vmem:[%s273 + $0x64] sm:$0xf]
      %v306 = vld [vmem:[%s273 + $0x68] sm:$0xf]
      %v307 = vld [vmem:[%s273 + $0x6c] sm:$0xf]
      %v308 = vld [vmem:[%s273 + $0x70] sm:$0xf]
      %v309 = vld [vmem:[%s273 + $0x74] sm:$0xf]
      %v310 = vld [vmem:[%s273 + $0x78] sm:$0xf]
      %v311 = vld [vmem:[%s273 + $0x7c] sm:$0xf]
      %v312 = vunpack.c.l.bf16 %v280
      %v313 = vunpack.c.l.bf16 %v281
      %v314 = vunpack.c.l.bf16 %v282
      %v315 = vunpack.c.l.bf16 %v283
      %v316 = vunpack.c.l.bf16 %v284
      %v317 = vunpack.c.l.bf16 %v285
      %v318 = vunpack.c.l.bf16 %v286
      %v319 = vunpack.c.l.bf16 %v287
      %v320 = vunpack.c.l.bf16 %v288
      %v321 = vunpack.c.l.bf16 %v289
      %v322 = vunpack.c.l.bf16 %v290
      %v323 = vunpack.c.l.bf16 %v291
      %v324 = vunpack.c.l.bf16 %v292
      %v325 = vunpack.c.l.bf16 %v293
      %v326 = vunpack.c.l.bf16 %v294
      %v327 = vunpack.c.l.bf16 %v295
      %v328 = vunpack.c.l.bf16 %v296
      %v329 = vunpack.c.l.bf16 %v297
      %v330 = vunpack.c.l.bf16 %v298
      %v331 = vunpack.c.l.bf16 %v299
      %v332 = vunpack.c.l.bf16 %v300
      %v333 = vunpack.c.l.bf16 %v301
      %v334 = vunpack.c.l.bf16 %v302
      %v335 = vunpack.c.l.bf16 %v303
      %v336 = vunpack.c.l.bf16 %v304
      %v337 = vunpack.c.l.bf16 %v305
      %v338 = vunpack.c.l.bf16 %v306
      %v339 = vunpack.c.l.bf16 %v307
      %v340 = vunpack.c.l.bf16 %v308
      %v341 = vunpack.c.l.bf16 %v309
      %v342 = vunpack.c.l.bf16 %v310
      %v343 = vunpack.c.l.bf16 %v311
      %344 = vst [vmem:[#allocation2] sm:$0xff] 0.0
      %345 = vst [vmem:[#allocation2 + $0x8] sm:$0xff] 0.0
      %346 = vst [vmem:[#allocation2 + $0x10] sm:$0x3] 0.0
      %347 = vst [vmem:[#allocation2 + $0x18] sm:$0xff] 0.0
      %348 = vst [vmem:[#allocation2 + $0x20] sm:$0xff] 0.0
      %349 = vst [vmem:[#allocation2 + $0x28] sm:$0x3] 0.0
      %350 = vst [vmem:[#allocation2 + $0x30] sm:$0xff] 0.0
      %351 = vst [vmem:[#allocation2 + $0x38] sm:$0xff] 0.0
      %352 = vst [vmem:[#allocation2 + $0x40] sm:$0x3] 0.0
      %353 = vst [vmem:[#allocation2 + $0x48] sm:$0xff] 0.0
      %354 = vst [vmem:[#allocation2 + $0x50] sm:$0xff] 0.0
      %355 = vst [vmem:[#allocation2 + $0x58] sm:$0x3] 0.0
      %356 = vst [vmem:[#allocation2 + $0x60] sm:$0xff] 0.0
      %357 = vst [vmem:[#allocation2 + $0x68] sm:$0xff] 0.0
      %358 = vst [vmem:[#allocation2 + $0x70] sm:$0x3] 0.0
      %359 = vst [vmem:[#allocation2 + $0x78] sm:$0xff] 0.0
      %360 = vst [vmem:[#allocation2 + $0x80] sm:$0xff] 0.0
      %361 = vst [vmem:[#allocation2 + $0x88] sm:$0x3] 0.0
      %362 = vst [vmem:[#allocation2 + $0x90] sm:$0xff] 0.0
      %363 = vst [vmem:[#allocation2 + $0x98] sm:$0xff] 0.0
      %364 = vst [vmem:[#allocation2 + $0xa0] sm:$0x3] 0.0
      %365 = vst [vmem:[#allocation2 + $0xa8] sm:$0xff] 0.0
      %366 = vst [vmem:[#allocation2 + $0xb0] sm:$0xff] 0.0
      %367 = vst [vmem:[#allocation2 + $0xb8] sm:$0x3] 0.0
      %368 = vst [vmem:[#allocation2 + $0xc0] sm:$0xff] 0.0
      %369 = vst [vmem:[#allocation2 + $0xc8] sm:$0xff] 0.0
      %370 = vst [vmem:[#allocation2 + $0xd0] sm:$0x3] 0.0
      %371 = vst [vmem:[#allocation2 + $0xd8] sm:$0xff] 0.0
      %372 = vst [vmem:[#allocation2 + $0xe0] sm:$0xff] 0.0
      %373 = vst [vmem:[#allocation2 + $0xe8] sm:$0x3] 0.0
      %374 = vst [vmem:[#allocation2 + $0xf0] sm:$0xff] 0.0
      %375 = vst [vmem:[#allocation2 + $0xf8] sm:$0xff] 0.0
      %376 = vst [vmem:[#allocation2 + $0x100] sm:$0x3] 0.0
      %377 = vst [vmem:[#allocation2 + $0x108] sm:$0xff] 0.0
      %378 = vst [vmem:[#allocation2 + $0x110] sm:$0xff] 0.0
      %379 = vst [vmem:[#allocation2 + $0x118] sm:$0x3] 0.0
      %380 = vst [vmem:[#allocation2 + $0x120] sm:$0xff] 0.0
      %381 = vst [vmem:[#allocation2 + $0x128] sm:$0xff] 0.0
      %382 = vst [vmem:[#allocation2 + $0x130] sm:$0x3] 0.0
      %383 = vst [vmem:[#allocation2 + $0x138] sm:$0xff] 0.0
      %384 = vst [vmem:[#allocation2 + $0x140] sm:$0xff] 0.0
      %385 = vst [vmem:[#allocation2 + $0x148] sm:$0x3] 0.0
      %386 = vst [vmem:[#allocation2 + $0x150] sm:$0xff] 0.0
      %387 = vst [vmem:[#allocation2 + $0x158] sm:$0xff] 0.0
      %388 = vst [vmem:[#allocation2 + $0x160] sm:$0x3] 0.0
      %389 = vst [vmem:[#allocation2 + $0x168] sm:$0xff] 0.0
      %390 = vst [vmem:[#allocation2 + $0x170] sm:$0xff] 0.0
      %391 = vst [vmem:[#allocation2 + $0x178] sm:$0x3] 0.0
      %392 = vst [vmem:[#allocation2 + $0x180] sm:$0xff] 0.0
      %393 = vst [vmem:[#allocation2 + $0x188] sm:$0xff] 0.0
      %394 = vst [vmem:[#allocation2 + $0x190] sm:$0x3] 0.0
      %395 = vst [vmem:[#allocation2 + $0x198] sm:$0xff] 0.0
      %396 = vst [vmem:[#allocation2 + $0x1a0] sm:$0xff] 0.0
      %397 = vst [vmem:[#allocation2 + $0x1a8] sm:$0x3] 0.0
      %s398 = scalar_lea.vmem [#allocation2], 24
      %399 = vst [vmem:[%s398 + $0x1] sm:$0xff] %v312
      %400 = vst [vmem:[%s398 + $0x9] sm:$0xff] %v313
      %401 = vst [vmem:[%s398 + $0x19] sm:$0xff] %v314
      %402 = vst [vmem:[%s398 + $0x21] sm:$0xff] %v315
      %403 = vst [vmem:[%s398 + $0x31] sm:$0xff] %v316
      %404 = vst [vmem:[%s398 + $0x39] sm:$0xff] %v317
      %405 = vst [vmem:[%s398 + $0x49] sm:$0xff] %v318
      %406 = vst [vmem:[%s398 + $0x51] sm:$0xff] %v319
      %407 = vst [vmem:[%s398 + $0x61] sm:$0xff] %v320
      %408 = vst [vmem:[%s398 + $0x69] sm:$0xff] %v321
      %409 = vst [vmem:[%s398 + $0x79] sm:$0xff] %v322
      %410 = vst [vmem:[%s398 + $0x81] sm:$0xff] %v323
      %411 = vst [vmem:[%s398 + $0x91] sm:$0xff] %v324
      %412 = vst [vmem:[%s398 + $0x99] sm:$0xff] %v325
      %413 = vst [vmem:[%s398 + $0xa9] sm:$0xff] %v326
      %414 = vst [vmem:[%s398 + $0xb1] sm:$0xff] %v327
      %415 = vst [vmem:[%s398 + $0xc1] sm:$0xff] %v328
      %416 = vst [vmem:[%s398 + $0xc9] sm:$0xff] %v329
      %417 = vst [vmem:[%s398 + $0xd9] sm:$0xff] %v330
      %418 = vst [vmem:[%s398 + $0xe1] sm:$0xff] %v331
      %419 = vst [vmem:[%s398 + $0xf1] sm:$0xff] %v332
      %420 = vst [vmem:[%s398 + $0xf9] sm:$0xff] %v333
      %421 = vst [vmem:[%s398 + $0x109] sm:$0xff] %v334
      %422 = vst [vmem:[%s398 + $0x111] sm:$0xff] %v335
      %423 = vst [vmem:[%s398 + $0x121] sm:$0xff] %v336
      %424 = vst [vmem:[%s398 + $0x129] sm:$0xff] %v337
      %425 = vst [vmem:[%s398 + $0x139] sm:$0xff] %v338
      %426 = vst [vmem:[%s398 + $0x141] sm:$0xff] %v339
      %427 = vst [vmem:[%s398 + $0x151] sm:$0xff] %v340
      %428 = vst [vmem:[%s398 + $0x159] sm:$0xff] %v341
      %429 = vst [vmem:[%s398 + $0x169] sm:$0xff] %v342
      %430 = vst [vmem:[%s398 + $0x171] sm:$0xff] %v343
      %v431 = vld [vmem:[#allocation2] sm:$0xff]
      %v432 = vld [vmem:[#allocation2 + $0x8] sm:$0xff]
      %v433 = vld [vmem:[#allocation2 + $0x18] sm:$0xff]
      %v434 = vld [vmem:[#allocation2 + $0x20] sm:$0xff]
      %v435 = vld [vmem:[#allocation2 + $0x30] sm:$0xff]
      %v436 = vld [vmem:[#allocation2 + $0x38] sm:$0xff]
      %v437 = vld [vmem:[#allocation2 + $0x48] sm:$0xff]
      %v438 = vld [vmem:[#allocation2 + $0x50] sm:$0xff]
      %v439 = vld [vmem:[#allocation2 + $0x60] sm:$0xff]
      %v440 = vld [vmem:[#allocation2 + $0x68] sm:$0xff]
      %v441 = vld [vmem:[#allocation2 + $0x78] sm:$0xff]
      %v442 = vld [vmem:[#allocation2 + $0x80] sm:$0xff]
      %v443 = vld [vmem:[#allocation2 + $0x90] sm:$0xff]
      %v444 = vld [vmem:[#allocation2 + $0x98] sm:$0xff]
      %v445 = vld [vmem:[#allocation2 + $0xa8] sm:$0xff]
      %v446 = vld [vmem:[#allocation2 + $0xb0] sm:$0xff]
      %v447 = vld [vmem:[#allocation2 + $0xc0] sm:$0xff]
      %v448 = vld [vmem:[#allocation2 + $0xc8] sm:$0xff]
      %v449 = vld [vmem:[#allocation2 + $0xd8] sm:$0xff]
      %v450 = vld [vmem:[#allocation2 + $0xe0] sm:$0xff]
      %v451 = vld [vmem:[#allocation2 + $0xf0] sm:$0xff]
      %v452 = vld [vmem:[#allocation2 + $0xf8] sm:$0xff]
      %v453 = vld [vmem:[#allocation2 + $0x108] sm:$0xff]
      %v454 = vld [vmem:[#allocation2 + $0x110] sm:$0xff]
      %v455 = vld [vmem:[#allocation2 + $0x120] sm:$0xff]
      %v456 = vld [vmem:[#allocation2 + $0x128] sm:$0xff]
      %v457 = vld [vmem:[#allocation2 + $0x138] sm:$0xff]
      %v458 = vld [vmem:[#allocation2 + $0x140] sm:$0xff]
      %v459 = vld [vmem:[#allocation2 + $0x150] sm:$0xff]
      %v460 = vld [vmem:[#allocation2 + $0x158] sm:$0xff]
      %v461 = vld [vmem:[#allocation2 + $0x168] sm:$0xff]
      %v462 = vld [vmem:[#allocation2 + $0x170] sm:$0xff]
      %v463 = vpack.c.bf16 %v432, %v431
      %v464 = vpack.c.bf16 %v434, %v433
      %v465 = vpack.c.bf16 %v436, %v435
      %v466 = vpack.c.bf16 %v438, %v437
      %v467 = vpack.c.bf16 %v440, %v439
      %v468 = vpack.c.bf16 %v442, %v441
      %v469 = vpack.c.bf16 %v444, %v443
      %v470 = vpack.c.bf16 %v446, %v445
      %v471 = vpack.c.bf16 %v448, %v447
      %v472 = vpack.c.bf16 %v450, %v449
      %v473 = vpack.c.bf16 %v452, %v451
      %v474 = vpack.c.bf16 %v454, %v453
      %v475 = vpack.c.bf16 %v456, %v455
      %v476 = vpack.c.bf16 %v458, %v457
      %v477 = vpack.c.bf16 %v460, %v459
      %v478 = vpack.c.bf16 %v462, %v461
      %v479 = vld [vmem:[#allocation2 + $0x1] sm:$0xff]
      %v480 = vld [vmem:[#allocation2 + $0x9] sm:$0xff]
      %v481 = vld [vmem:[#allocation2 + $0x19] sm:$0xff]
      %v482 = vld [vmem:[#allocation2 + $0x21] sm:$0xff]
      %v483 = vld [vmem:[#allocation2 + $0x31] sm:$0xff]
      %v484 = vld [vmem:[#allocation2 + $0x39] sm:$0xff]
      %v485 = vld [vmem:[#allocation2 + $0x49] sm:$0xff]
      %v486 = vld [vmem:[#allocation2 + $0x51] sm:$0xff]
      %v487 = vld [vmem:[#allocation2 + $0x61] sm:$0xff]
      %v488 = vld [vmem:[#allocation2 + $0x69] sm:$0xff]
      %v489 = vld [vmem:[#allocation2 + $0x79] sm:$0xff]
      %v490 = vld [vmem:[#allocation2 + $0x81] sm:$0xff]
      %v491 = vld [vmem:[#allocation2 + $0x91] sm:$0xff]
      %v492 = vld [vmem:[#allocation2 + $0x99] sm:$0xff]
      %v493 = vld [vmem:[#allocation2 + $0xa9] sm:$0xff]
      %v494 = vld [vmem:[#allocation2 + $0xb1] sm:$0xff]
      %v495 = vld [vmem:[#allocation2 + $0xc1] sm:$0xff]
      %v496 = vld [vmem:[#allocation2 + $0xc9] sm:$0xff]
      %v497 = vld [vmem:[#allocation2 + $0xd9] sm:$0xff]
      %v498 = vld [vmem:[#allocation2 + $0xe1] sm:$0xff]
      %v499 = vld [vmem:[#allocation2 + $0xf1] sm:$0xff]
      %v500 = vld [vmem:[#allocation2 + $0xf9] sm:$0xff]
      %v501 = vld [vmem:[#allocation2 + $0x109] sm:$0xff]
      %v502 = vld [vmem:[#allocation2 + $0x111] sm:$0xff]
      %v503 = vld [vmem:[#allocation2 + $0x121] sm:$0xff]
      %v504 = vld [vmem:[#allocation2 + $0x129] sm:$0xff]
      %v505 = vld [vmem:[#allocation2 + $0x139] sm:$0xff]
      %v506 = vld [vmem:[#allocation2 + $0x141] sm:$0xff]
      %v507 = vld [vmem:[#allocation2 + $0x151] sm:$0xff]
      %v508 = vld [vmem:[#allocation2 + $0x159] sm:$0xff]
      %v509 = vld [vmem:[#allocation2 + $0x169] sm:$0xff]
      %v510 = vld [vmem:[#allocation2 + $0x171] sm:$0xff]
      %v511 = vpack.c.bf16 %v480, %v479
      %v512 = vpack.c.bf16 %v482, %v481
      %v513 = vpack.c.bf16 %v484, %v483
      %v514 = vpack.c.bf16 %v486, %v485
      %v515 = vpack.c.bf16 %v488, %v487
      %v516 = vpack.c.bf16 %v490, %v489
      %v517 = vpack.c.bf16 %v492, %v491
      %v518 = vpack.c.bf16 %v494, %v493
      %v519 = vpack.c.bf16 %v496, %v495
      %v520 = vpack.c.bf16 %v498, %v497
      %v521 = vpack.c.bf16 %v500, %v499
      %v522 = vpack.c.bf16 %v502, %v501
      %v523 = vpack.c.bf16 %v504, %v503
      %v524 = vpack.c.bf16 %v506, %v505
      %v525 = vpack.c.bf16 %v508, %v507
      %v526 = vpack.c.bf16 %v510, %v509
      %v527 = vld [vmem:[#allocation2 + $0x2] sm:$0xff]
      %v528 = vld [vmem:[#allocation2 + $0xa] sm:$0xff]
      %v529 = vld [vmem:[#allocation2 + $0x1a] sm:$0xff]
      %v530 = vld [vmem:[#allocation2 + $0x22] sm:$0xff]
      %v531 = vld [vmem:[#allocation2 + $0x32] sm:$0xff]
      %v532 = vld [vmem:[#allocation2 + $0x3a] sm:$0xff]
      %v533 = vld [vmem:[#allocation2 + $0x4a] sm:$0xff]
      %v534 = vld [vmem:[#allocation2 + $0x52] sm:$0xff]
      %v535 = vld [vmem:[#allocation2 + $0x62] sm:$0xff]
      %v536 = vld [vmem:[#allocation2 + $0x6a] sm:$0xff]
      %v537 = vld [vmem:[#allocation2 + $0x7a] sm:$0xff]
      %v538 = vld [vmem:[#allocation2 + $0x82] sm:$0xff]
      %v539 = vld [vmem:[#allocation2 + $0x92] sm:$0xff]
      %v540 = vld [vmem:[#allocation2 + $0x9a] sm:$0xff]
      %v541 = vld [vmem:[#allocation2 + $0xaa] sm:$0xff]
      %v542 = vld [vmem:[#allocation2 + $0xb2] sm:$0xff]
      %v543 = vld [vmem:[#allocation2 + $0xc2] sm:$0xff]
      %v544 = vld [vmem:[#allocation2 + $0xca] sm:$0xff]
      %v545 = vld [vmem:[#allocation2 + $0xda] sm:$0xff]
      %v546 = vld [vmem:[#allocation2 + $0xe2] sm:$0xff]
      %v547 = vld [vmem:[#allocation2 + $0xf2] sm:$0xff]
      %v548 = vld [vmem:[#allocation2 + $0xfa] sm:$0xff]
      %v549 = vld [vmem:[#allocation2 + $0x10a] sm:$0xff]
      %v550 = vld [vmem:[#allocation2 + $0x112] sm:$0xff]
      %v551 = vld [vmem:[#allocation2 + $0x122] sm:$0xff]
      %v552 = vld [vmem:[#allocation2 + $0x12a] sm:$0xff]
      %v553 = vld [vmem:[#allocation2 + $0x13a] sm:$0xff]
      %v554 = vld [vmem:[#allocation2 + $0x142] sm:$0xff]
      %v555 = vld [vmem:[#allocation2 + $0x152] sm:$0xff]
      %v556 = vld [vmem:[#allocation2 + $0x15a] sm:$0xff]
      %v557 = vld [vmem:[#allocation2 + $0x16a] sm:$0xff]
      %v558 = vld [vmem:[#allocation2 + $0x172] sm:$0xff]
      %v559 = vpack.c.bf16 %v528, %v527
      %v560 = vpack.c.bf16 %v530, %v529
      %v561 = vpack.c.bf16 %v532, %v531
      %v562 = vpack.c.bf16 %v534, %v533
      %v563 = vpack.c.bf16 %v536, %v535
      %v564 = vpack.c.bf16 %v538, %v537
      %v565 = vpack.c.bf16 %v540, %v539
      %v566 = vpack.c.bf16 %v542, %v541
      %v567 = vpack.c.bf16 %v544, %v543
      %v568 = vpack.c.bf16 %v546, %v545
      %v569 = vpack.c.bf16 %v548, %v547
      %v570 = vpack.c.bf16 %v550, %v549
      %v571 = vpack.c.bf16 %v552, %v551
      %v572 = vpack.c.bf16 %v554, %v553
      %v573 = vpack.c.bf16 %v556, %v555
      %v574 = vpack.c.bf16 %v558, %v557
      %v575 = vld [vmem:[%s398] sm:$0xff]
      %v576 = vld [vmem:[%s398 + $0x8] sm:$0xff]
      %v577 = vld [vmem:[%s398 + $0x18] sm:$0xff]
      %v578 = vld [vmem:[%s398 + $0x20] sm:$0xff]
      %v579 = vld [vmem:[%s398 + $0x30] sm:$0xff]
      %v580 = vld [vmem:[%s398 + $0x38] sm:$0xff]
      %v581 = vld [vmem:[%s398 + $0x48] sm:$0xff]
      %v582 = vld [vmem:[%s398 + $0x50] sm:$0xff]
      %v583 = vld [vmem:[%s398 + $0x60] sm:$0xff]
      %v584 = vld [vmem:[%s398 + $0x68] sm:$0xff]
      %v585 = vld [vmem:[%s398 + $0x78] sm:$0xff]
      %v586 = vld [vmem:[%s398 + $0x80] sm:$0xff]
      %v587 = vld [vmem:[%s398 + $0x90] sm:$0xff]
      %v588 = vld [vmem:[%s398 + $0x98] sm:$0xff]
      %v589 = vld [vmem:[%s398 + $0xa8] sm:$0xff]
      %v590 = vld [vmem:[%s398 + $0xb0] sm:$0xff]
      %v591 = vld [vmem:[%s398 + $0xc0] sm:$0xff]
      %v592 = vld [vmem:[%s398 + $0xc8] sm:$0xff]
      %v593 = vld [vmem:[%s398 + $0xd8] sm:$0xff]
      %v594 = vld [vmem:[%s398 + $0xe0] sm:$0xff]
      %v595 = vld [vmem:[%s398 + $0xf0] sm:$0xff]
      %v596 = vld [vmem:[%s398 + $0xf8] sm:$0xff]
      %v597 = vld [vmem:[%s398 + $0x108] sm:$0xff]
      %v598 = vld [vmem:[%s398 + $0x110] sm:$0xff]
      %v599 = vld [vmem:[%s398 + $0x120] sm:$0xff]
      %v600 = vld [vmem:[%s398 + $0x128] sm:$0xff]
      %v601 = vld [vmem:[%s398 + $0x138] sm:$0xff]
      %v602 = vld [vmem:[%s398 + $0x140] sm:$0xff]
      %v603 = vld [vmem:[%s398 + $0x150] sm:$0xff]
      %v604 = vld [vmem:[%s398 + $0x158] sm:$0xff]
      %v605 = vld [vmem:[%s398 + $0x168] sm:$0xff]
      %v606 = vld [vmem:[%s398 + $0x170] sm:$0xff]
      %v607 = vpack.c.bf16 %v576, %v575
      %v608 = vpack.c.bf16 %v578, %v577
      %v609 = vpack.c.bf16 %v580, %v579
      %v610 = vpack.c.bf16 %v582, %v581
      %v611 = vpack.c.bf16 %v584, %v583
      %v612 = vpack.c.bf16 %v586, %v585
      %v613 = vpack.c.bf16 %v588, %v587
      %v614 = vpack.c.bf16 %v590, %v589
      %v615 = vpack.c.bf16 %v592, %v591
      %v616 = vpack.c.bf16 %v594, %v593
      %v617 = vpack.c.bf16 %v596, %v595
      %v618 = vpack.c.bf16 %v598, %v597
      %v619 = vpack.c.bf16 %v600, %v599
      %v620 = vpack.c.bf16 %v602, %v601
      %v621 = vpack.c.bf16 %v604, %v603
      %v622 = vpack.c.bf16 %v606, %v605
      %v623 = vld [vmem:[%s398 + $0x1] sm:$0xff]
      %v624 = vld [vmem:[%s398 + $0x9] sm:$0xff]
      %v625 = vld [vmem:[%s398 + $0x19] sm:$0xff]
      %v626 = vld [vmem:[%s398 + $0x21] sm:$0xff]
      %v627 = vld [vmem:[%s398 + $0x31] sm:$0xff]
      %v628 = vld [vmem:[%s398 + $0x39] sm:$0xff]
      %v629 = vld [vmem:[%s398 + $0x49] sm:$0xff]
      %v630 = vld [vmem:[%s398 + $0x51] sm:$0xff]
      %v631 = vld [vmem:[%s398 + $0x61] sm:$0xff]
      %v632 = vld [vmem:[%s398 + $0x69] sm:$0xff]
      %v633 = vld [vmem:[%s398 + $0x79] sm:$0xff]
      %v634 = vld [vmem:[%s398 + $0x81] sm:$0xff]
      %v635 = vld [vmem:[%s398 + $0x91] sm:$0xff]
      %v636 = vld [vmem:[%s398 + $0x99] sm:$0xff]
      %v637 = vld [vmem:[%s398 + $0xa9] sm:$0xff]
      %v638 = vld [vmem:[%s398 + $0xb1] sm:$0xff]
      %v639 = vld [vmem:[%s398 + $0xc1] sm:$0xff]
      %v640 = vld [vmem:[%s398 + $0xc9] sm:$0xff]
      %v641 = vld [vmem:[%s398 + $0xd9] sm:$0xff]
      %v642 = vld [vmem:[%s398 + $0xe1] sm:$0xff]
      %v643 = vld [vmem:[%s398 + $0xf1] sm:$0xff]
      %v644 = vld [vmem:[%s398 + $0xf9] sm:$0xff]
      %v645 = vld [vmem:[%s398 + $0x109] sm:$0xff]
      %v646 = vld [vmem:[%s398 + $0x111] sm:$0xff]
      %v647 = vld [vmem:[%s398 + $0x121] sm:$0xff]
      %v648 = vld [vmem:[%s398 + $0x129] sm:$0xff]
      %v649 = vld [vmem:[%s398 + $0x139] sm:$0xff]
      %v650 = vld [vmem:[%s398 + $0x141] sm:$0xff]
      %v651 = vld [vmem:[%s398 + $0x151] sm:$0xff]
      %v652 = vld [vmem:[%s398 + $0x159] sm:$0xff]
      %v653 = vld [vmem:[%s398 + $0x169] sm:$0xff]
      %v654 = vld [vmem:[%s398 + $0x171] sm:$0xff]
      %v655 = vpack.c.bf16 %v624, %v623
      %v656 = vpack.c.bf16 %v626, %v625
      %v657 = vpack.c.bf16 %v628, %v627
      %v658 = vpack.c.bf16 %v630, %v629
      %v659 = vpack.c.bf16 %v632, %v631
      %v660 = vpack.c.bf16 %v634, %v633
      %v661 = vpack.c.bf16 %v636, %v635
      %v662 = vpack.c.bf16 %v638, %v637
      %v663 = vpack.c.bf16 %v640, %v639
      %v664 = vpack.c.bf16 %v642, %v641
      %v665 = vpack.c.bf16 %v644, %v643
      %v666 = vpack.c.bf16 %v646, %v645
      %v667 = vpack.c.bf16 %v648, %v647
      %v668 = vpack.c.bf16 %v650, %v649
      %v669 = vpack.c.bf16 %v652, %v651
      %v670 = vpack.c.bf16 %v654, %v653
      %v671 = vld [vmem:[%s398 + $0x2] sm:$0xff]
      %v672 = vld [vmem:[%s398 + $0xa] sm:$0xff]
      %v673 = vld [vmem:[%s398 + $0x1a] sm:$0xff]
      %v674 = vld [vmem:[%s398 + $0x22] sm:$0xff]
      %v675 = vld [vmem:[%s398 + $0x32] sm:$0xff]
      %v676 = vld [vmem:[%s398 + $0x3a] sm:$0xff]
      %v677 = vld [vmem:[%s398 + $0x4a] sm:$0xff]
      %v678 = vld [vmem:[%s398 + $0x52] sm:$0xff]
      %v679 = vld [vmem:[%s398 + $0x62] sm:$0xff]
      %v680 = vld [vmem:[%s398 + $0x6a] sm:$0xff]
      %v681 = vld [vmem:[%s398 + $0x7a] sm:$0xff]
      %v682 = vld [vmem:[%s398 + $0x82] sm:$0xff]
      %v683 = vld [vmem:[%s398 + $0x92] sm:$0xff]
      %v684 = vld [vmem:[%s398 + $0x9a] sm:$0xff]
      %v685 = vld [vmem:[%s398 + $0xaa] sm:$0xff]
      %v686 = vld [vmem:[%s398 + $0xb2] sm:$0xff]
      %v687 = vld [vmem:[%s398 + $0xc2] sm:$0xff]
      %v688 = vld [vmem:[%s398 + $0xca] sm:$0xff]
      %v689 = vld [vmem:[%s398 + $0xda] sm:$0xff]
      %v690 = vld [vmem:[%s398 + $0xe2] sm:$0xff]
      %v691 = vld [vmem:[%s398 + $0xf2] sm:$0xff]
      %v692 = vld [vmem:[%s398 + $0xfa] sm:$0xff]
      %v693 = vld [vmem:[%s398 + $0x10a] sm:$0xff]
      %v694 = vld [vmem:[%s398 + $0x112] sm:$0xff]
      %v695 = vld [vmem:[%s398 + $0x122] sm:$0xff]
      %v696 = vld [vmem:[%s398 + $0x12a] sm:$0xff]
      %v697 = vld [vmem:[%s398 + $0x13a] sm:$0xff]
      %v698 = vld [vmem:[%s398 + $0x142] sm:$0xff]
      %v699 = vld [vmem:[%s398 + $0x152] sm:$0xff]
      %v700 = vld [vmem:[%s398 + $0x15a] sm:$0xff]
      %v701 = vld [vmem:[%s398 + $0x16a] sm:$0xff]
      %v702 = vld [vmem:[%s398 + $0x172] sm:$0xff]
      %v703 = vpack.c.bf16 %v672, %v671
      %v704 = vpack.c.bf16 %v674, %v673
      %v705 = vpack.c.bf16 %v676, %v675
      %v706 = vpack.c.bf16 %v678, %v677
      %v707 = vpack.c.bf16 %v680, %v679
      %v708 = vpack.c.bf16 %v682, %v681
      %v709 = vpack.c.bf16 %v684, %v683
      %v710 = vpack.c.bf16 %v686, %v685
      %v711 = vpack.c.bf16 %v688, %v687
      %v712 = vpack.c.bf16 %v690, %v689
      %v713 = vpack.c.bf16 %v692, %v691
      %v714 = vpack.c.bf16 %v694, %v693
      %v715 = vpack.c.bf16 %v696, %v695
      %v716 = vpack.c.bf16 %v698, %v697
      %v717 = vpack.c.bf16 %v700, %v699
      %v718 = vpack.c.bf16 %v702, %v701
      %s719 = scalar_lea.vmem [#allocation2], 48
      %v720 = vld [vmem:[%s719] sm:$0xff]
      %v721 = vld [vmem:[%s719 + $0x8] sm:$0xff]
      %v722 = vld [vmem:[%s719 + $0x18] sm:$0xff]
      %v723 = vld [vmem:[%s719 + $0x20] sm:$0xff]
      %v724 = vld [vmem:[%s719 + $0x30] sm:$0xff]
      %v725 = vld [vmem:[%s719 + $0x38] sm:$0xff]
      %v726 = vld [vmem:[%s719 + $0x48] sm:$0xff]
      %v727 = vld [vmem:[%s719 + $0x50] sm:$0xff]
      %v728 = vld [vmem:[%s719 + $0x60] sm:$0xff]
      %v729 = vld [vmem:[%s719 + $0x68] sm:$0xff]
      %v730 = vld [vmem:[%s719 + $0x78] sm:$0xff]
      %v731 = vld [vmem:[%s719 + $0x80] sm:$0xff]
      %v732 = vld [vmem:[%s719 + $0x90] sm:$0xff]
      %v733 = vld [vmem:[%s719 + $0x98] sm:$0xff]
      %v734 = vld [vmem:[%s719 + $0xa8] sm:$0xff]
      %v735 = vld [vmem:[%s719 + $0xb0] sm:$0xff]
      %v736 = vld [vmem:[%s719 + $0xc0] sm:$0xff]
      %v737 = vld [vmem:[%s719 + $0xc8] sm:$0xff]
      %v738 = vld [vmem:[%s719 + $0xd8] sm:$0xff]
      %v739 = vld [vmem:[%s719 + $0xe0] sm:$0xff]
      %v740 = vld [vmem:[%s719 + $0xf0] sm:$0xff]
      %v741 = vld [vmem:[%s719 + $0xf8] sm:$0xff]
      %v742 = vld [vmem:[%s719 + $0x108] sm:$0xff]
      %v743 = vld [vmem:[%s719 + $0x110] sm:$0xff]
      %v744 = vld [vmem:[%s719 + $0x120] sm:$0xff]
      %v745 = vld [vmem:[%s719 + $0x128] sm:$0xff]
      %v746 = vld [vmem:[%s719 + $0x138] sm:$0xff]
      %v747 = vld [vmem:[%s719 + $0x140] sm:$0xff]
      %v748 = vld [vmem:[%s719 + $0x150] sm:$0xff]
      %v749 = vld [vmem:[%s719 + $0x158] sm:$0xff]
      %v750 = vld [vmem:[%s719 + $0x168] sm:$0xff]
      %v751 = vld [vmem:[%s719 + $0x170] sm:$0xff]
      %v752 = vpack.c.bf16 %v721, %v720
      %v753 = vpack.c.bf16 %v723, %v722
      %v754 = vpack.c.bf16 %v725, %v724
      %v755 = vpack.c.bf16 %v727, %v726
      %v756 = vpack.c.bf16 %v729, %v728
      %v757 = vpack.c.bf16 %v731, %v730
      %v758 = vpack.c.bf16 %v733, %v732
      %v759 = vpack.c.bf16 %v735, %v734
      %v760 = vpack.c.bf16 %v737, %v736
      %v761 = vpack.c.bf16 %v739, %v738
      %v762 = vpack.c.bf16 %v741, %v740
      %v763 = vpack.c.bf16 %v743, %v742
      %v764 = vpack.c.bf16 %v745, %v744
      %v765 = vpack.c.bf16 %v747, %v746
      %v766 = vpack.c.bf16 %v749, %v748
      %v767 = vpack.c.bf16 %v751, %v750
      %v768 = vld [vmem:[%s719 + $0x1] sm:$0xff]
      %v769 = vld [vmem:[%s719 + $0x9] sm:$0xff]
      %v770 = vld [vmem:[%s719 + $0x19] sm:$0xff]
      %v771 = vld [vmem:[%s719 + $0x21] sm:$0xff]
      %v772 = vld [vmem:[%s719 + $0x31] sm:$0xff]
      %v773 = vld [vmem:[%s719 + $0x39] sm:$0xff]
      %v774 = vld [vmem:[%s719 + $0x49] sm:$0xff]
      %v775 = vld [vmem:[%s719 + $0x51] sm:$0xff]
      %v776 = vld [vmem:[%s719 + $0x61] sm:$0xff]
      %v777 = vld [vmem:[%s719 + $0x69] sm:$0xff]
      %v778 = vld [vmem:[%s719 + $0x79] sm:$0xff]
      %v779 = vld [vmem:[%s719 + $0x81] sm:$0xff]
      %v780 = vld [vmem:[%s719 + $0x91] sm:$0xff]
      %v781 = vld [vmem:[%s719 + $0x99] sm:$0xff]
      %v782 = vld [vmem:[%s719 + $0xa9] sm:$0xff]
      %v783 = vld [vmem:[%s719 + $0xb1] sm:$0xff]
      %v784 = vld [vmem:[%s719 + $0xc1] sm:$0xff]
      %v785 = vld [vmem:[%s719 + $0xc9] sm:$0xff]
      %v786 = vld [vmem:[%s719 + $0xd9] sm:$0xff]
      %v787 = vld [vmem:[%s719 + $0xe1] sm:$0xff]
      %v788 = vld [vmem:[%s719 + $0xf1] sm:$0xff]
      %v789 = vld [vmem:[%s719 + $0xf9] sm:$0xff]
      %v790 = vld [vmem:[%s719 + $0x109] sm:$0xff]
      %v791 = vld [vmem:[%s719 + $0x111] sm:$0xff]
      %v792 = vld [vmem:[%s719 + $0x121] sm:$0xff]
      %v793 = vld [vmem:[%s719 + $0x129] sm:$0xff]
      %v794 = vld [vmem:[%s719 + $0x139] sm:$0xff]
      %v795 = vld [vmem:[%s719 + $0x141] sm:$0xff]
      %v796 = vld [vmem:[%s719 + $0x151] sm:$0xff]
      %v797 = vld [vmem:[%s719 + $0x159] sm:$0xff]
      %v798 = vld [vmem:[%s719 + $0x169] sm:$0xff]
      %v799 = vld [vmem:[%s719 + $0x171] sm:$0xff]
      %v800 = vpack.c.bf16 %v769, %v768
      %v801 = vpack.c.bf16 %v771, %v770
      %v802 = vpack.c.bf16 %v773, %v772
      %v803 = vpack.c.bf16 %v775, %v774
      %v804 = vpack.c.bf16 %v777, %v776
      %v805 = vpack.c.bf16 %v779, %v778
      %v806 = vpack.c.bf16 %v781, %v780
      %v807 = vpack.c.bf16 %v783, %v782
      %v808 = vpack.c.bf16 %v785, %v784
      %v809 = vpack.c.bf16 %v787, %v786
      %v810 = vpack.c.bf16 %v789, %v788
      %v811 = vpack.c.bf16 %v791, %v790
      %v812 = vpack.c.bf16 %v793, %v792
      %v813 = vpack.c.bf16 %v795, %v794
      %v814 = vpack.c.bf16 %v797, %v796
      %v815 = vpack.c.bf16 %v799, %v798
      %v816 = vld [vmem:[%s719 + $0x2] sm:$0xff]
      %v817 = vld [vmem:[%s719 + $0xa] sm:$0xff]
      %v818 = vld [vmem:[%s719 + $0x1a] sm:$0xff]
      %v819 = vld [vmem:[%s719 + $0x22] sm:$0xff]
      %v820 = vld [vmem:[%s719 + $0x32] sm:$0xff]
      %v821 = vld [vmem:[%s719 + $0x3a] sm:$0xff]
      %v822 = vld [vmem:[%s719 + $0x4a] sm:$0xff]
      %v823 = vld [vmem:[%s719 + $0x52] sm:$0xff]
      %v824 = vld [vmem:[%s719 + $0x62] sm:$0xff]
      %v825 = vld [vmem:[%s719 + $0x6a] sm:$0xff]
      %v826 = vld [vmem:[%s719 + $0x7a] sm:$0xff]
      %v827 = vld [vmem:[%s719 + $0x82] sm:$0xff]
      %v828 = vld [vmem:[%s719 + $0x92] sm:$0xff]
      %v829 = vld [vmem:[%s719 + $0x9a] sm:$0xff]
      %v830 = vld [vmem:[%s719 + $0xaa] sm:$0xff]
      %v831 = vld [vmem:[%s719 + $0xb2] sm:$0xff]
      %v832 = vld [vmem:[%s719 + $0xc2] sm:$0xff]
      %v833 = vld [vmem:[%s719 + $0xca] sm:$0xff]
      %v834 = vld [vmem:[%s719 + $0xda] sm:$0xff]
      %v835 = vld [vmem:[%s719 + $0xe2] sm:$0xff]
      %v836 = vld [vmem:[%s719 + $0xf2] sm:$0xff]
      %v837 = vld [vmem:[%s719 + $0xfa] sm:$0xff]
      %v838 = vld [vmem:[%s719 + $0x10a] sm:$0xff]
      %v839 = vld [vmem:[%s719 + $0x112] sm:$0xff]
      %v840 = vld [vmem:[%s719 + $0x122] sm:$0xff]
      %v841 = vld [vmem:[%s719 + $0x12a] sm:$0xff]
      %v842 = vld [vmem:[%s719 + $0x13a] sm:$0xff]
      %v843 = vld [vmem:[%s719 + $0x142] sm:$0xff]
      %v844 = vld [vmem:[%s719 + $0x152] sm:$0xff]
      %v845 = vld [vmem:[%s719 + $0x15a] sm:$0xff]
      %v846 = vld [vmem:[%s719 + $0x16a] sm:$0xff]
      %v847 = vld [vmem:[%s719 + $0x172] sm:$0xff]
      %v848 = vpack.c.bf16 %v817, %v816
      %v849 = vpack.c.bf16 %v819, %v818
      %v850 = vpack.c.bf16 %v821, %v820
      %v851 = vpack.c.bf16 %v823, %v822
      %v852 = vpack.c.bf16 %v825, %v824
      %v853 = vpack.c.bf16 %v827, %v826
      %v854 = vpack.c.bf16 %v829, %v828
      %v855 = vpack.c.bf16 %v831, %v830
      %v856 = vpack.c.bf16 %v833, %v832
      %v857 = vpack.c.bf16 %v835, %v834
      %v858 = vpack.c.bf16 %v837, %v836
      %v859 = vpack.c.bf16 %v839, %v838
      %v860 = vpack.c.bf16 %v841, %v840
      %v861 = vpack.c.bf16 %v843, %v842
      %v862 = vpack.c.bf16 %v845, %v844
      %v863 = vpack.c.bf16 %v847, %v846
      %v864 = vld [vmem:[%s1] sm:$0xf]
      %v865 = vld [vmem:[%s1 + $0x4] sm:$0xf]
      %v866 = vld [vmem:[%s1 + $0x8] sm:$0xf]
      %v867 = vld [vmem:[%s1 + $0xc] sm:$0xf]
      %v868 = vld [vmem:[%s1 + $0x10] sm:$0xf]
      %v869 = vld [vmem:[%s1 + $0x14] sm:$0xf]
      %v870 = vld [vmem:[%s1 + $0x18] sm:$0xf]
      %v871 = vld [vmem:[%s1 + $0x1c] sm:$0xf]
      %v872 = vld [vmem:[%s1 + $0x20] sm:$0xf]
      %v873 = vld [vmem:[%s1 + $0x24] sm:$0xf]
      %v874 = vld [vmem:[%s1 + $0x28] sm:$0xf]
      %v875 = vld [vmem:[%s1 + $0x2c] sm:$0xf]
      %v876 = vld [vmem:[%s1 + $0x30] sm:$0xf]
      %v877 = vld [vmem:[%s1 + $0x34] sm:$0xf]
      %v878 = vld [vmem:[%s1 + $0x38] sm:$0xf]
      %v879 = vld [vmem:[%s1 + $0x3c] sm:$0xf]
      %v880 = vld [vmem:[%s1 + $0x40] sm:$0xf]
      %v881 = vld [vmem:[%s1 + $0x44] sm:$0xf]
      %v882 = vld [vmem:[%s1 + $0x48] sm:$0xf]
      %v883 = vld [vmem:[%s1 + $0x4c] sm:$0xf]
      %v884 = vld [vmem:[%s1 + $0x50] sm:$0xf]
      %v885 = vld [vmem:[%s1 + $0x54] sm:$0xf]
      %v886 = vld [vmem:[%s1 + $0x58] sm:$0xf]
      %v887 = vld [vmem:[%s1 + $0x5c] sm:$0xf]
      %v888 = vld [vmem:[%s1 + $0x60] sm:$0xf]
      %v889 = vld [vmem:[%s1 + $0x64] sm:$0xf]
      %v890 = vld [vmem:[%s1 + $0x68] sm:$0xf]
      %v891 = vld [vmem:[%s1 + $0x6c] sm:$0xf]
      %v892 = vld [vmem:[%s1 + $0x70] sm:$0xf]
      %v893 = vld [vmem:[%s1 + $0x74] sm:$0xf]
      %v894 = vld [vmem:[%s1 + $0x78] sm:$0xf]
      %v895 = vld [vmem:[%s1 + $0x7c] sm:$0xf]
      %v896 = vld [vmem:[%s1 + $0x80] sm:$0xf]
      %v897 = vld [vmem:[%s1 + $0x84] sm:$0xf]
      %v898 = vld [vmem:[%s1 + $0x88] sm:$0xf]
      %v899 = vld [vmem:[%s1 + $0x8c] sm:$0xf]
      %v900 = vld [vmem:[%s1 + $0x90] sm:$0xf]
      %v901 = vld [vmem:[%s1 + $0x94] sm:$0xf]
      %v902 = vld [vmem:[%s1 + $0x98] sm:$0xf]
      %v903 = vld [vmem:[%s1 + $0x9c] sm:$0xf]
      %v904 = vld [vmem:[%s1 + $0xa0] sm:$0xf]
      %v905 = vld [vmem:[%s1 + $0xa4] sm:$0xf]
      %v906 = vld [vmem:[%s1 + $0xa8] sm:$0xf]
      %v907 = vld [vmem:[%s1 + $0xac] sm:$0xf]
      %v908 = vld [vmem:[%s1 + $0xb0] sm:$0xf]
      %v909 = vld [vmem:[%s1 + $0xb4] sm:$0xf]
      %v910 = vld [vmem:[%s1 + $0xb8] sm:$0xf]
      %v911 = vld [vmem:[%s1 + $0xbc] sm:$0xf]
      %v912 = vld [vmem:[%s1 + $0xc0] sm:$0xf]
      %v913 = vld [vmem:[%s1 + $0xc4] sm:$0xf]
      %v914 = vld [vmem:[%s1 + $0xc8] sm:$0xf]
      %v915 = vld [vmem:[%s1 + $0xcc] sm:$0xf]
      %v916 = vld [vmem:[%s1 + $0xd0] sm:$0xf]
      %v917 = vld [vmem:[%s1 + $0xd4] sm:$0xf]
      %v918 = vld [vmem:[%s1 + $0xd8] sm:$0xf]
      %v919 = vld [vmem:[%s1 + $0xdc] sm:$0xf]
      %v920 = vld [vmem:[%s1 + $0xe0] sm:$0xf]
      %v921 = vld [vmem:[%s1 + $0xe4] sm:$0xf]
      %v922 = vld [vmem:[%s1 + $0xe8] sm:$0xf]
      %v923 = vld [vmem:[%s1 + $0xec] sm:$0xf]
      %v924 = vld [vmem:[%s1 + $0xf0] sm:$0xf]
      %v925 = vld [vmem:[%s1 + $0xf4] sm:$0xf]
      %v926 = vld [vmem:[%s1 + $0xf8] sm:$0xf]
      %v927 = vld [vmem:[%s1 + $0xfc] sm:$0xf]
      %v928 = vld [vmem:[%s1 + $0x100] sm:$0xf]
      %v929 = vld [vmem:[%s1 + $0x104] sm:$0xf]
      %v930 = vld [vmem:[%s1 + $0x108] sm:$0xf]
      %v931 = vld [vmem:[%s1 + $0x10c] sm:$0xf]
      %v932 = vld [vmem:[%s1 + $0x110] sm:$0xf]
      %v933 = vld [vmem:[%s1 + $0x114] sm:$0xf]
      %v934 = vld [vmem:[%s1 + $0x118] sm:$0xf]
      %v935 = vld [vmem:[%s1 + $0x11c] sm:$0xf]
      %v936 = vld [vmem:[%s1 + $0x120] sm:$0xf]
      %v937 = vld [vmem:[%s1 + $0x124] sm:$0xf]
      %v938 = vld [vmem:[%s1 + $0x128] sm:$0xf]
      %v939 = vld [vmem:[%s1 + $0x12c] sm:$0xf]
      %v940 = vld [vmem:[%s1 + $0x130] sm:$0xf]
      %v941 = vld [vmem:[%s1 + $0x134] sm:$0xf]
      %v942 = vld [vmem:[%s1 + $0x138] sm:$0xf]
      %v943 = vld [vmem:[%s1 + $0x13c] sm:$0xf]
      %v944 = vld [vmem:[%s1 + $0x140] sm:$0xf]
      %v945 = vld [vmem:[%s1 + $0x144] sm:$0xf]
      %v946 = vld [vmem:[%s1 + $0x148] sm:$0xf]
      %v947 = vld [vmem:[%s1 + $0x14c] sm:$0xf]
      %v948 = vld [vmem:[%s1 + $0x150] sm:$0xf]
      %v949 = vld [vmem:[%s1 + $0x154] sm:$0xf]
      %v950 = vld [vmem:[%s1 + $0x158] sm:$0xf]
      %v951 = vld [vmem:[%s1 + $0x15c] sm:$0xf]
      %v952 = vld [vmem:[%s1 + $0x160] sm:$0xf]
      %v953 = vld [vmem:[%s1 + $0x164] sm:$0xf]
      %v954 = vld [vmem:[%s1 + $0x168] sm:$0xf]
      %v955 = vld [vmem:[%s1 + $0x16c] sm:$0xf]
      %v956 = vld [vmem:[%s1 + $0x170] sm:$0xf]
      %v957 = vld [vmem:[%s1 + $0x174] sm:$0xf]
      %v958 = vld [vmem:[%s1 + $0x178] sm:$0xf]
      %v959 = vld [vmem:[%s1 + $0x17c] sm:$0xf]
      %v960 = vld [vmem:[%s1 + $0x180] sm:$0xf]
      %v961 = vld [vmem:[%s1 + $0x184] sm:$0xf]
      %v962 = vld [vmem:[%s1 + $0x188] sm:$0xf]
      %v963 = vld [vmem:[%s1 + $0x18c] sm:$0xf]
      %v964 = vld [vmem:[%s1 + $0x190] sm:$0xf]
      %v965 = vld [vmem:[%s1 + $0x194] sm:$0xf]
      %v966 = vld [vmem:[%s1 + $0x198] sm:$0xf]
      %v967 = vld [vmem:[%s1 + $0x19c] sm:$0xf]
      %v968 = vld [vmem:[%s1 + $0x1a0] sm:$0xf]
      %v969 = vld [vmem:[%s1 + $0x1a4] sm:$0xf]
      %v970 = vld [vmem:[%s1 + $0x1a8] sm:$0xf]
      %v971 = vld [vmem:[%s1 + $0x1ac] sm:$0xf]
      %v972 = vld [vmem:[%s1 + $0x1b0] sm:$0xf]
      %v973 = vld [vmem:[%s1 + $0x1b4] sm:$0xf]
      %v974 = vld [vmem:[%s1 + $0x1b8] sm:$0xf]
      %v975 = vld [vmem:[%s1 + $0x1bc] sm:$0xf]
      %v976 = vld [vmem:[%s1 + $0x1c0] sm:$0xf]
      %v977 = vld [vmem:[%s1 + $0x1c4] sm:$0xf]
      %v978 = vld [vmem:[%s1 + $0x1c8] sm:$0xf]
      %v979 = vld [vmem:[%s1 + $0x1cc] sm:$0xf]
      %v980 = vld [vmem:[%s1 + $0x1d0] sm:$0xf]
      %v981 = vld [vmem:[%s1 + $0x1d4] sm:$0xf]
      %v982 = vld [vmem:[%s1 + $0x1d8] sm:$0xf]
      %v983 = vld [vmem:[%s1 + $0x1dc] sm:$0xf]
      %v984 = vld [vmem:[%s1 + $0x1e0] sm:$0xf]
      %v985 = vld [vmem:[%s1 + $0x1e4] sm:$0xf]
      %v986 = vld [vmem:[%s1 + $0x1e8] sm:$0xf]
      %v987 = vld [vmem:[%s1 + $0x1ec] sm:$0xf]
      %v988 = vld [vmem:[%s1 + $0x1f0] sm:$0xf]
      %v989 = vld [vmem:[%s1 + $0x1f4] sm:$0xf]
      %v990 = vld [vmem:[%s1 + $0x1f8] sm:$0xf]
      %v991 = vld [vmem:[%s1 + $0x1fc] sm:$0xf]
      %v992 = vld [vmem:[%s1 + $0x200] sm:$0xf]
      %v993 = vld [vmem:[%s1 + $0x204] sm:$0xf]
      %v994 = vld [vmem:[%s1 + $0x208] sm:$0xf]
      %v995 = vld [vmem:[%s1 + $0x20c] sm:$0xf]
      %v996 = vld [vmem:[%s1 + $0x210] sm:$0xf]
      %v997 = vld [vmem:[%s1 + $0x214] sm:$0xf]
      %v998 = vld [vmem:[%s1 + $0x218] sm:$0xf]
      %v999 = vld [vmem:[%s1 + $0x21c] sm:$0xf]
      %v1000 = vld [vmem:[%s1 + $0x220] sm:$0xf]
      %v1001 = vld [vmem:[%s1 + $0x224] sm:$0xf]
      %v1002 = vld [vmem:[%s1 + $0x228] sm:$0xf]
      %v1003 = vld [vmem:[%s1 + $0x22c] sm:$0xf]
      %v1004 = vld [vmem:[%s1 + $0x230] sm:$0xf]
      %v1005 = vld [vmem:[%s1 + $0x234] sm:$0xf]
      %v1006 = vld [vmem:[%s1 + $0x238] sm:$0xf]
      %v1007 = vld [vmem:[%s1 + $0x23c] sm:$0xf]
      %v1152 = vunpack.c.l.b16 %v864
      %v1153 = vunpack.c.l.b16 %v865
      %v1154 = vunpack.c.l.b16 %v866
      %v1155 = vunpack.c.l.b16 %v867
      %v1156 = vunpack.c.l.b16 %v868
      %v1157 = vunpack.c.l.b16 %v869
      %v1158 = vunpack.c.l.b16 %v870
      %v1159 = vunpack.c.l.b16 %v871
      %v1160 = vunpack.c.l.b16 %v872
      %v1161 = vunpack.c.l.b16 %v873
      %v1162 = vunpack.c.l.b16 %v874
      %v1163 = vunpack.c.l.b16 %v875
      %v1164 = vunpack.c.l.b16 %v876
      %v1165 = vunpack.c.l.b16 %v877
      %v1166 = vunpack.c.l.b16 %v878
      %v1167 = vunpack.c.l.b16 %v879
      %v1168 = vunpack.c.l.b16 %v880
      %v1169 = vunpack.c.l.b16 %v881
      %v1170 = vunpack.c.l.b16 %v882
      %v1171 = vunpack.c.l.b16 %v883
      %v1172 = vunpack.c.l.b16 %v884
      %v1173 = vunpack.c.l.b16 %v885
      %v1174 = vunpack.c.l.b16 %v886
      %v1175 = vunpack.c.l.b16 %v887
      %v1176 = vunpack.c.l.b16 %v888
      %v1177 = vunpack.c.l.b16 %v889
      %v1178 = vunpack.c.l.b16 %v890
      %v1179 = vunpack.c.l.b16 %v891
      %v1180 = vunpack.c.l.b16 %v892
      %v1181 = vunpack.c.l.b16 %v893
      %v1182 = vunpack.c.l.b16 %v894
      %v1183 = vunpack.c.l.b16 %v895
      %v1184 = vunpack.c.l.b16 %v896
      %v1185 = vunpack.c.l.b16 %v897
      %v1186 = vunpack.c.l.b16 %v898
      %v1187 = vunpack.c.l.b16 %v899
      %v1188 = vunpack.c.l.b16 %v900
      %v1189 = vunpack.c.l.b16 %v901
      %v1190 = vunpack.c.l.b16 %v902
      %v1191 = vunpack.c.l.b16 %v903
      %v1192 = vunpack.c.l.b16 %v904
      %v1193 = vunpack.c.l.b16 %v905
      %v1194 = vunpack.c.l.b16 %v906
      %v1195 = vunpack.c.l.b16 %v907
      %v1196 = vunpack.c.l.b16 %v908
      %v1197 = vunpack.c.l.b16 %v909
      %v1198 = vunpack.c.l.b16 %v910
      %v1199 = vunpack.c.l.b16 %v911
      %v1200 = vunpack.c.l.b16 %v912
      %v1201 = vunpack.c.l.b16 %v913
      %v1202 = vunpack.c.l.b16 %v914
      %v1203 = vunpack.c.l.b16 %v915
      %v1204 = vunpack.c.l.b16 %v916
      %v1205 = vunpack.c.l.b16 %v917
      %v1206 = vunpack.c.l.b16 %v918
      %v1207 = vunpack.c.l.b16 %v919
      %v1208 = vunpack.c.l.b16 %v920
      %v1209 = vunpack.c.l.b16 %v921
      %v1210 = vunpack.c.l.b16 %v922
      %v1211 = vunpack.c.l.b16 %v923
      %v1212 = vunpack.c.l.b16 %v924
      %v1213 = vunpack.c.l.b16 %v925
      %v1214 = vunpack.c.l.b16 %v926
      %v1215 = vunpack.c.l.b16 %v927
      %v1216 = vunpack.c.l.b16 %v928
      %v1217 = vunpack.c.l.b16 %v929
      %v1218 = vunpack.c.l.b16 %v930
      %v1219 = vunpack.c.l.b16 %v931
      %v1220 = vunpack.c.l.b16 %v932
      %v1221 = vunpack.c.l.b16 %v933
      %v1222 = vunpack.c.l.b16 %v934
      %v1223 = vunpack.c.l.b16 %v935
      %v1224 = vunpack.c.l.b16 %v936
      %v1225 = vunpack.c.l.b16 %v937
      %v1226 = vunpack.c.l.b16 %v938
      %v1227 = vunpack.c.l.b16 %v939
      %v1228 = vunpack.c.l.b16 %v940
      %v1229 = vunpack.c.l.b16 %v941
      %v1230 = vunpack.c.l.b16 %v942
      %v1231 = vunpack.c.l.b16 %v943
      %v1232 = vunpack.c.l.b16 %v944
      %v1233 = vunpack.c.l.b16 %v945
      %v1234 = vunpack.c.l.b16 %v946
      %v1235 = vunpack.c.l.b16 %v947
      %v1236 = vunpack.c.l.b16 %v948
      %v1237 = vunpack.c.l.b16 %v949
      %v1238 = vunpack.c.l.b16 %v950
      %v1239 = vunpack.c.l.b16 %v951
      %v1240 = vunpack.c.l.b16 %v952
      %v1241 = vunpack.c.l.b16 %v953
      %v1242 = vunpack.c.l.b16 %v954
      %v1243 = vunpack.c.l.b16 %v955
      %v1244 = vunpack.c.l.b16 %v956
      %v1245 = vunpack.c.l.b16 %v957
      %v1246 = vunpack.c.l.b16 %v958
      %v1247 = vunpack.c.l.b16 %v959
      %v1248 = vunpack.c.l.b16 %v960
      %v1249 = vunpack.c.l.b16 %v961
      %v1250 = vunpack.c.l.b16 %v962
      %v1251 = vunpack.c.l.b16 %v963
      %v1252 = vunpack.c.l.b16 %v964
      %v1253 = vunpack.c.l.b16 %v965
      %v1254 = vunpack.c.l.b16 %v966
      %v1255 = vunpack.c.l.b16 %v967
      %v1256 = vunpack.c.l.b16 %v968
      %v1257 = vunpack.c.l.b16 %v969
      %v1258 = vunpack.c.l.b16 %v970
      %v1259 = vunpack.c.l.b16 %v971
      %v1260 = vunpack.c.l.b16 %v972
      %v1261 = vunpack.c.l.b16 %v973
      %v1262 = vunpack.c.l.b16 %v974
      %v1263 = vunpack.c.l.b16 %v975
      %v1264 = vunpack.c.l.b16 %v976
      %v1265 = vunpack.c.l.b16 %v977
      %v1266 = vunpack.c.l.b16 %v978
      %v1267 = vunpack.c.l.b16 %v979
      %v1268 = vunpack.c.l.b16 %v980
      %v1269 = vunpack.c.l.b16 %v981
      %v1270 = vunpack.c.l.b16 %v982
      %v1271 = vunpack.c.l.b16 %v983
      %v1272 = vunpack.c.l.b16 %v984
      %v1273 = vunpack.c.l.b16 %v985
      %v1274 = vunpack.c.l.b16 %v986
      %v1275 = vunpack.c.l.b16 %v987
      %v1276 = vunpack.c.l.b16 %v988
      %v1277 = vunpack.c.l.b16 %v989
      %v1278 = vunpack.c.l.b16 %v990
      %v1279 = vunpack.c.l.b16 %v991
      %v1280 = vunpack.c.l.b16 %v992
      %v1281 = vunpack.c.l.b16 %v993
      %v1282 = vunpack.c.l.b16 %v994
      %v1283 = vunpack.c.l.b16 %v995
      %v1284 = vunpack.c.l.b16 %v996
      %v1285 = vunpack.c.l.b16 %v997
      %v1286 = vunpack.c.l.b16 %v998
      %v1287 = vunpack.c.l.b16 %v999
      %v1288 = vunpack.c.l.b16 %v1000
      %v1289 = vunpack.c.l.b16 %v1001
      %v1290 = vunpack.c.l.b16 %v1002
      %v1291 = vunpack.c.l.b16 %v1003
      %v1292 = vunpack.c.l.b16 %v1004
      %v1293 = vunpack.c.l.b16 %v1005
      %v1294 = vunpack.c.l.b16 %v1006
      %v1295 = vunpack.c.l.b16 %v1007
      %v1296 = vpack.c.b16 %v1153, %v1152
      %v1297 = vpack.c.b16 %v1155, %v1154
      %v1298 = vpack.c.b16 %v1157, %v1156
      %v1299 = vpack.c.b16 %v1159, %v1158
      %v1300 = vpack.c.b16 %v1161, %v1160
      %v1301 = vpack.c.b16 %v1163, %v1162
      %v1302 = vpack.c.b16 %v1165, %v1164
      %v1303 = vpack.c.b16 %v1167, %v1166
      %v1304 = vpack.c.b16 %v1169, %v1168
      %v1305 = vpack.c.b16 %v1171, %v1170
      %v1306 = vpack.c.b16 %v1173, %v1172
      %v1307 = vpack.c.b16 %v1175, %v1174
      %v1308 = vpack.c.b16 %v1177, %v1176
      %v1309 = vpack.c.b16 %v1179, %v1178
      %v1310 = vpack.c.b16 %v1181, %v1180
      %v1311 = vpack.c.b16 %v1183, %v1182
      %v1312 = vpack.c.b16 %v1185, %v1184
      %v1313 = vpack.c.b16 %v1187, %v1186
      %v1314 = vpack.c.b16 %v1189, %v1188
      %v1315 = vpack.c.b16 %v1191, %v1190
      %v1316 = vpack.c.b16 %v1193, %v1192
      %v1317 = vpack.c.b16 %v1195, %v1194
      %v1318 = vpack.c.b16 %v1197, %v1196
      %v1319 = vpack.c.b16 %v1199, %v1198
      %v1320 = vpack.c.b16 %v1201, %v1200
      %v1321 = vpack.c.b16 %v1203, %v1202
      %v1322 = vpack.c.b16 %v1205, %v1204
      %v1323 = vpack.c.b16 %v1207, %v1206
      %v1324 = vpack.c.b16 %v1209, %v1208
      %v1325 = vpack.c.b16 %v1211, %v1210
      %v1326 = vpack.c.b16 %v1213, %v1212
      %v1327 = vpack.c.b16 %v1215, %v1214
      %v1328 = vpack.c.b16 %v1217, %v1216
      %v1329 = vpack.c.b16 %v1219, %v1218
      %v1330 = vpack.c.b16 %v1221, %v1220
      %v1331 = vpack.c.b16 %v1223, %v1222
      %v1332 = vpack.c.b16 %v1225, %v1224
      %v1333 = vpack.c.b16 %v1227, %v1226
      %v1334 = vpack.c.b16 %v1229, %v1228
      %v1335 = vpack.c.b16 %v1231, %v1230
      %v1336 = vpack.c.b16 %v1233, %v1232
      %v1337 = vpack.c.b16 %v1235, %v1234
      %v1338 = vpack.c.b16 %v1237, %v1236
      %v1339 = vpack.c.b16 %v1239, %v1238
      %v1340 = vpack.c.b16 %v1241, %v1240
      %v1341 = vpack.c.b16 %v1243, %v1242
      %v1342 = vpack.c.b16 %v1245, %v1244
      %v1343 = vpack.c.b16 %v1247, %v1246
      %v1344 = vpack.c.b16 %v1249, %v1248
      %v1345 = vpack.c.b16 %v1251, %v1250
      %v1346 = vpack.c.b16 %v1253, %v1252
      %v1347 = vpack.c.b16 %v1255, %v1254
      %v1348 = vpack.c.b16 %v1257, %v1256
      %v1349 = vpack.c.b16 %v1259, %v1258
      %v1350 = vpack.c.b16 %v1261, %v1260
      %v1351 = vpack.c.b16 %v1263, %v1262
      %v1352 = vpack.c.b16 %v1265, %v1264
      %v1353 = vpack.c.b16 %v1267, %v1266
      %v1354 = vpack.c.b16 %v1269, %v1268
      %v1355 = vpack.c.b16 %v1271, %v1270
      %v1356 = vpack.c.b16 %v1273, %v1272
      %v1357 = vpack.c.b16 %v1275, %v1274
      %v1358 = vpack.c.b16 %v1277, %v1276
      %v1359 = vpack.c.b16 %v1279, %v1278
      %v1360 = vpack.c.b16 %v1281, %v1280
      %v1361 = vpack.c.b16 %v1283, %v1282
      %v1362 = vpack.c.b16 %v1285, %v1284
      %v1363 = vpack.c.b16 %v1287, %v1286
      %v1364 = vpack.c.b16 %v1289, %v1288
      %v1365 = vpack.c.b16 %v1291, %v1290
      %v1366 = vpack.c.b16 %v1293, %v1292
      %v1367 = vpack.c.b16 %v1295, %v1294
      %1440 = vmatprep.subr.bf16.mxu0 0
      %1441 = vmatpush1.bf16.msra.mxu0 %v1296
      %1442 = vmatprep.subr.bf16.mxu0 0
      %1443 = vmatpush1.bf16.msra.mxu0 %v1297
      %1444 = vmatprep.subr.bf16.mxu0 0
      %1445 = vmatpush1.bf16.msra.mxu0 %v1298
      %1446 = vmatprep.subr.bf16.mxu0 0
      %1447 = vmatpush1.bf16.msra.mxu0 %v1299
      %1448 = vmatprep.subr.bf16.mxu0 0
      %1449 = vmatpush1.bf16.msra.mxu0 %v1300
      %1450 = vmatprep.subr.bf16.mxu0 0
      %1451 = vmatpush1.bf16.msra.mxu0 %v1301
      %1452 = vmatprep.subr.bf16.mxu0 0
      %1453 = vmatpush1.bf16.msra.mxu0 %v1302
      %1454 = vmatprep.subr.bf16.mxu0 0
      %1455 = vmatpush1.bf16.msra.mxu0 %v1303
      %1456 = vmatprep.subr.bf16.mxu0 0
      %1457 = vmatpush1.bf16.msra.mxu0 %v1304
      %1458 = vmatprep.subr.bf16.mxu0 0
      %1459 = vmatpush1.bf16.msra.mxu0 %v1305
      %1460 = vmatprep.subr.bf16.mxu0 0
      %1461 = vmatpush1.bf16.msra.mxu0 %v1306
      %1462 = vmatprep.subr.bf16.mxu0 0
      %1463 = vmatpush1.bf16.msra.mxu0 %v1307
      %1464 = vmatprep.subr.bf16.mxu0 0
      %1465 = vmatpush1.bf16.msra.mxu0 %v1308
      %1466 = vmatprep.subr.bf16.mxu0 0
      %1467 = vmatpush1.bf16.msra.mxu0 %v1309
      %1468 = vmatprep.subr.bf16.mxu0 0
      %1469 = vmatpush1.bf16.msra.mxu0 %v1310
      %1470 = vmatprep.subr.bf16.mxu0 0
      %1471 = vmatpush1.bf16.msra.mxu0 %v1311
      %1472 = vmatprep.mubr.bf16.mxu0 %v511
      %1473 = vmatmul.mubr.bf16.gmra.mrb[0].mxu0 %v463
      %v1474 = vpop.f32.mrb[0].mxu0
      %v1475 = vadd.f32 0.0, %v1474
      %v1476 = vpop.f32.mrb[0].mxu0
      %v1477 = vpop.f32.mrb[0].mxu0
      %v1478 = vadd.f32 0.0, %v1477
      %v1479 = vpop.f32.mrb[0].mxu0
      %1480 = vmatprep.mubr.bf16.mxu0 %v512
      %1481 = vmatmul.mubr.bf16.gmra.mrb[0].mxu0 %v464
      %v1482 = vpop.f32.mrb[0].mxu0
      %v1483 = vadd.f32 0.0, %v1482
      %v1484 = vpop.f32.mrb[0].mxu0
      %v1485 = vpop.f32.mrb[0].mxu0
      %v1486 = vadd.f32 0.0, %v1485
      %v1487 = vpop.f32.mrb[0].mxu0
      %1488 = vmatprep.mubr.bf16.mxu0 %v513
      %1489 = vmatmul.mubr.bf16.gmra.mrb[0].mxu0 %v465
      %v1490 = vpop.f32.mrb[0].mxu0
      %v1491 = vadd.f32 0.0, %v1490
      %v1492 = vpop.f32.mrb[0].mxu0
      %v1493 = vpop.f32.mrb[0].mxu0
      %v1494 = vadd.f32 0.0, %v1493
      %v1495 = vpop.f32.mrb[0].mxu0
      %1496 = vmatprep.mubr.bf16.mxu0 %v514
      %1497 = vmatmul.mubr.bf16.gmra.mrb[0].mxu0 %v466
      %v1498 = vpop.f32.mrb[0].mxu0
      %v1499 = vadd.f32 0.0, %v1498
      %v1500 = vpop.f32.mrb[0].mxu0
      %v1501 = vpop.f32.mrb[0].mxu0
      %v1502 = vadd.f32 0.0, %v1501
      %v1503 = vpop.f32.mrb[0].mxu0
      %1504 = vmatprep.mubr.bf16.mxu0 %v515
      %1505 = vmatmul.mubr.bf16.gmra.mrb[0].mxu0 %v467
      %v1506 = vpop.f32.mrb[0].mxu0
      %v1507 = vadd.f32 0.0, %v1506
      %v1508 = vpop.f32.mrb[0].mxu0
      %v1509 = vpop.f32.mrb[0].mxu0
      %v1510 = vadd.f32 0.0, %v1509
      %v1511 = vpop.f32.mrb[0].mxu0
      %1512 = vmatprep.mubr.bf16.mxu0 %v516
      %1513 = vmatmul.mubr.bf16.gmra.mrb[0].mxu0 %v468
      %v1514 = vpop.f32.mrb[0].mxu0
      %v1515 = vadd.f32 0.0, %v1514
      %v1516 = vpop.f32.mrb[0].mxu0
      %v1517 = vpop.f32.mrb[0].mxu0
      %v1518 = vadd.f32 0.0, %v1517
      %v1519 = vpop.f32.mrb[0].mxu0
      %1520 = vmatprep.mubr.bf16.mxu0 %v517
      %1521 = vmatmul.mubr.bf16.gmra.mrb[0].mxu0 %v469
      %v1522 = vpop.f32.mrb[0].mxu0
      %v1523 = vadd.f32 0.0, %v1522
      %v1524 = vpop.f32.mrb[0].mxu0
      %v1525 = vpop.f32.mrb[0].mxu0
      %v1526 = vadd.f32 0.0, %v1525
      %v1527 = vpop.f32.mrb[0].mxu0
      %1528 = vmatprep.mubr.bf16.mxu0 %v518
      %1529 = vmatmul.mubr.bf16.gmra.mrb[0].mxu0 %v470
      %v1530 = vpop.f32.mrb[0].mxu0
      %v1531 = vadd.f32 0.0, %v1530
      %v1532 = vpop.f32.mrb[0].mxu0
      %v1533 = vpop.f32.mrb[0].mxu0
      %v1534 = vadd.f32 0.0, %v1533
      %v1535 = vpop.f32.mrb[0].mxu0
      %1536 = vmatprep.mubr.bf16.mxu0 %v519
      %1537 = vmatmul.mubr.bf16.gmra.mrb[0].mxu0 %v471
      %v1538 = vpop.f32.mrb[0].mxu0
      %v1539 = vadd.f32 0.0, %v1538
      %v1540 = vpop.f32.mrb[0].mxu0
      %v1541 = vpop.f32.mrb[0].mxu0
      %v1542 = vadd.f32 0.0, %v1541
      %v1543 = vpop.f32.mrb[0].mxu0
      %1544 = vmatprep.mubr.bf16.mxu0 %v520
      %1545 = vmatmul.mubr.bf16.gmra.mrb[0].mxu0 %v472
      %v1546 = vpop.f32.mrb[0].mxu0
      %v1547 = vadd.f32 0.0, %v1546
      %v1548 = vpop.f32.mrb[0].mxu0
      %v1549 = vpop.f32.mrb[0].mxu0
      %v1550 = vadd.f32 0.0, %v1549
      %v1551 = vpop.f32.mrb[0].mxu0
      %1552 = vmatprep.mubr.bf16.mxu0 %v521
      %1553 = vmatmul.mubr.bf16.gmra.mrb[0].mxu0 %v473
      %v1554 = vpop.f32.mrb[0].mxu0
      %v1555 = vadd.f32 0.0, %v1554
      %v1556 = vpop.f32.mrb[0].mxu0
      %v1557 = vpop.f32.mrb[0].mxu0
      %v1558 = vadd.f32 0.0, %v1557
      %v1559 = vpop.f32.mrb[0].mxu0
      %1560 = vmatprep.mubr.bf16.mxu0 %v522
      %1561 = vmatmul.mubr.bf16.gmra.mrb[0].mxu0 %v474
      %v1562 = vpop.f32.mrb[0].mxu0
      %v1563 = vadd.f32 0.0, %v1562
      %v1564 = vpop.f32.mrb[0].mxu0
      %v1565 = vpop.f32.mrb[0].mxu0
      %v1566 = vadd.f32 0.0, %v1565
      %v1567 = vpop.f32.mrb[0].mxu0
      %1568 = vmatprep.mubr.bf16.mxu0 %v523
      %1569 = vmatmul.mubr.bf16.gmra.mrb[0].mxu0 %v475
      %v1570 = vpop.f32.mrb[0].mxu0
      %v1571 = vadd.f32 0.0, %v1570
      %v1572 = vpop.f32.mrb[0].mxu0
      %v1573 = vpop.f32.mrb[0].mxu0
      %v1574 = vadd.f32 0.0, %v1573
      %v1575 = vpop.f32.mrb[0].mxu0
      %1576 = vmatprep.mubr.bf16.mxu0 %v524
      %1577 = vmatmul.mubr.bf16.gmra.mrb[0].mxu0 %v476
      %v1578 = vpop.f32.mrb[0].mxu0
      %v1579 = vadd.f32 0.0, %v1578
      %v1580 = vpop.f32.mrb[0].mxu0
      %v1581 = vpop.f32.mrb[0].mxu0
      %v1582 = vadd.f32 0.0, %v1581
      %v1583 = vpop.f32.mrb[0].mxu0
      %1584 = vmatprep.mubr.bf16.mxu0 %v525
      %1585 = vmatmul.mubr.bf16.gmra.mrb[0].mxu0 %v477
      %v1586 = vpop.f32.mrb[0].mxu0
      %v1587 = vadd.f32 0.0, %v1586
      %v1588 = vpop.f32.mrb[0].mxu0
      %v1589 = vpop.f32.mrb[0].mxu0
      %v1590 = vadd.f32 0.0, %v1589
      %v1591 = vpop.f32.mrb[0].mxu0
      %1592 = vmatprep.mubr.bf16.mxu0 %v526
      %1593 = vmatmul.mubr.bf16.gmra.mrb[0].mxu0 %v478
      %v1594 = vpop.f32.mrb[0].mxu0
      %v1595 = vadd.f32 0.0, %v1594
      %v1596 = vpop.f32.mrb[0].mxu0
      %v1597 = vpop.f32.mrb[0].mxu0
      %v1598 = vadd.f32 0.0, %v1597
      %v1599 = vpop.f32.mrb[0].mxu0
      %1600 = vdwg.mxu0
      %1601 = vmatprep.subr.bf16.mxu0 0
      %1602 = vmatpush1.bf16.msra.mxu0 %v1312
      %1603 = vmatprep.subr.bf16.mxu0 0
      %1604 = vmatpush1.bf16.msra.mxu0 %v1313
      %1605 = vmatprep.subr.bf16.mxu0 0
      %1606 = vmatpush1.bf16.msra.mxu0 %v1314
      %1607 = vmatprep.subr.bf16.mxu0 0
      %1608 = vmatpush1.bf16.msra.mxu0 %v1315
      %1609 = vmatprep.subr.bf16.mxu0 0
      %1610 = vmatpush1.bf16.msra.mxu0 %v1316
      %1611 = vmatprep.subr.bf16.mxu0 0
      %1612 = vmatpush1.bf16.msra.mxu0 %v1317
      %1613 = vmatprep.subr.bf16.mxu0 0
      %1614 = vmatpush1.bf16.msra.mxu0 %v1318
      %1615 = vmatprep.subr.bf16.mxu0 0
      %1616 = vmatpush1.bf16.msra.mxu0 %v1319
      %1617 = vmatprep.subr.bf16.mxu0 0
      %1618 = vmatpush1.bf16.msra.mxu0 %v1320
      %1619 = vmatprep.subr.bf16.mxu0 0
      %1620 = vmatpush1.bf16.msra.mxu0 %v1321
      %1621 = vmatprep.subr.bf16.mxu0 0
      %1622 = vmatpush1.bf16.msra.mxu0 %v1322
      %1623 = vmatprep.subr.bf16.mxu0 0
      %1624 = vmatpush1.bf16.msra.mxu0 %v1323
      %1625 = vmatprep.subr.bf16.mxu0 0
      %1626 = vmatpush1.bf16.msra.mxu0 %v1324
      %1627 = vmatprep.subr.bf16.mxu0 0
      %1628 = vmatpush1.bf16.msra.mxu0 %v1325
      %1629 = vmatprep.subr.bf16.mxu0 0
      %1630 = vmatpush1.bf16.msra.mxu0 %v1326
      %1631 = vmatprep.subr.bf16.mxu0 0
      %1632 = vmatpush1.bf16.msra.mxu0 %v1327
      %1633 = vmatprep.mubr.bf16.mxu0 %v607
      %1634 = vmatmul.mubr.bf16.gmra.mrb[0].mxu0 %v559
      %v1635 = vpop.f32.mrb[0].mxu0
      %v1636 = vadd.f32 %v1475, %v1635
      %v1637 = vpop.f32.mrb[0].mxu0
      %v1638 = vpop.f32.mrb[0].mxu0
      %v1639 = vadd.f32 %v1478, %v1638
      %v1640 = vpop.f32.mrb[0].mxu0
      %1641 = vmatprep.mubr.bf16.mxu0 %v608
      %1642 = vmatmul.mubr.bf16.gmra.mrb[0].mxu0 %v560
      %v1643 = vpop.f32.mrb[0].mxu0
      %v1644 = vadd.f32 %v1483, %v1643
      %v1645 = vpop.f32.mrb[0].mxu0
      %v1646 = vpop.f32.mrb[0].mxu0
      %v1647 = vadd.f32 %v1486, %v1646
      %v1648 = vpop.f32.mrb[0].mxu0
      %1649 = vmatprep.mubr.bf16.mxu0 %v609
      %1650 = vmatmul.mubr.bf16.gmra.mrb[0].mxu0 %v561
      %v1651 = vpop.f32.mrb[0].mxu0
      %v1652 = vadd.f32 %v1491, %v1651
      %v1653 = vpop.f32.mrb[0].mxu0
      %v1654 = vpop.f32.mrb[0].mxu0
      %v1655 = vadd.f32 %v1494, %v1654
      %v1656 = vpop.f32.mrb[0].mxu0
      %1657 = vmatprep.mubr.bf16.mxu0 %v610
      %1658 = vmatmul.mubr.bf16.gmra.mrb[0].mxu0 %v562
      %v1659 = vpop.f32.mrb[0].mxu0
      %v1660 = vadd.f32 %v1499, %v1659
      %v1661 = vpop.f32.mrb[0].mxu0
      %v1662 = vpop.f32.mrb[0].mxu0
      %v1663 = vadd.f32 %v1502, %v1662
      %v1664 = vpop.f32.mrb[0].mxu0
      %1665 = vmatprep.mubr.bf16.mxu0 %v611
      %1666 = vmatmul.mubr.bf16.gmra.mrb[0].mxu0 %v563
      %v1667 = vpop.f32.mrb[0].mxu0
      %v1668 = vadd.f32 %v1507, %v1667
      %v1669 = vpop.f32.mrb[0].mxu0
      %v1670 = vpop.f32.mrb[0].mxu0
      %v1671 = vadd.f32 %v1510, %v1670
      %v1672 = vpop.f32.mrb[0].mxu0
      %1673 = vmatprep.mubr.bf16.mxu0 %v612
      %1674 = vmatmul.mubr.bf16.gmra.mrb[0].mxu0 %v564
      %v1675 = vpop.f32.mrb[0].mxu0
      %v1676 = vadd.f32 %v1515, %v1675
      %v1677 = vpop.f32.mrb[0].mxu0
      %v1678 = vpop.f32.mrb[0].mxu0
      %v1679 = vadd.f32 %v1518, %v1678
      %v1680 = vpop.f32.mrb[0].mxu0
      %1681 = vmatprep.mubr.bf16.mxu0 %v613
      %1682 = vmatmul.mubr.bf16.gmra.mrb[0].mxu0 %v565
      %v1683 = vpop.f32.mrb[0].mxu0
      %v1684 = vadd.f32 %v1523, %v1683
      %v1685 = vpop.f32.mrb[0].mxu0
      %v1686 = vpop.f32.mrb[0].mxu0
      %v1687 = vadd.f32 %v1526, %v1686
      %v1688 = vpop.f32.mrb[0].mxu0
      %1689 = vmatprep.mubr.bf16.mxu0 %v614
      %1690 = vmatmul.mubr.bf16.gmra.mrb[0].mxu0 %v566
      %v1691 = vpop.f32.mrb[0].mxu0
      %v1692 = vadd.f32 %v1531, %v1691
      %v1693 = vpop.f32.mrb[0].mxu0
      %v1694 = vpop.f32.mrb[0].mxu0
      %v1695 = vadd.f32 %v1534, %v1694
      %v1696 = vpop.f32.mrb[0].mxu0
      %1697 = vmatprep.mubr.bf16.mxu0 %v615
      %1698 = vmatmul.mubr.bf16.gmra.mrb[0].mxu0 %v567
      %v1699 = vpop.f32.mrb[0].mxu0
      %v1700 = vadd.f32 %v1539, %v1699
      %v1701 = vpop.f32.mrb[0].mxu0
      %v1702 = vpop.f32.mrb[0].mxu0
      %v1703 = vadd.f32 %v1542, %v1702
      %v1704 = vpop.f32.mrb[0].mxu0
      %1705 = vmatprep.mubr.bf16.mxu0 %v616
      %1706 = vmatmul.mubr.bf16.gmra.mrb[0].mxu0 %v568
      %v1707 = vpop.f32.mrb[0].mxu0
      %v1708 = vadd.f32 %v1547, %v1707
      %v1709 = vpop.f32.mrb[0].mxu0
      %v1710 = vpop.f32.mrb[0].mxu0
      %v1711 = vadd.f32 %v1550, %v1710
      %v1712 = vpop.f32.mrb[0].mxu0
      %1713 = vmatprep.mubr.bf16.mxu0 %v617
      %1714 = vmatmul.mubr.bf16.gmra.mrb[0].mxu0 %v569
      %v1715 = vpop.f32.mrb[0].mxu0
      %v1716 = vadd.f32 %v1555, %v1715
      %v1717 = vpop.f32.mrb[0].mxu0
      %v1718 = vpop.f32.mrb[0].mxu0
      %v1719 = vadd.f32 %v1558, %v1718
      %v1720 = vpop.f32.mrb[0].mxu0
      %1721 = vmatprep.mubr.bf16.mxu0 %v618
      %1722 = vmatmul.mubr.bf16.gmra.mrb[0].mxu0 %v570
      %v1723 = vpop.f32.mrb[0].mxu0
      %v1724 = vadd.f32 %v1563, %v1723
      %v1725 = vpop.f32.mrb[0].mxu0
      %v1726 = vpop.f32.mrb[0].mxu0
      %v1727 = vadd.f32 %v1566, %v1726
      %v1728 = vpop.f32.mrb[0].mxu0
      %1729 = vmatprep.mubr.bf16.mxu0 %v619
      %1730 = vmatmul.mubr.bf16.gmra.mrb[0].mxu0 %v571
      %v1731 = vpop.f32.mrb[0].mxu0
      %v1732 = vadd.f32 %v1571, %v1731
      %v1733 = vpop.f32.mrb[0].mxu0
      %v1734 = vpop.f32.mrb[0].mxu0
      %v1735 = vadd.f32 %v1574, %v1734
      %v1736 = vpop.f32.mrb[0].mxu0
      %1737 = vmatprep.mubr.bf16.mxu0 %v620
      %1738 = vmatmul.mubr.bf16.gmra.mrb[0].mxu0 %v572
      %v1739 = vpop.f32.mrb[0].mxu0
      %v1740 = vadd.f32 %v1579, %v1739
      %v1741 = vpop.f32.mrb[0].mxu0
      %v1742 = vpop.f32.mrb[0].mxu0
      %v1743 = vadd.f32 %v1582, %v1742
      %v1744 = vpop.f32.mrb[0].mxu0
      %1745 = vmatprep.mubr.bf16.mxu0 %v621
      %1746 = vmatmul.mubr.bf16.gmra.mrb[0].mxu0 %v573
      %v1747 = vpop.f32.mrb[0].mxu0
      %v1748 = vadd.f32 %v1587, %v1747
      %v1749 = vpop.f32.mrb[0].mxu0
      %v1750 = vpop.f32.mrb[0].mxu0
      %v1751 = vadd.f32 %v1590, %v1750
      %v1752 = vpop.f32.mrb[0].mxu0
      %1753 = vmatprep.mubr.bf16.mxu0 %v622
      %1754 = vmatmul.mubr.bf16.gmra.mrb[0].mxu0 %v574
      %v1755 = vpop.f32.mrb[0].mxu0
      %v1756 = vadd.f32 %v1595, %v1755
      %v1757 = vpop.f32.mrb[0].mxu0
      %v1758 = vpop.f32.mrb[0].mxu0
      %v1759 = vadd.f32 %v1598, %v1758
      %v1760 = vpop.f32.mrb[0].mxu0
      %1761 = vdwg.mxu0
      %1762 = vmatprep.subr.bf16.mxu0 0
      %1763 = vmatpush1.bf16.msra.mxu0 %v1328
      %1764 = vmatprep.subr.bf16.mxu0 0
      %1765 = vmatpush1.bf16.msra.mxu0 %v1329
      %1766 = vmatprep.subr.bf16.mxu0 0
      %1767 = vmatpush1.bf16.msra.mxu0 %v1330
      %1768 = vmatprep.subr.bf16.mxu0 0
      %1769 = vmatpush1.bf16.msra.mxu0 %v1331
      %1770 = vmatprep.subr.bf16.mxu0 0
      %1771 = vmatpush1.bf16.msra.mxu0 %v1332
      %1772 = vmatprep.subr.bf16.mxu0 0
      %1773 = vmatpush1.bf16.msra.mxu0 %v1333
      %1774 = vmatprep.subr.bf16.mxu0 0
      %1775 = vmatpush1.bf16.msra.mxu0 %v1334
      %1776 = vmatprep.subr.bf16.mxu0 0
      %1777 = vmatpush1.bf16.msra.mxu0 %v1335
      %1778 = vmatprep.subr.bf16.mxu0 0
      %1779 = vmatpush1.bf16.msra.mxu0 %v1336
      %1780 = vmatprep.subr.bf16.mxu0 0
      %1781 = vmatpush1.bf16.msra.mxu0 %v1337
      %1782 = vmatprep.subr.bf16.mxu0 0
      %1783 = vmatpush1.bf16.msra.mxu0 %v1338
      %1784 = vmatprep.subr.bf16.mxu0 0
      %1785 = vmatpush1.bf16.msra.mxu0 %v1339
      %1786 = vmatprep.subr.bf16.mxu0 0
      %1787 = vmatpush1.bf16.msra.mxu0 %v1340
      %1788 = vmatprep.subr.bf16.mxu0 0
      %1789 = vmatpush1.bf16.msra.mxu0 %v1341
      %1790 = vmatprep.subr.bf16.mxu0 0
      %1791 = vmatpush1.bf16.msra.mxu0 %v1342
      %1792 = vmatprep.subr.bf16.mxu0 0
      %1793 = vmatpush1.bf16.msra.mxu0 %v1343
      %1794 = vmatprep.mubr.bf16.mxu0 %v703
      %1795 = vmatmul.mubr.bf16.gmra.mrb[0].mxu0 %v655
      %v1796 = vpop.f32.mrb[0].mxu0
      %v1797 = vadd.f32 %v1636, %v1796
      %v1798 = vpop.f32.mrb[0].mxu0
      %v1799 = vpop.f32.mrb[0].mxu0
      %v1800 = vadd.f32 %v1639, %v1799
      %v1801 = vpop.f32.mrb[0].mxu0
      %1802 = vmatprep.mubr.bf16.mxu0 %v704
      %1803 = vmatmul.mubr.bf16.gmra.mrb[0].mxu0 %v656
      %v1804 = vpop.f32.mrb[0].mxu0
      %v1805 = vadd.f32 %v1644, %v1804
      %v1806 = vpop.f32.mrb[0].mxu0
      %v1807 = vpop.f32.mrb[0].mxu0
      %v1808 = vadd.f32 %v1647, %v1807
      %v1809 = vpop.f32.mrb[0].mxu0
      %1810 = vmatprep.mubr.bf16.mxu0 %v705
      %1811 = vmatmul.mubr.bf16.gmra.mrb[0].mxu0 %v657
      %v1812 = vpop.f32.mrb[0].mxu0
      %v1813 = vadd.f32 %v1652, %v1812
      %v1814 = vpop.f32.mrb[0].mxu0
      %v1815 = vpop.f32.mrb[0].mxu0
      %v1816 = vadd.f32 %v1655, %v1815
      %v1817 = vpop.f32.mrb[0].mxu0
      %1818 = vmatprep.mubr.bf16.mxu0 %v706
      %1819 = vmatmul.mubr.bf16.gmra.mrb[0].mxu0 %v658
      %v1820 = vpop.f32.mrb[0].mxu0
      %v1821 = vadd.f32 %v1660, %v1820
      %v1822 = vpop.f32.mrb[0].mxu0
      %v1823 = vpop.f32.mrb[0].mxu0
      %v1824 = vadd.f32 %v1663, %v1823
      %v1825 = vpop.f32.mrb[0].mxu0
      %1826 = vmatprep.mubr.bf16.mxu0 %v707
      %1827 = vmatmul.mubr.bf16.gmra.mrb[0].mxu0 %v659
      %v1828 = vpop.f32.mrb[0].mxu0
      %v1829 = vadd.f32 %v1668, %v1828
      %v1830 = vpop.f32.mrb[0].mxu0
      %v1831 = vpop.f32.mrb[0].mxu0
      %v1832 = vadd.f32 %v1671, %v1831
      %v1833 = vpop.f32.mrb[0].mxu0
      %1834 = vmatprep.mubr.bf16.mxu0 %v708
      %1835 = vmatmul.mubr.bf16.gmra.mrb[0].mxu0 %v660
      %v1836 = vpop.f32.mrb[0].mxu0
      %v1837 = vadd.f32 %v1676, %v1836
      %v1838 = vpop.f32.mrb[0].mxu0
      %v1839 = vpop.f32.mrb[0].mxu0
      %v1840 = vadd.f32 %v1679, %v1839
      %v1841 = vpop.f32.mrb[0].mxu0
      %1842 = vmatprep.mubr.bf16.mxu0 %v709
      %1843 = vmatmul.mubr.bf16.gmra.mrb[0].mxu0 %v661
      %v1844 = vpop.f32.mrb[0].mxu0
      %v1845 = vadd.f32 %v1684, %v1844
      %v1846 = vpop.f32.mrb[0].mxu0
      %v1847 = vpop.f32.mrb[0].mxu0
      %v1848 = vadd.f32 %v1687, %v1847
      %v1849 = vpop.f32.mrb[0].mxu0
      %1850 = vmatprep.mubr.bf16.mxu0 %v710
      %1851 = vmatmul.mubr.bf16.gmra.mrb[0].mxu0 %v662
      %v1852 = vpop.f32.mrb[0].mxu0
      %v1853 = vadd.f32 %v1692, %v1852
      %v1854 = vpop.f32.mrb[0].mxu0
      %v1855 = vpop.f32.mrb[0].mxu0
      %v1856 = vadd.f32 %v1695, %v1855
      %v1857 = vpop.f32.mrb[0].mxu0
      %1858 = vmatprep.mubr.bf16.mxu0 %v711
      %1859 = vmatmul.mubr.bf16.gmra.mrb[0].mxu0 %v663
      %v1860 = vpop.f32.mrb[0].mxu0
      %v1861 = vadd.f32 %v1700, %v1860
      %v1862 = vpop.f32.mrb[0].mxu0
      %v1863 = vpop.f32.mrb[0].mxu0
      %v1864 = vadd.f32 %v1703, %v1863
      %v1865 = vpop.f32.mrb[0].mxu0
      %1866 = vmatprep.mubr.bf16.mxu0 %v712
      %1867 = vmatmul.mubr.bf16.gmra.mrb[0].mxu0 %v664
      %v1868 = vpop.f32.mrb[0].mxu0
      %v1869 = vadd.f32 %v1708, %v1868
      %v1870 = vpop.f32.mrb[0].mxu0
      %v1871 = vpop.f32.mrb[0].mxu0
      %v1872 = vadd.f32 %v1711, %v1871
      %v1873 = vpop.f32.mrb[0].mxu0
      %1874 = vmatprep.mubr.bf16.mxu0 %v713
      %1875 = vmatmul.mubr.bf16.gmra.mrb[0].mxu0 %v665
      %v1876 = vpop.f32.mrb[0].mxu0
      %v1877 = vadd.f32 %v1716, %v1876
      %v1878 = vpop.f32.mrb[0].mxu0
      %v1879 = vpop.f32.mrb[0].mxu0
      %v1880 = vadd.f32 %v1719, %v1879
      %v1881 = vpop.f32.mrb[0].mxu0
      %1882 = vmatprep.mubr.bf16.mxu0 %v714
      %1883 = vmatmul.mubr.bf16.gmra.mrb[0].mxu0 %v666
      %v1884 = vpop.f32.mrb[0].mxu0
      %v1885 = vadd.f32 %v1724, %v1884
      %v1886 = vpop.f32.mrb[0].mxu0
      %v1887 = vpop.f32.mrb[0].mxu0
      %v1888 = vadd.f32 %v1727, %v1887
      %v1889 = vpop.f32.mrb[0].mxu0
      %1890 = vmatprep.mubr.bf16.mxu0 %v715
      %1891 = vmatmul.mubr.bf16.gmra.mrb[0].mxu0 %v667
      %v1892 = vpop.f32.mrb[0].mxu0
      %v1893 = vadd.f32 %v1732, %v1892
      %v1894 = vpop.f32.mrb[0].mxu0
      %v1895 = vpop.f32.mrb[0].mxu0
      %v1896 = vadd.f32 %v1735, %v1895
      %v1897 = vpop.f32.mrb[0].mxu0
      %1898 = vmatprep.mubr.bf16.mxu0 %v716
      %1899 = vmatmul.mubr.bf16.gmra.mrb[0].mxu0 %v668
      %v1900 = vpop.f32.mrb[0].mxu0
      %v1901 = vadd.f32 %v1740, %v1900
      %v1902 = vpop.f32.mrb[0].mxu0
      %v1903 = vpop.f32.mrb[0].mxu0
      %v1904 = vadd.f32 %v1743, %v1903
      %v1905 = vpop.f32.mrb[0].mxu0
      %1906 = vmatprep.mubr.bf16.mxu0 %v717
      %1907 = vmatmul.mubr.bf16.gmra.mrb[0].mxu0 %v669
      %v1908 = vpop.f32.mrb[0].mxu0
      %v1909 = vadd.f32 %v1748, %v1908
      %v1910 = vpop.f32.mrb[0].mxu0
      %v1911 = vpop.f32.mrb[0].mxu0
      %v1912 = vadd.f32 %v1751, %v1911
      %v1913 = vpop.f32.mrb[0].mxu0
      %1914 = vmatprep.mubr.bf16.mxu0 %v718
      %1915 = vmatmul.mubr.bf16.gmra.mrb[0].mxu0 %v670
      %v1916 = vpop.f32.mrb[0].mxu0
      %v1917 = vadd.f32 %v1756, %v1916
      %v1918 = vpop.f32.mrb[0].mxu0
      %v1919 = vpop.f32.mrb[0].mxu0
      %v1920 = vadd.f32 %v1759, %v1919
      %v1921 = vpop.f32.mrb[0].mxu0
      %1922 = vdwg.mxu0
      %1923 = vmatprep.subr.bf16.mxu0 0
      %1924 = vmatpush1.bf16.msra.mxu0 %v1344
      %1925 = vmatprep.subr.bf16.mxu0 0
      %1926 = vmatpush1.bf16.msra.mxu0 %v1345
      %1927 = vmatprep.subr.bf16.mxu0 0
      %1928 = vmatpush1.bf16.msra.mxu0 %v1346
      %1929 = vmatprep.subr.bf16.mxu0 0
      %1930 = vmatpush1.bf16.msra.mxu0 %v1347
      %1931 = vmatprep.subr.bf16.mxu0 0
      %1932 = vmatpush1.bf16.msra.mxu0 %v1348
      %1933 = vmatprep.subr.bf16.mxu0 0
      %1934 = vmatpush1.bf16.msra.mxu0 %v1349
      %1935 = vmatprep.subr.bf16.mxu0 0
      %1936 = vmatpush1.bf16.msra.mxu0 %v1350
      %1937 = vmatprep.subr.bf16.mxu0 0
      %1938 = vmatpush1.bf16.msra.mxu0 %v1351
      %1939 = vmatprep.subr.bf16.mxu0 0
      %1940 = vmatpush1.bf16.msra.mxu0 %v1352
      %1941 = vmatprep.subr.bf16.mxu0 0
      %1942 = vmatpush1.bf16.msra.mxu0 %v1353
      %1943 = vmatprep.subr.bf16.mxu0 0
      %1944 = vmatpush1.bf16.msra.mxu0 %v1354
      %1945 = vmatprep.subr.bf16.mxu0 0
      %1946 = vmatpush1.bf16.msra.mxu0 %v1355
      %1947 = vmatprep.subr.bf16.mxu0 0
      %1948 = vmatpush1.bf16.msra.mxu0 %v1356
      %1949 = vmatprep.subr.bf16.mxu0 0
      %1950 = vmatpush1.bf16.msra.mxu0 %v1357
      %1951 = vmatprep.subr.bf16.mxu0 0
      %1952 = vmatpush1.bf16.msra.mxu0 %v1358
      %1953 = vmatprep.subr.bf16.mxu0 0
      %1954 = vmatpush1.bf16.msra.mxu0 %v1359
      %1955 = vmatprep.mubr.bf16.mxu0 %v800
      %1956 = vmatmul.mubr.bf16.gmra.mrb[0].mxu0 %v752
      %v1957 = vpop.f32.mrb[0].mxu0
      %v1958 = vadd.f32 %v1797, %v1957
      %v1959 = vpop.f32.mrb[0].mxu0
      %v1960 = vpop.f32.mrb[0].mxu0
      %v1961 = vadd.f32 %v1800, %v1960
      %v1962 = vpop.f32.mrb[0].mxu0
      %1963 = vmatprep.mubr.bf16.mxu0 %v801
      %1964 = vmatmul.mubr.bf16.gmra.mrb[0].mxu0 %v753
      %v1965 = vpop.f32.mrb[0].mxu0
      %v1966 = vadd.f32 %v1805, %v1965
      %v1967 = vpop.f32.mrb[0].mxu0
      %v1968 = vpop.f32.mrb[0].mxu0
      %v1969 = vadd.f32 %v1808, %v1968
      %v1970 = vpop.f32.mrb[0].mxu0
      %1971 = vmatprep.mubr.bf16.mxu0 %v802
      %1972 = vmatmul.mubr.bf16.gmra.mrb[0].mxu0 %v754
      %v1973 = vpop.f32.mrb[0].mxu0
      %v1974 = vadd.f32 %v1813, %v1973
      %v1975 = vpop.f32.mrb[0].mxu0
      %v1976 = vpop.f32.mrb[0].mxu0
      %v1977 = vadd.f32 %v1816, %v1976
      %v1978 = vpop.f32.mrb[0].mxu0
      %1979 = vmatprep.mubr.bf16.mxu0 %v803
      %1980 = vmatmul.mubr.bf16.gmra.mrb[0].mxu0 %v755
      %v1981 = vpop.f32.mrb[0].mxu0
      %v1982 = vadd.f32 %v1821, %v1981
      %v1983 = vpop.f32.mrb[0].mxu0
      %v1984 = vpop.f32.mrb[0].mxu0
      %v1985 = vadd.f32 %v1824, %v1984
      %v1986 = vpop.f32.mrb[0].mxu0
      %1987 = vmatprep.mubr.bf16.mxu0 %v804
      %1988 = vmatmul.mubr.bf16.gmra.mrb[0].mxu0 %v756
      %v1989 = vpop.f32.mrb[0].mxu0
      %v1990 = vadd.f32 %v1829, %v1989
      %v1991 = vpop.f32.mrb[0].mxu0
      %v1992 = vpop.f32.mrb[0].mxu0
      %v1993 = vadd.f32 %v1832, %v1992
      %v1994 = vpop.f32.mrb[0].mxu0
      %1995 = vmatprep.mubr.bf16.mxu0 %v805
      %1996 = vmatmul.mubr.bf16.gmra.mrb[0].mxu0 %v757
      %v1997 = vpop.f32.mrb[0].mxu0
      %v1998 = vadd.f32 %v1837, %v1997
      %v1999 = vpop.f32.mrb[0].mxu0
      %v2000 = vpop.f32.mrb[0].mxu0
      %v2001 = vadd.f32 %v1840, %v2000
      %v2002 = vpop.f32.mrb[0].mxu0
      %2003 = vmatprep.mubr.bf16.mxu0 %v806
      %2004 = vmatmul.mubr.bf16.gmra.mrb[0].mxu0 %v758
      %v2005 = vpop.f32.mrb[0].mxu0
      %v2006 = vadd.f32 %v1845, %v2005
      %v2007 = vpop.f32.mrb[0].mxu0
      %v2008 = vpop.f32.mrb[0].mxu0
      %v2009 = vadd.f32 %v1848, %v2008
      %v2010 = vpop.f32.mrb[0].mxu0
      %2011 = vmatprep.mubr.bf16.mxu0 %v807
      %2012 = vmatmul.mubr.bf16.gmra.mrb[0].mxu0 %v759
      %v2013 = vpop.f32.mrb[0].mxu0
      %v2014 = vadd.f32 %v1853, %v2013
      %v2015 = vpop.f32.mrb[0].mxu0
      %v2016 = vpop.f32.mrb[0].mxu0
      %v2017 = vadd.f32 %v1856, %v2016
      %v2018 = vpop.f32.mrb[0].mxu0
      %2019 = vmatprep.mubr.bf16.mxu0 %v808
      %2020 = vmatmul.mubr.bf16.gmra.mrb[0].mxu0 %v760
      %v2021 = vpop.f32.mrb[0].mxu0
      %v2022 = vadd.f32 %v1861, %v2021
      %v2023 = vpop.f32.mrb[0].mxu0
      %v2024 = vpop.f32.mrb[0].mxu0
      %v2025 = vadd.f32 %v1864, %v2024
      %v2026 = vpop.f32.mrb[0].mxu0
      %2027 = vmatprep.mubr.bf16.mxu0 %v809
      %2028 = vmatmul.mubr.bf16.gmra.mrb[0].mxu0 %v761
      %v2029 = vpop.f32.mrb[0].mxu0
      %v2030 = vadd.f32 %v1869, %v2029
      %v2031 = vpop.f32.mrb[0].mxu0
      %v2032 = vpop.f32.mrb[0].mxu0
      %v2033 = vadd.f32 %v1872, %v2032
      %v2034 = vpop.f32.mrb[0].mxu0
      %2035 = vmatprep.mubr.bf16.mxu0 %v810
      %2036 = vmatmul.mubr.bf16.gmra.mrb[0].mxu0 %v762
      %v2037 = vpop.f32.mrb[0].mxu0
      %v2038 = vadd.f32 %v1877, %v2037
      %v2039 = vpop.f32.mrb[0].mxu0
      %v2040 = vpop.f32.mrb[0].mxu0
      %v2041 = vadd.f32 %v1880, %v2040
      %v2042 = vpop.f32.mrb[0].mxu0
      %2043 = vmatprep.mubr.bf16.mxu0 %v811
      %2044 = vmatmul.mubr.bf16.gmra.mrb[0].mxu0 %v763
      %v2045 = vpop.f32.mrb[0].mxu0
      %v2046 = vadd.f32 %v1885, %v2045
      %v2047 = vpop.f32.mrb[0].mxu0
      %v2048 = vpop.f32.mrb[0].mxu0
      %v2049 = vadd.f32 %v1888, %v2048
      %v2050 = vpop.f32.mrb[0].mxu0
      %2051 = vmatprep.mubr.bf16.mxu0 %v812
      %2052 = vmatmul.mubr.bf16.gmra.mrb[0].mxu0 %v764
      %v2053 = vpop.f32.mrb[0].mxu0
      %v2054 = vadd.f32 %v1893, %v2053
      %v2055 = vpop.f32.mrb[0].mxu0
      %v2056 = vpop.f32.mrb[0].mxu0
      %v2057 = vadd.f32 %v1896, %v2056
      %v2058 = vpop.f32.mrb[0].mxu0
      %2059 = vmatprep.mubr.bf16.mxu0 %v813
      %2060 = vmatmul.mubr.bf16.gmra.mrb[0].mxu0 %v765
      %v2061 = vpop.f32.mrb[0].mxu0
      %v2062 = vadd.f32 %v1901, %v2061
      %v2063 = vpop.f32.mrb[0].mxu0
      %v2064 = vpop.f32.mrb[0].mxu0
      %v2065 = vadd.f32 %v1904, %v2064
      %v2066 = vpop.f32.mrb[0].mxu0
      %2067 = vmatprep.mubr.bf16.mxu0 %v814
      %2068 = vmatmul.mubr.bf16.gmra.mrb[0].mxu0 %v766
      %v2069 = vpop.f32.mrb[0].mxu0
      %v2070 = vadd.f32 %v1909, %v2069
      %v2071 = vpop.f32.mrb[0].mxu0
      %v2072 = vpop.f32.mrb[0].mxu0
      %v2073 = vadd.f32 %v1912, %v2072
      %v2074 = vpop.f32.mrb[0].mxu0
      %2075 = vmatprep.mubr.bf16.mxu0 %v815
      %2076 = vmatmul.mubr.bf16.gmra.mrb[0].mxu0 %v767
      %v2077 = vpop.f32.mrb[0].mxu0
      %v2078 = vadd.f32 %v1917, %v2077
      %v2079 = vpop.f32.mrb[0].mxu0
      %v2080 = vpop.f32.mrb[0].mxu0
      %v2081 = vadd.f32 %v1920, %v2080
      %v2082 = vpop.f32.mrb[0].mxu0
      %2083 = vdwg.mxu0
      %2084 = vmatprep.subr.bf16.mxu0 0
      %2085 = vmatpush1.bf16.msra.mxu0 %v1360
      %2086 = vmatprep.subr.bf16.mxu0 0
      %2087 = vmatpush1.bf16.msra.mxu0 %v1361
      %2088 = vmatprep.subr.bf16.mxu0 0
      %2089 = vmatpush1.bf16.msra.mxu0 %v1362
      %2090 = vmatprep.subr.bf16.mxu0 0
      %2091 = vmatpush1.bf16.msra.mxu0 %v1363
      %2092 = vmatprep.subr.bf16.mxu0 0
      %2093 = vmatpush1.bf16.msra.mxu0 %v1364
      %2094 = vmatprep.subr.bf16.mxu0 0
      %2095 = vmatpush1.bf16.msra.mxu0 %v1365
      %2096 = vmatprep.subr.bf16.mxu0 0
      %2097 = vmatpush1.bf16.msra.mxu0 %v1366
      %2098 = vmatprep.subr.bf16.mxu0 0
      %2099 = vmatpush1.bf16.msra.mxu0 %v1367
      %2100 = vmatprep.subr.bf16.mxu0 0
      %2101 = vmatpush1.bf16.msra.mxu0 0
      %2102 = vmatprep.subr.bf16.mxu0 0
      %2103 = vmatpush1.bf16.msra.mxu0 0
      %2104 = vmatprep.subr.bf16.mxu0 0
      %2105 = vmatpush1.bf16.msra.mxu0 0
      %2106 = vmatprep.subr.bf16.mxu0 0
      %2107 = vmatpush1.bf16.msra.mxu0 0
      %2108 = vmatprep.subr.bf16.mxu0 0
      %2109 = vmatpush1.bf16.msra.mxu0 0
      %2110 = vmatprep.subr.bf16.mxu0 0
      %2111 = vmatpush1.bf16.msra.mxu0 0
      %2112 = vmatprep.subr.bf16.mxu0 0
      %2113 = vmatpush1.bf16.msra.mxu0 0
      %2114 = vmatprep.subr.bf16.mxu0 0
      %2115 = vmatpush1.bf16.msra.mxu0 0
      %2116 = vmatprep.mubr.bf16.mxu0 0
      %2117 = vmatmul.mubr.bf16.gmra.mrb[0].mxu0 %v848
      %v2118 = vpop.f32.mrb[0].mxu0
      %v2119 = vadd.f32 %v1958, %v2118
      %v2120 = vpop.f32.mrb[0].mxu0
      %v2121 = vpop.f32.mrb[0].mxu0
      %v2122 = vadd.f32 %v1961, %v2121
      %v2123 = vpop.f32.mrb[0].mxu0
      %2124 = vmatprep.mubr.bf16.mxu0 0
      %2125 = vmatmul.mubr.bf16.gmra.mrb[0].mxu0 %v849
      %v2126 = vpop.f32.mrb[0].mxu0
      %v2127 = vadd.f32 %v1966, %v2126
      %v2128 = vpop.f32.mrb[0].mxu0
      %v2129 = vpop.f32.mrb[0].mxu0
      %v2130 = vadd.f32 %v1969, %v2129
      %v2131 = vpop.f32.mrb[0].mxu0
      %2132 = vmatprep.mubr.bf16.mxu0 0
      %2133 = vmatmul.mubr.bf16.gmra.mrb[0].mxu0 %v850
      %v2134 = vpop.f32.mrb[0].mxu0
      %v2135 = vadd.f32 %v1974, %v2134
      %v2136 = vpop.f32.mrb[0].mxu0
      %v2137 = vpop.f32.mrb[0].mxu0
      %v2138 = vadd.f32 %v1977, %v2137
      %v2139 = vpop.f32.mrb[0].mxu0
      %2140 = vmatprep.mubr.bf16.mxu0 0
      %2141 = vmatmul.mubr.bf16.gmra.mrb[0].mxu0 %v851
      %v2142 = vpop.f32.mrb[0].mxu0
      %v2143 = vadd.f32 %v1982, %v2142
      %v2144 = vpop.f32.mrb[0].mxu0
      %v2145 = vpop.f32.mrb[0].mxu0
      %v2146 = vadd.f32 %v1985, %v2145
      %v2147 = vpop.f32.mrb[0].mxu0
      %2148 = vmatprep.mubr.bf16.mxu0 0
      %2149 = vmatmul.mubr.bf16.gmra.mrb[0].mxu0 %v852
      %v2150 = vpop.f32.mrb[0].mxu0
      %v2151 = vadd.f32 %v1990, %v2150
      %v2152 = vpop.f32.mrb[0].mxu0
      %v2153 = vpop.f32.mrb[0].mxu0
      %v2154 = vadd.f32 %v1993, %v2153
      %v2155 = vpop.f32.mrb[0].mxu0
      %2156 = vmatprep.mubr.bf16.mxu0 0
      %2157 = vmatmul.mubr.bf16.gmra.mrb[0].mxu0 %v853
      %v2158 = vpop.f32.mrb[0].mxu0
      %v2159 = vadd.f32 %v1998, %v2158
      %v2160 = vpop.f32.mrb[0].mxu0
      %v2161 = vpop.f32.mrb[0].mxu0
      %v2162 = vadd.f32 %v2001, %v2161
      %v2163 = vpop.f32.mrb[0].mxu0
      %2164 = vmatprep.mubr.bf16.mxu0 0
      %2165 = vmatmul.mubr.bf16.gmra.mrb[0].mxu0 %v854
      %v2166 = vpop.f32.mrb[0].mxu0
      %v2167 = vadd.f32 %v2006, %v2166
      %v2168 = vpop.f32.mrb[0].mxu0
      %v2169 = vpop.f32.mrb[0].mxu0
      %v2170 = vadd.f32 %v2009, %v2169
      %v2171 = vpop.f32.mrb[0].mxu0
      %2172 = vmatprep.mubr.bf16.mxu0 0
      %2173 = vmatmul.mubr.bf16.gmra.mrb[0].mxu0 %v855
      %v2174 = vpop.f32.mrb[0].mxu0
      %v2175 = vadd.f32 %v2014, %v2174
      %v2176 = vpop.f32.mrb[0].mxu0
      %v2177 = vpop.f32.mrb[0].mxu0
      %v2178 = vadd.f32 %v2017, %v2177
      %v2179 = vpop.f32.mrb[0].mxu0
      %2180 = vmatprep.mubr.bf16.mxu0 0
      %2181 = vmatmul.mubr.bf16.gmra.mrb[0].mxu0 %v856
      %v2182 = vpop.f32.mrb[0].mxu0
      %v2183 = vadd.f32 %v2022, %v2182
      %v2184 = vpop.f32.mrb[0].mxu0
      %v2185 = vpop.f32.mrb[0].mxu0
      %v2186 = vadd.f32 %v2025, %v2185
      %v2187 = vpop.f32.mrb[0].mxu0
      %2188 = vmatprep.mubr.bf16.mxu0 0
      %2189 = vmatmul.mubr.bf16.gmra.mrb[0].mxu0 %v857
      %v2190 = vpop.f32.mrb[0].mxu0
      %v2191 = vadd.f32 %v2030, %v2190
      %v2192 = vpop.f32.mrb[0].mxu0
      %v2193 = vpop.f32.mrb[0].mxu0
      %v2194 = vadd.f32 %v2033, %v2193
      %v2195 = vpop.f32.mrb[0].mxu0
      %2196 = vmatprep.mubr.bf16.mxu0 0
      %2197 = vmatmul.mubr.bf16.gmra.mrb[0].mxu0 %v858
      %v2198 = vpop.f32.mrb[0].mxu0
      %v2199 = vadd.f32 %v2038, %v2198
      %v2200 = vpop.f32.mrb[0].mxu0
      %v2201 = vpop.f32.mrb[0].mxu0
      %v2202 = vadd.f32 %v2041, %v2201
      %v2203 = vpop.f32.mrb[0].mxu0
      %2204 = vmatprep.mubr.bf16.mxu0 0
      %2205 = vmatmul.mubr.bf16.gmra.mrb[0].mxu0 %v859
      %v2206 = vpop.f32.mrb[0].mxu0
      %v2207 = vadd.f32 %v2046, %v2206
      %v2208 = vpop.f32.mrb[0].mxu0
      %v2209 = vpop.f32.mrb[0].mxu0
      %v2210 = vadd.f32 %v2049, %v2209
      %v2211 = vpop.f32.mrb[0].mxu0
      %2212 = vmatprep.mubr.bf16.mxu0 0
      %2213 = vmatmul.mubr.bf16.gmra.mrb[0].mxu0 %v860
      %v2214 = vpop.f32.mrb[0].mxu0
      %v2215 = vadd.f32 %v2054, %v2214
      %v2216 = vpop.f32.mrb[0].mxu0
      %v2217 = vpop.f32.mrb[0].mxu0
      %v2218 = vadd.f32 %v2057, %v2217
      %v2219 = vpop.f32.mrb[0].mxu0
      %2220 = vmatprep.mubr.bf16.mxu0 0
      %2221 = vmatmul.mubr.bf16.gmra.mrb[0].mxu0 %v861
      %v2222 = vpop.f32.mrb[0].mxu0
      %v2223 = vadd.f32 %v2062, %v2222
      %v2224 = vpop.f32.mrb[0].mxu0
      %v2225 = vpop.f32.mrb[0].mxu0
      %v2226 = vadd.f32 %v2065, %v2225
      %v2227 = vpop.f32.mrb[0].mxu0
      %2228 = vmatprep.mubr.bf16.mxu0 0
      %2229 = vmatmul.mubr.bf16.gmra.mrb[0].mxu0 %v862
      %v2230 = vpop.f32.mrb[0].mxu0
      %v2231 = vadd.f32 %v2070, %v2230
      %v2232 = vpop.f32.mrb[0].mxu0
      %v2233 = vpop.f32.mrb[0].mxu0
      %v2234 = vadd.f32 %v2073, %v2233
      %v2235 = vpop.f32.mrb[0].mxu0
      %2236 = vmatprep.mubr.bf16.mxu0 0
      %2237 = vmatmul.mubr.bf16.gmra.mrb[0].mxu0 %v863
      %v2238 = vpop.f32.mrb[0].mxu0
      %v2239 = vadd.f32 %v2078, %v2238
      %v2240 = vpop.f32.mrb[0].mxu0
      %v2241 = vpop.f32.mrb[0].mxu0
      %v2242 = vadd.f32 %v2081, %v2241
      %v2243 = vpop.f32.mrb[0].mxu0
      %2244 = vdwg.mxu0
      %v2245 = vld [vmem:[%s3] sm:$0x1]
      %v2247 = vlaneseq
      %v2248 = vshrl.u32 %v2247, 7
      %v2249 = vsub.s32 0, %v2248
      %v2250 = vrot.slane %v2245, %v2249
      %v2252 = vmul.f32 %v2119, %v2250
      %v2253 = vmul.f32 %v2122, %v2250
      %v2254 = vmul.f32 %v2127, %v2250
      %v2255 = vmul.f32 %v2130, %v2250
      %v2256 = vmul.f32 %v2135, %v2250
      %v2257 = vmul.f32 %v2138, %v2250
      %v2258 = vmul.f32 %v2143, %v2250
      %v2259 = vmul.f32 %v2146, %v2250
      %v2260 = vmul.f32 %v2151, %v2250
      %v2261 = vmul.f32 %v2154, %v2250
      %v2262 = vmul.f32 %v2159, %v2250
      %v2263 = vmul.f32 %v2162, %v2250
      %v2264 = vmul.f32 %v2167, %v2250
      %v2265 = vmul.f32 %v2170, %v2250
      %v2266 = vmul.f32 %v2175, %v2250
      %v2267 = vmul.f32 %v2178, %v2250
      %v2268 = vmul.f32 %v2183, %v2250
      %v2269 = vmul.f32 %v2186, %v2250
      %v2270 = vmul.f32 %v2191, %v2250
      %v2271 = vmul.f32 %v2194, %v2250
      %v2272 = vmul.f32 %v2199, %v2250
      %v2273 = vmul.f32 %v2202, %v2250
      %v2274 = vmul.f32 %v2207, %v2250
      %v2275 = vmul.f32 %v2210, %v2250
      %v2276 = vmul.f32 %v2215, %v2250
      %v2277 = vmul.f32 %v2218, %v2250
      %v2278 = vmul.f32 %v2223, %v2250
      %v2279 = vmul.f32 %v2226, %v2250
      %v2280 = vmul.f32 %v2231, %v2250
      %v2281 = vmul.f32 %v2234, %v2250
      %v2282 = vmul.f32 %v2239, %v2250
      %v2283 = vmul.f32 %v2242, %v2250
      %v2284 = vld [vmem:[%s4] sm:$0x1]
      %v2286 = vlaneseq
      %v2287 = vshrl.u32 %v2286, 7
      %v2288 = vsub.s32 0, %v2287
      %v2289 = vrot.slane %v2284, %v2288
      %v2291 = vadd.f32 %v2252, %v2289
      %v2292 = vadd.f32 %v2253, %v2289
      %v2293 = vadd.f32 %v2254, %v2289
      %v2294 = vadd.f32 %v2255, %v2289
      %v2295 = vadd.f32 %v2256, %v2289
      %v2296 = vadd.f32 %v2257, %v2289
      %v2297 = vadd.f32 %v2258, %v2289
      %v2298 = vadd.f32 %v2259, %v2289
      %v2299 = vadd.f32 %v2260, %v2289
      %v2300 = vadd.f32 %v2261, %v2289
      %v2301 = vadd.f32 %v2262, %v2289
      %v2302 = vadd.f32 %v2263, %v2289
      %v2303 = vadd.f32 %v2264, %v2289
      %v2304 = vadd.f32 %v2265, %v2289
      %v2305 = vadd.f32 %v2266, %v2289
      %v2306 = vadd.f32 %v2267, %v2289
      %v2307 = vadd.f32 %v2268, %v2289
      %v2308 = vadd.f32 %v2269, %v2289
      %v2309 = vadd.f32 %v2270, %v2289
      %v2310 = vadd.f32 %v2271, %v2289
      %v2311 = vadd.f32 %v2272, %v2289
      %v2312 = vadd.f32 %v2273, %v2289
      %v2313 = vadd.f32 %v2274, %v2289
      %v2314 = vadd.f32 %v2275, %v2289
      %v2315 = vadd.f32 %v2276, %v2289
      %v2316 = vadd.f32 %v2277, %v2289
      %v2317 = vadd.f32 %v2278, %v2289
      %v2318 = vadd.f32 %v2279, %v2289
      %v2319 = vadd.f32 %v2280, %v2289
      %v2320 = vadd.f32 %v2281, %v2289
      %v2321 = vadd.f32 %v2282, %v2289
      %v2322 = vadd.f32 %v2283, %v2289
      %v2323 = vmax.f32 %v2291, 0.0
      %v2324 = vmax.f32 %v2292, 0.0
      %v2325 = vmax.f32 %v2293, 0.0
      %v2326 = vmax.f32 %v2294, 0.0
      %v2327 = vmax.f32 %v2295, 0.0
      %v2328 = vmax.f32 %v2296, 0.0
      %v2329 = vmax.f32 %v2297, 0.0
      %v2330 = vmax.f32 %v2298, 0.0
      %v2331 = vmax.f32 %v2299, 0.0
      %v2332 = vmax.f32 %v2300, 0.0
      %v2333 = vmax.f32 %v2301, 0.0
      %v2334 = vmax.f32 %v2302, 0.0
      %v2335 = vmax.f32 %v2303, 0.0
      %v2336 = vmax.f32 %v2304, 0.0
      %v2337 = vmax.f32 %v2305, 0.0
      %v2338 = vmax.f32 %v2306, 0.0
      %v2339 = vmax.f32 %v2307, 0.0
      %v2340 = vmax.f32 %v2308, 0.0
      %v2341 = vmax.f32 %v2309, 0.0
      %v2342 = vmax.f32 %v2310, 0.0
      %v2343 = vmax.f32 %v2311, 0.0
      %v2344 = vmax.f32 %v2312, 0.0
      %v2345 = vmax.f32 %v2313, 0.0
      %v2346 = vmax.f32 %v2314, 0.0
      %v2347 = vmax.f32 %v2315, 0.0
      %v2348 = vmax.f32 %v2316, 0.0
      %v2349 = vmax.f32 %v2317, 0.0
      %v2350 = vmax.f32 %v2318, 0.0
      %v2351 = vmax.f32 %v2319, 0.0
      %v2352 = vmax.f32 %v2320, 0.0
      %v2353 = vmax.f32 %v2321, 0.0
      %v2354 = vmax.f32 %v2322, 0.0
      %2355 = vst [vmem:[#allocation3] sm:$0xff] 0.0
      %2356 = vst [vmem:[#allocation3 + $0x8] sm:$0xff] 0.0
      %2357 = vst [vmem:[#allocation3 + $0x10] sm:$0x3] 0.0
      %2358 = vst [vmem:[#allocation3 + $0x18] sm:$0xff] 0.0
      %2359 = vst [vmem:[#allocation3 + $0x20] sm:$0xff] 0.0
      %2360 = vst [vmem:[#allocation3 + $0x28] sm:$0x3] 0.0
      %2361 = vst [vmem:[#allocation3 + $0x30] sm:$0xff] 0.0
      %2362 = vst [vmem:[#allocation3 + $0x38] sm:$0xff] 0.0
      %2363 = vst [vmem:[#allocation3 + $0x40] sm:$0x3] 0.0
      %2364 = vst [vmem:[#allocation3 + $0x48] sm:$0xff] 0.0
      %2365 = vst [vmem:[#allocation3 + $0x50] sm:$0xff] 0.0
      %2366 = vst [vmem:[#allocation3 + $0x58] sm:$0x3] 0.0
      %2367 = vst [vmem:[#allocation3 + $0x60] sm:$0xff] 0.0
      %2368 = vst [vmem:[#allocation3 + $0x68] sm:$0xff] 0.0
      %2369 = vst [vmem:[#allocation3 + $0x70] sm:$0x3] 0.0
      %2370 = vst [vmem:[#allocation3 + $0x78] sm:$0xff] 0.0
      %2371 = vst [vmem:[#allocation3 + $0x80] sm:$0xff] 0.0
      %2372 = vst [vmem:[#allocation3 + $0x88] sm:$0x3] 0.0
      %2373 = vst [vmem:[#allocation3 + $0x90] sm:$0xff] 0.0
      %2374 = vst [vmem:[#allocation3 + $0x98] sm:$0xff] 0.0
      %2375 = vst [vmem:[#allocation3 + $0xa0] sm:$0x3] 0.0
      %2376 = vst [vmem:[#allocation3 + $0xa8] sm:$0xff] 0.0
      %2377 = vst [vmem:[#allocation3 + $0xb0] sm:$0xff] 0.0
      %2378 = vst [vmem:[#allocation3 + $0xb8] sm:$0x3] 0.0
      %2379 = vst [vmem:[#allocation3 + $0xc0] sm:$0xff] 0.0
      %2380 = vst [vmem:[#allocation3 + $0xc8] sm:$0xff] 0.0
      %2381 = vst [vmem:[#allocation3 + $0xd0] sm:$0x3] 0.0
      %2382 = vst [vmem:[#allocation3 + $0xd8] sm:$0xff] 0.0
      %2383 = vst [vmem:[#allocation3 + $0xe0] sm:$0xff] 0.0
      %2384 = vst [vmem:[#allocation3 + $0xe8] sm:$0x3] 0.0
      %2385 = vst [vmem:[#allocation3 + $0xf0] sm:$0xff] 0.0
      %2386 = vst [vmem:[#allocation3 + $0xf8] sm:$0xff] 0.0
      %2387 = vst [vmem:[#allocation3 + $0x100] sm:$0x3] 0.0
      %2388 = vst [vmem:[#allocation3 + $0x108] sm:$0xff] 0.0
      %2389 = vst [vmem:[#allocation3 + $0x110] sm:$0xff] 0.0
      %2390 = vst [vmem:[#allocation3 + $0x118] sm:$0x3] 0.0
      %2391 = vst [vmem:[#allocation3 + $0x120] sm:$0xff] 0.0
      %2392 = vst [vmem:[#allocation3 + $0x128] sm:$0xff] 0.0
      %2393 = vst [vmem:[#allocation3 + $0x130] sm:$0x3] 0.0
      %2394 = vst [vmem:[#allocation3 + $0x138] sm:$0xff] 0.0
      %2395 = vst [vmem:[#allocation3 + $0x140] sm:$0xff] 0.0
      %2396 = vst [vmem:[#allocation3 + $0x148] sm:$0x3] 0.0
      %2397 = vst [vmem:[#allocation3 + $0x150] sm:$0xff] 0.0
      %2398 = vst [vmem:[#allocation3 + $0x158] sm:$0xff] 0.0
      %2399 = vst [vmem:[#allocation3 + $0x160] sm:$0x3] 0.0
      %2400 = vst [vmem:[#allocation3 + $0x168] sm:$0xff] 0.0
      %2401 = vst [vmem:[#allocation3 + $0x170] sm:$0xff] 0.0
      %2402 = vst [vmem:[#allocation3 + $0x178] sm:$0x3] 0.0
      %2403 = vst [vmem:[#allocation3 + $0x180] sm:$0xff] 0.0
      %2404 = vst [vmem:[#allocation3 + $0x188] sm:$0xff] 0.0
      %2405 = vst [vmem:[#allocation3 + $0x190] sm:$0x3] 0.0
      %2406 = vst [vmem:[#allocation3 + $0x198] sm:$0xff] 0.0
      %2407 = vst [vmem:[#allocation3 + $0x1a0] sm:$0xff] 0.0
      %2408 = vst [vmem:[#allocation3 + $0x1a8] sm:$0x3] 0.0
      %s2409 = scalar_lea.vmem [#allocation3], 24
      %2410 = vst [vmem:[%s2409 + $0x1] sm:$0xff] %v2323
      %2411 = vst [vmem:[%s2409 + $0x9] sm:$0xff] %v2324
      %2412 = vst [vmem:[%s2409 + $0x19] sm:$0xff] %v2325
      %2413 = vst [vmem:[%s2409 + $0x21] sm:$0xff] %v2326
      %2414 = vst [vmem:[%s2409 + $0x31] sm:$0xff] %v2327
      %2415 = vst [vmem:[%s2409 + $0x39] sm:$0xff] %v2328
      %2416 = vst [vmem:[%s2409 + $0x49] sm:$0xff] %v2329
      %2417 = vst [vmem:[%s2409 + $0x51] sm:$0xff] %v2330
      %2418 = vst [vmem:[%s2409 + $0x61] sm:$0xff] %v2331
      %2419 = vst [vmem:[%s2409 + $0x69] sm:$0xff] %v2332
      %2420 = vst [vmem:[%s2409 + $0x79] sm:$0xff] %v2333
      %2421 = vst [vmem:[%s2409 + $0x81] sm:$0xff] %v2334
      %2422 = vst [vmem:[%s2409 + $0x91] sm:$0xff] %v2335
      %2423 = vst [vmem:[%s2409 + $0x99] sm:$0xff] %v2336
      %2424 = vst [vmem:[%s2409 + $0xa9] sm:$0xff] %v2337
      %2425 = vst [vmem:[%s2409 + $0xb1] sm:$0xff] %v2338
      %2426 = vst [vmem:[%s2409 + $0xc1] sm:$0xff] %v2339
      %2427 = vst [vmem:[%s2409 + $0xc9] sm:$0xff] %v2340
      %2428 = vst [vmem:[%s2409 + $0xd9] sm:$0xff] %v2341
      %2429 = vst [vmem:[%s2409 + $0xe1] sm:$0xff] %v2342
      %2430 = vst [vmem:[%s2409 + $0xf1] sm:$0xff] %v2343
      %2431 = vst [vmem:[%s2409 + $0xf9] sm:$0xff] %v2344
      %2432 = vst [vmem:[%s2409 + $0x109] sm:$0xff] %v2345
      %2433 = vst [vmem:[%s2409 + $0x111] sm:$0xff] %v2346
      %2434 = vst [vmem:[%s2409 + $0x121] sm:$0xff] %v2347
      %2435 = vst [vmem:[%s2409 + $0x129] sm:$0xff] %v2348
      %2436 = vst [vmem:[%s2409 + $0x139] sm:$0xff] %v2349
      %2437 = vst [vmem:[%s2409 + $0x141] sm:$0xff] %v2350
      %2438 = vst [vmem:[%s2409 + $0x151] sm:$0xff] %v2351
      %2439 = vst [vmem:[%s2409 + $0x159] sm:$0xff] %v2352
      %2440 = vst [vmem:[%s2409 + $0x169] sm:$0xff] %v2353
      %2441 = vst [vmem:[%s2409 + $0x171] sm:$0xff] %v2354
      %v2442 = vld [vmem:[#allocation3] sm:$0xff]
      %v2443 = vld [vmem:[#allocation3 + $0x8] sm:$0xff]
      %v2444 = vld [vmem:[#allocation3 + $0x18] sm:$0xff]
      %v2445 = vld [vmem:[#allocation3 + $0x20] sm:$0xff]
      %v2446 = vld [vmem:[#allocation3 + $0x30] sm:$0xff]
      %v2447 = vld [vmem:[#allocation3 + $0x38] sm:$0xff]
      %v2448 = vld [vmem:[#allocation3 + $0x48] sm:$0xff]
      %v2449 = vld [vmem:[#allocation3 + $0x50] sm:$0xff]
      %v2450 = vld [vmem:[#allocation3 + $0x60] sm:$0xff]
      %v2451 = vld [vmem:[#allocation3 + $0x68] sm:$0xff]
      %v2452 = vld [vmem:[#allocation3 + $0x78] sm:$0xff]
      %v2453 = vld [vmem:[#allocation3 + $0x80] sm:$0xff]
      %v2454 = vld [vmem:[#allocation3 + $0x90] sm:$0xff]
      %v2455 = vld [vmem:[#allocation3 + $0x98] sm:$0xff]
      %v2456 = vld [vmem:[#allocation3 + $0xa8] sm:$0xff]
      %v2457 = vld [vmem:[#allocation3 + $0xb0] sm:$0xff]
      %v2458 = vld [vmem:[#allocation3 + $0xc0] sm:$0xff]
      %v2459 = vld [vmem:[#allocation3 + $0xc8] sm:$0xff]
      %v2460 = vld [vmem:[#allocation3 + $0xd8] sm:$0xff]
      %v2461 = vld [vmem:[#allocation3 + $0xe0] sm:$0xff]
      %v2462 = vld [vmem:[#allocation3 + $0xf0] sm:$0xff]
      %v2463 = vld [vmem:[#allocation3 + $0xf8] sm:$0xff]
      %v2464 = vld [vmem:[#allocation3 + $0x108] sm:$0xff]
      %v2465 = vld [vmem:[#allocation3 + $0x110] sm:$0xff]
      %v2466 = vld [vmem:[#allocation3 + $0x120] sm:$0xff]
      %v2467 = vld [vmem:[#allocation3 + $0x128] sm:$0xff]
      %v2468 = vld [vmem:[#allocation3 + $0x138] sm:$0xff]
      %v2469 = vld [vmem:[#allocation3 + $0x140] sm:$0xff]
      %v2470 = vld [vmem:[#allocation3 + $0x150] sm:$0xff]
      %v2471 = vld [vmem:[#allocation3 + $0x158] sm:$0xff]
      %v2472 = vld [vmem:[#allocation3 + $0x168] sm:$0xff]
      %v2473 = vld [vmem:[#allocation3 + $0x170] sm:$0xff]
      %v2474 = vpack.c.bf16 %v2443, %v2442
      %v2475 = vpack.c.bf16 %v2445, %v2444
      %v2476 = vpack.c.bf16 %v2447, %v2446
      %v2477 = vpack.c.bf16 %v2449, %v2448
      %v2478 = vpack.c.bf16 %v2451, %v2450
      %v2479 = vpack.c.bf16 %v2453, %v2452
      %v2480 = vpack.c.bf16 %v2455, %v2454
      %v2481 = vpack.c.bf16 %v2457, %v2456
      %v2482 = vpack.c.bf16 %v2459, %v2458
      %v2483 = vpack.c.bf16 %v2461, %v2460
      %v2484 = vpack.c.bf16 %v2463, %v2462
      %v2485 = vpack.c.bf16 %v2465, %v2464
      %v2486 = vpack.c.bf16 %v2467, %v2466
      %v2487 = vpack.c.bf16 %v2469, %v2468
      %v2488 = vpack.c.bf16 %v2471, %v2470
      %v2489 = vpack.c.bf16 %v2473, %v2472
      %v2490 = vld [vmem:[#allocation3 + $0x1] sm:$0xff]
      %v2491 = vld [vmem:[#allocation3 + $0x9] sm:$0xff]
      %v2492 = vld [vmem:[#allocation3 + $0x19] sm:$0xff]
      %v2493 = vld [vmem:[#allocation3 + $0x21] sm:$0xff]
      %v2494 = vld [vmem:[#allocation3 + $0x31] sm:$0xff]
      %v2495 = vld [vmem:[#allocation3 + $0x39] sm:$0xff]
      %v2496 = vld [vmem:[#allocation3 + $0x49] sm:$0xff]
      %v2497 = vld [vmem:[#allocation3 + $0x51] sm:$0xff]
      %v2498 = vld [vmem:[#allocation3 + $0x61] sm:$0xff]
      %v2499 = vld [vmem:[#allocation3 + $0x69] sm:$0xff]
      %v2500 = vld [vmem:[#allocation3 + $0x79] sm:$0xff]
      %v2501 = vld [vmem:[#allocation3 + $0x81] sm:$0xff]
      %v2502 = vld [vmem:[#allocation3 + $0x91] sm:$0xff]
      %v2503 = vld [vmem:[#allocation3 + $0x99] sm:$0xff]
      %v2504 = vld [vmem:[#allocation3 + $0xa9] sm:$0xff]
      %v2505 = vld [vmem:[#allocation3 + $0xb1] sm:$0xff]
      %v2506 = vld [vmem:[#allocation3 + $0xc1] sm:$0xff]
      %v2507 = vld [vmem:[#allocation3 + $0xc9] sm:$0xff]
      %v2508 = vld [vmem:[#allocation3 + $0xd9] sm:$0xff]
      %v2509 = vld [vmem:[#allocation3 + $0xe1] sm:$0xff]
      %v2510 = vld [vmem:[#allocation3 + $0xf1] sm:$0xff]
      %v2511 = vld [vmem:[#allocation3 + $0xf9] sm:$0xff]
      %v2512 = vld [vmem:[#allocation3 + $0x109] sm:$0xff]
      %v2513 = vld [vmem:[#allocation3 + $0x111] sm:$0xff]
      %v2514 = vld [vmem:[#allocation3 + $0x121] sm:$0xff]
      %v2515 = vld [vmem:[#allocation3 + $0x129] sm:$0xff]
      %v2516 = vld [vmem:[#allocation3 + $0x139] sm:$0xff]
      %v2517 = vld [vmem:[#allocation3 + $0x141] sm:$0xff]
      %v2518 = vld [vmem:[#allocation3 + $0x151] sm:$0xff]
      %v2519 = vld [vmem:[#allocation3 + $0x159] sm:$0xff]
      %v2520 = vld [vmem:[#allocation3 + $0x169] sm:$0xff]
      %v2521 = vld [vmem:[#allocation3 + $0x171] sm:$0xff]
      %v2522 = vpack.c.bf16 %v2491, %v2490
      %v2523 = vpack.c.bf16 %v2493, %v2492
      %v2524 = vpack.c.bf16 %v2495, %v2494
      %v2525 = vpack.c.bf16 %v2497, %v2496
      %v2526 = vpack.c.bf16 %v2499, %v2498
      %v2527 = vpack.c.bf16 %v2501, %v2500
      %v2528 = vpack.c.bf16 %v2503, %v2502
      %v2529 = vpack.c.bf16 %v2505, %v2504
      %v2530 = vpack.c.bf16 %v2507, %v2506
      %v2531 = vpack.c.bf16 %v2509, %v2508
      %v2532 = vpack.c.bf16 %v2511, %v2510
      %v2533 = vpack.c.bf16 %v2513, %v2512
      %v2534 = vpack.c.bf16 %v2515, %v2514
      %v2535 = vpack.c.bf16 %v2517, %v2516
      %v2536 = vpack.c.bf16 %v2519, %v2518
      %v2537 = vpack.c.bf16 %v2521, %v2520
      %v2538 = vld [vmem:[#allocation3 + $0x2] sm:$0xff]
      %v2539 = vld [vmem:[#allocation3 + $0xa] sm:$0xff]
      %v2540 = vld [vmem:[#allocation3 + $0x1a] sm:$0xff]
      %v2541 = vld [vmem:[#allocation3 + $0x22] sm:$0xff]
      %v2542 = vld [vmem:[#allocation3 + $0x32] sm:$0xff]
      %v2543 = vld [vmem:[#allocation3 + $0x3a] sm:$0xff]
      %v2544 = vld [vmem:[#allocation3 + $0x4a] sm:$0xff]
      %v2545 = vld [vmem:[#allocation3 + $0x52] sm:$0xff]
      %v2546 = vld [vmem:[#allocation3 + $0x62] sm:$0xff]
      %v2547 = vld [vmem:[#allocation3 + $0x6a] sm:$0xff]
      %v2548 = vld [vmem:[#allocation3 + $0x7a] sm:$0xff]
      %v2549 = vld [vmem:[#allocation3 + $0x82] sm:$0xff]
      %v2550 = vld [vmem:[#allocation3 + $0x92] sm:$0xff]
      %v2551 = vld [vmem:[#allocation3 + $0x9a] sm:$0xff]
      %v2552 = vld [vmem:[#allocation3 + $0xaa] sm:$0xff]
      %v2553 = vld [vmem:[#allocation3 + $0xb2] sm:$0xff]
      %v2554 = vld [vmem:[#allocation3 + $0xc2] sm:$0xff]
      %v2555 = vld [vmem:[#allocation3 + $0xca] sm:$0xff]
      %v2556 = vld [vmem:[#allocation3 + $0xda] sm:$0xff]
      %v2557 = vld [vmem:[#allocation3 + $0xe2] sm:$0xff]
      %v2558 = vld [vmem:[#allocation3 + $0xf2] sm:$0xff]
      %v2559 = vld [vmem:[#allocation3 + $0xfa] sm:$0xff]
      %v2560 = vld [vmem:[#allocation3 + $0x10a] sm:$0xff]
      %v2561 = vld [vmem:[#allocation3 + $0x112] sm:$0xff]
      %v2562 = vld [vmem:[#allocation3 + $0x122] sm:$0xff]
      %v2563 = vld [vmem:[#allocation3 + $0x12a] sm:$0xff]
      %v2564 = vld [vmem:[#allocation3 + $0x13a] sm:$0xff]
      %v2565 = vld [vmem:[#allocation3 + $0x142] sm:$0xff]
      %v2566 = vld [vmem:[#allocation3 + $0x152] sm:$0xff]
      %v2567 = vld [vmem:[#allocation3 + $0x15a] sm:$0xff]
      %v2568 = vld [vmem:[#allocation3 + $0x16a] sm:$0xff]
      %v2569 = vld [vmem:[#allocation3 + $0x172] sm:$0xff]
      %v2570 = vpack.c.bf16 %v2539, %v2538
      %v2571 = vpack.c.bf16 %v2541, %v2540
      %v2572 = vpack.c.bf16 %v2543, %v2542
      %v2573 = vpack.c.bf16 %v2545, %v2544
      %v2574 = vpack.c.bf16 %v2547, %v2546
      %v2575 = vpack.c.bf16 %v2549, %v2548
      %v2576 = vpack.c.bf16 %v2551, %v2550
      %v2577 = vpack.c.bf16 %v2553, %v2552
      %v2578 = vpack.c.bf16 %v2555, %v2554
      %v2579 = vpack.c.bf16 %v2557, %v2556
      %v2580 = vpack.c.bf16 %v2559, %v2558
      %v2581 = vpack.c.bf16 %v2561, %v2560
      %v2582 = vpack.c.bf16 %v2563, %v2562
      %v2583 = vpack.c.bf16 %v2565, %v2564
      %v2584 = vpack.c.bf16 %v2567, %v2566
      %v2585 = vpack.c.bf16 %v2569, %v2568
      %v2586 = vld [vmem:[%s2409] sm:$0xff]
      %v2587 = vld [vmem:[%s2409 + $0x8] sm:$0xff]
      %v2588 = vld [vmem:[%s2409 + $0x18] sm:$0xff]
      %v2589 = vld [vmem:[%s2409 + $0x20] sm:$0xff]
      %v2590 = vld [vmem:[%s2409 + $0x30] sm:$0xff]
      %v2591 = vld [vmem:[%s2409 + $0x38] sm:$0xff]
      %v2592 = vld [vmem:[%s2409 + $0x48] sm:$0xff]
      %v2593 = vld [vmem:[%s2409 + $0x50] sm:$0xff]
      %v2594 = vld [vmem:[%s2409 + $0x60] sm:$0xff]
      %v2595 = vld [vmem:[%s2409 + $0x68] sm:$0xff]
      %v2596 = vld [vmem:[%s2409 + $0x78] sm:$0xff]
      %v2597 = vld [vmem:[%s2409 + $0x80] sm:$0xff]
      %v2598 = vld [vmem:[%s2409 + $0x90] sm:$0xff]
      %v2599 = vld [vmem:[%s2409 + $0x98] sm:$0xff]
      %v2600 = vld [vmem:[%s2409 + $0xa8] sm:$0xff]
      %v2601 = vld [vmem:[%s2409 + $0xb0] sm:$0xff]
      %v2602 = vld [vmem:[%s2409 + $0xc0] sm:$0xff]
      %v2603 = vld [vmem:[%s2409 + $0xc8] sm:$0xff]
      %v2604 = vld [vmem:[%s2409 + $0xd8] sm:$0xff]
      %v2605 = vld [vmem:[%s2409 + $0xe0] sm:$0xff]
      %v2606 = vld [vmem:[%s2409 + $0xf0] sm:$0xff]
      %v2607 = vld [vmem:[%s2409 + $0xf8] sm:$0xff]
      %v2608 = vld [vmem:[%s2409 + $0x108] sm:$0xff]
      %v2609 = vld [vmem:[%s2409 + $0x110] sm:$0xff]
      %v2610 = vld [vmem:[%s2409 + $0x120] sm:$0xff]
      %v2611 = vld [vmem:[%s2409 + $0x128] sm:$0xff]
      %v2612 = vld [vmem:[%s2409 + $0x138] sm:$0xff]
      %v2613 = vld [vmem:[%s2409 + $0x140] sm:$0xff]
      %v2614 = vld [vmem:[%s2409 + $0x150] sm:$0xff]
      %v2615 = vld [vmem:[%s2409 + $0x158] sm:$0xff]
      %v2616 = vld [vmem:[%s2409 + $0x168] sm:$0xff]
      %v2617 = vld [vmem:[%s2409 + $0x170] sm:$0xff]
      %v2618 = vpack.c.bf16 %v2587, %v2586
      %v2619 = vpack.c.bf16 %v2589, %v2588
      %v2620 = vpack.c.bf16 %v2591, %v2590
      %v2621 = vpack.c.bf16 %v2593, %v2592
      %v2622 = vpack.c.bf16 %v2595, %v2594
      %v2623 = vpack.c.bf16 %v2597, %v2596
      %v2624 = vpack.c.bf16 %v2599, %v2598
      %v2625 = vpack.c.bf16 %v2601, %v2600
      %v2626 = vpack.c.bf16 %v2603, %v2602
      %v2627 = vpack.c.bf16 %v2605, %v2604
      %v2628 = vpack.c.bf16 %v2607, %v2606
      %v2629 = vpack.c.bf16 %v2609, %v2608
      %v2630 = vpack.c.bf16 %v2611, %v2610
      %v2631 = vpack.c.bf16 %v2613, %v2612
      %v2632 = vpack.c.bf16 %v2615, %v2614
      %v2633 = vpack.c.bf16 %v2617, %v2616
      %v2634 = vld [vmem:[%s2409 + $0x1] sm:$0xff]
      %v2635 = vld [vmem:[%s2409 + $0x9] sm:$0xff]
      %v2636 = vld [vmem:[%s2409 + $0x19] sm:$0xff]
      %v2637 = vld [vmem:[%s2409 + $0x21] sm:$0xff]
      %v2638 = vld [vmem:[%s2409 + $0x31] sm:$0xff]
      %v2639 = vld [vmem:[%s2409 + $0x39] sm:$0xff]
      %v2640 = vld [vmem:[%s2409 + $0x49] sm:$0xff]
      %v2641 = vld [vmem:[%s2409 + $0x51] sm:$0xff]
      %v2642 = vld [vmem:[%s2409 + $0x61] sm:$0xff]
      %v2643 = vld [vmem:[%s2409 + $0x69] sm:$0xff]
      %v2644 = vld [vmem:[%s2409 + $0x79] sm:$0xff]
      %v2645 = vld [vmem:[%s2409 + $0x81] sm:$0xff]
      %v2646 = vld [vmem:[%s2409 + $0x91] sm:$0xff]
      %v2647 = vld [vmem:[%s2409 + $0x99] sm:$0xff]
      %v2648 = vld [vmem:[%s2409 + $0xa9] sm:$0xff]
      %v2649 = vld [vmem:[%s2409 + $0xb1] sm:$0xff]
      %v2650 = vld [vmem:[%s2409 + $0xc1] sm:$0xff]
      %v2651 = vld [vmem:[%s2409 + $0xc9] sm:$0xff]
      %v2652 = vld [vmem:[%s2409 + $0xd9] sm:$0xff]
      %v2653 = vld [vmem:[%s2409 + $0xe1] sm:$0xff]
      %v2654 = vld [vmem:[%s2409 + $0xf1] sm:$0xff]
      %v2655 = vld [vmem:[%s2409 + $0xf9] sm:$0xff]
      %v2656 = vld [vmem:[%s2409 + $0x109] sm:$0xff]
      %v2657 = vld [vmem:[%s2409 + $0x111] sm:$0xff]
      %v2658 = vld [vmem:[%s2409 + $0x121] sm:$0xff]
      %v2659 = vld [vmem:[%s2409 + $0x129] sm:$0xff]
      %v2660 = vld [vmem:[%s2409 + $0x139] sm:$0xff]
      %v2661 = vld [vmem:[%s2409 + $0x141] sm:$0xff]
      %v2662 = vld [vmem:[%s2409 + $0x151] sm:$0xff]
      %v2663 = vld [vmem:[%s2409 + $0x159] sm:$0xff]
      %v2664 = vld [vmem:[%s2409 + $0x169] sm:$0xff]
      %v2665 = vld [vmem:[%s2409 + $0x171] sm:$0xff]
      %v2666 = vpack.c.bf16 %v2635, %v2634
      %v2667 = vpack.c.bf16 %v2637, %v2636
      %v2668 = vpack.c.bf16 %v2639, %v2638
      %v2669 = vpack.c.bf16 %v2641, %v2640
      %v2670 = vpack.c.bf16 %v2643, %v2642
      %v2671 = vpack.c.bf16 %v2645, %v2644
      %v2672 = vpack.c.bf16 %v2647, %v2646
      %v2673 = vpack.c.bf16 %v2649, %v2648
      %v2674 = vpack.c.bf16 %v2651, %v2650
      %v2675 = vpack.c.bf16 %v2653, %v2652
      %v2676 = vpack.c.bf16 %v2655, %v2654
      %v2677 = vpack.c.bf16 %v2657, %v2656
      %v2678 = vpack.c.bf16 %v2659, %v2658
      %v2679 = vpack.c.bf16 %v2661, %v2660
      %v2680 = vpack.c.bf16 %v2663, %v2662
      %v2681 = vpack.c.bf16 %v2665, %v2664
      %v2682 = vld [vmem:[%s2409 + $0x2] sm:$0xff]
      %v2683 = vld [vmem:[%s2409 + $0xa] sm:$0xff]
      %v2684 = vld [vmem:[%s2409 + $0x1a] sm:$0xff]
      %v2685 = vld [vmem:[%s2409 + $0x22] sm:$0xff]
      %v2686 = vld [vmem:[%s2409 + $0x32] sm:$0xff]
      %v2687 = vld [vmem:[%s2409 + $0x3a] sm:$0xff]
      %v2688 = vld [vmem:[%s2409 + $0x4a] sm:$0xff]
      %v2689 = vld [vmem:[%s2409 + $0x52] sm:$0xff]
      %v2690 = vld [vmem:[%s2409 + $0x62] sm:$0xff]
      %v2691 = vld [vmem:[%s2409 + $0x6a] sm:$0xff]
      %v2692 = vld [vmem:[%s2409 + $0x7a] sm:$0xff]
      %v2693 = vld [vmem:[%s2409 + $0x82] sm:$0xff]
      %v2694 = vld [vmem:[%s2409 + $0x92] sm:$0xff]
      %v2695 = vld [vmem:[%s2409 + $0x9a] sm:$0xff]
      %v2696 = vld [vmem:[%s2409 + $0xaa] sm:$0xff]
      %v2697 = vld [vmem:[%s2409 + $0xb2] sm:$0xff]
      %v2698 = vld [vmem:[%s2409 + $0xc2] sm:$0xff]
      %v2699 = vld [vmem:[%s2409 + $0xca] sm:$0xff]
      %v2700 = vld [vmem:[%s2409 + $0xda] sm:$0xff]
      %v2701 = vld [vmem:[%s2409 + $0xe2] sm:$0xff]
      %v2702 = vld [vmem:[%s2409 + $0xf2] sm:$0xff]
      %v2703 = vld [vmem:[%s2409 + $0xfa] sm:$0xff]
      %v2704 = vld [vmem:[%s2409 + $0x10a] sm:$0xff]
      %v2705 = vld [vmem:[%s2409 + $0x112] sm:$0xff]
      %v2706 = vld [vmem:[%s2409 + $0x122] sm:$0xff]
      %v2707 = vld [vmem:[%s2409 + $0x12a] sm:$0xff]
      %v2708 = vld [vmem:[%s2409 + $0x13a] sm:$0xff]
      %v2709 = vld [vmem:[%s2409 + $0x142] sm:$0xff]
      %v2710 = vld [vmem:[%s2409 + $0x152] sm:$0xff]
      %v2711 = vld [vmem:[%s2409 + $0x15a] sm:$0xff]
      %v2712 = vld [vmem:[%s2409 + $0x16a] sm:$0xff]
      %v2713 = vld [vmem:[%s2409 + $0x172] sm:$0xff]
      %v2714 = vpack.c.bf16 %v2683, %v2682
      %v2715 = vpack.c.bf16 %v2685, %v2684
      %v2716 = vpack.c.bf16 %v2687, %v2686
      %v2717 = vpack.c.bf16 %v2689, %v2688
      %v2718 = vpack.c.bf16 %v2691, %v2690
      %v2719 = vpack.c.bf16 %v2693, %v2692
      %v2720 = vpack.c.bf16 %v2695, %v2694
      %v2721 = vpack.c.bf16 %v2697, %v2696
      %v2722 = vpack.c.bf16 %v2699, %v2698
      %v2723 = vpack.c.bf16 %v2701, %v2700
      %v2724 = vpack.c.bf16 %v2703, %v2702
      %v2725 = vpack.c.bf16 %v2705, %v2704
      %v2726 = vpack.c.bf16 %v2707, %v2706
      %v2727 = vpack.c.bf16 %v2709, %v2708
      %v2728 = vpack.c.bf16 %v2711, %v2710
      %v2729 = vpack.c.bf16 %v2713, %v2712
      %s2730 = scalar_lea.vmem [#allocation3], 48
      %v2731 = vld [vmem:[%s2730] sm:$0xff]
      %v2732 = vld [vmem:[%s2730 + $0x8] sm:$0xff]
      %v2733 = vld [vmem:[%s2730 + $0x18] sm:$0xff]
      %v2734 = vld [vmem:[%s2730 + $0x20] sm:$0xff]
      %v2735 = vld [vmem:[%s2730 + $0x30] sm:$0xff]
      %v2736 = vld [vmem:[%s2730 + $0x38] sm:$0xff]
      %v2737 = vld [vmem:[%s2730 + $0x48] sm:$0xff]
      %v2738 = vld [vmem:[%s2730 + $0x50] sm:$0xff]
      %v2739 = vld [vmem:[%s2730 + $0x60] sm:$0xff]
      %v2740 = vld [vmem:[%s2730 + $0x68] sm:$0xff]
      %v2741 = vld [vmem:[%s2730 + $0x78] sm:$0xff]
      %v2742 = vld [vmem:[%s2730 + $0x80] sm:$0xff]
      %v2743 = vld [vmem:[%s2730 + $0x90] sm:$0xff]
      %v2744 = vld [vmem:[%s2730 + $0x98] sm:$0xff]
      %v2745 = vld [vmem:[%s2730 + $0xa8] sm:$0xff]
      %v2746 = vld [vmem:[%s2730 + $0xb0] sm:$0xff]
      %v2747 = vld [vmem:[%s2730 + $0xc0] sm:$0xff]
      %v2748 = vld [vmem:[%s2730 + $0xc8] sm:$0xff]
      %v2749 = vld [vmem:[%s2730 + $0xd8] sm:$0xff]
      %v2750 = vld [vmem:[%s2730 + $0xe0] sm:$0xff]
      %v2751 = vld [vmem:[%s2730 + $0xf0] sm:$0xff]
      %v2752 = vld [vmem:[%s2730 + $0xf8] sm:$0xff]
      %v2753 = vld [vmem:[%s2730 + $0x108] sm:$0xff]
      %v2754 = vld [vmem:[%s2730 + $0x110] sm:$0xff]
      %v2755 = vld [vmem:[%s2730 + $0x120] sm:$0xff]
      %v2756 = vld [vmem:[%s2730 + $0x128] sm:$0xff]
      %v2757 = vld [vmem:[%s2730 + $0x138] sm:$0xff]
      %v2758 = vld [vmem:[%s2730 + $0x140] sm:$0xff]
      %v2759 = vld [vmem:[%s2730 + $0x150] sm:$0xff]
      %v2760 = vld [vmem:[%s2730 + $0x158] sm:$0xff]
      %v2761 = vld [vmem:[%s2730 + $0x168] sm:$0xff]
      %v2762 = vld [vmem:[%s2730 + $0x170] sm:$0xff]
      %v2763 = vpack.c.bf16 %v2732, %v2731
      %v2764 = vpack.c.bf16 %v2734, %v2733
      %v2765 = vpack.c.bf16 %v2736, %v2735
      %v2766 = vpack.c.bf16 %v2738, %v2737
      %v2767 = vpack.c.bf16 %v2740, %v2739
      %v2768 = vpack.c.bf16 %v2742, %v2741
      %v2769 = vpack.c.bf16 %v2744, %v2743
      %v2770 = vpack.c.bf16 %v2746, %v2745
      %v2771 = vpack.c.bf16 %v2748, %v2747
      %v2772 = vpack.c.bf16 %v2750, %v2749
      %v2773 = vpack.c.bf16 %v2752, %v2751
      %v2774 = vpack.c.bf16 %v2754, %v2753
      %v2775 = vpack.c.bf16 %v2756, %v2755
      %v2776 = vpack.c.bf16 %v2758, %v2757
      %v2777 = vpack.c.bf16 %v2760, %v2759
      %v2778 = vpack.c.bf16 %v2762, %v2761
      %v2779 = vld [vmem:[%s2730 + $0x1] sm:$0xff]
      %v2780 = vld [vmem:[%s2730 + $0x9] sm:$0xff]
      %v2781 = vld [vmem:[%s2730 + $0x19] sm:$0xff]
      %v2782 = vld [vmem:[%s2730 + $0x21] sm:$0xff]
      %v2783 = vld [vmem:[%s2730 + $0x31] sm:$0xff]
      %v2784 = vld [vmem:[%s2730 + $0x39] sm:$0xff]
      %v2785 = vld [vmem:[%s2730 + $0x49] sm:$0xff]
      %v2786 = vld [vmem:[%s2730 + $0x51] sm:$0xff]
      %v2787 = vld [vmem:[%s2730 + $0x61] sm:$0xff]
      %v2788 = vld [vmem:[%s2730 + $0x69] sm:$0xff]
      %v2789 = vld [vmem:[%s2730 + $0x79] sm:$0xff]
      %v2790 = vld [vmem:[%s2730 + $0x81] sm:$0xff]
      %v2791 = vld [vmem:[%s2730 + $0x91] sm:$0xff]
      %v2792 = vld [vmem:[%s2730 + $0x99] sm:$0xff]
      %v2793 = vld [vmem:[%s2730 + $0xa9] sm:$0xff]
      %v2794 = vld [vmem:[%s2730 + $0xb1] sm:$0xff]
      %v2795 = vld [vmem:[%s2730 + $0xc1] sm:$0xff]
      %v2796 = vld [vmem:[%s2730 + $0xc9] sm:$0xff]
      %v2797 = vld [vmem:[%s2730 + $0xd9] sm:$0xff]
      %v2798 = vld [vmem:[%s2730 + $0xe1] sm:$0xff]
      %v2799 = vld [vmem:[%s2730 + $0xf1] sm:$0xff]
      %v2800 = vld [vmem:[%s2730 + $0xf9] sm:$0xff]
      %v2801 = vld [vmem:[%s2730 + $0x109] sm:$0xff]
      %v2802 = vld [vmem:[%s2730 + $0x111] sm:$0xff]
      %v2803 = vld [vmem:[%s2730 + $0x121] sm:$0xff]
      %v2804 = vld [vmem:[%s2730 + $0x129] sm:$0xff]
      %v2805 = vld [vmem:[%s2730 + $0x139] sm:$0xff]
      %v2806 = vld [vmem:[%s2730 + $0x141] sm:$0xff]
      %v2807 = vld [vmem:[%s2730 + $0x151] sm:$0xff]
      %v2808 = vld [vmem:[%s2730 + $0x159] sm:$0xff]
      %v2809 = vld [vmem:[%s2730 + $0x169] sm:$0xff]
      %v2810 = vld [vmem:[%s2730 + $0x171] sm:$0xff]
      %v2811 = vpack.c.bf16 %v2780, %v2779
      %v2812 = vpack.c.bf16 %v2782, %v2781
      %v2813 = vpack.c.bf16 %v2784, %v2783
      %v2814 = vpack.c.bf16 %v2786, %v2785
      %v2815 = vpack.c.bf16 %v2788, %v2787
      %v2816 = vpack.c.bf16 %v2790, %v2789
      %v2817 = vpack.c.bf16 %v2792, %v2791
      %v2818 = vpack.c.bf16 %v2794, %v2793
      %v2819 = vpack.c.bf16 %v2796, %v2795
      %v2820 = vpack.c.bf16 %v2798, %v2797
      %v2821 = vpack.c.bf16 %v2800, %v2799
      %v2822 = vpack.c.bf16 %v2802, %v2801
      %v2823 = vpack.c.bf16 %v2804, %v2803
      %v2824 = vpack.c.bf16 %v2806, %v2805
      %v2825 = vpack.c.bf16 %v2808, %v2807
      %v2826 = vpack.c.bf16 %v2810, %v2809
      %v2827 = vld [vmem:[%s2730 + $0x2] sm:$0xff]
      %v2828 = vld [vmem:[%s2730 + $0xa] sm:$0xff]
      %v2829 = vld [vmem:[%s2730 + $0x1a] sm:$0xff]
      %v2830 = vld [vmem:[%s2730 + $0x22] sm:$0xff]
      %v2831 = vld [vmem:[%s2730 + $0x32] sm:$0xff]
      %v2832 = vld [vmem:[%s2730 + $0x3a] sm:$0xff]
      %v2833 = vld [vmem:[%s2730 + $0x4a] sm:$0xff]
      %v2834 = vld [vmem:[%s2730 + $0x52] sm:$0xff]
      %v2835 = vld [vmem:[%s2730 + $0x62] sm:$0xff]
      %v2836 = vld [vmem:[%s2730 + $0x6a] sm:$0xff]
      %v2837 = vld [vmem:[%s2730 + $0x7a] sm:$0xff]
      %v2838 = vld [vmem:[%s2730 + $0x82] sm:$0xff]
      %v2839 = vld [vmem:[%s2730 + $0x92] sm:$0xff]
      %v2840 = vld [vmem:[%s2730 + $0x9a] sm:$0xff]
      %v2841 = vld [vmem:[%s2730 + $0xaa] sm:$0xff]
      %v2842 = vld [vmem:[%s2730 + $0xb2] sm:$0xff]
      %v2843 = vld [vmem:[%s2730 + $0xc2] sm:$0xff]
      %v2844 = vld [vmem:[%s2730 + $0xca] sm:$0xff]
      %v2845 = vld [vmem:[%s2730 + $0xda] sm:$0xff]
      %v2846 = vld [vmem:[%s2730 + $0xe2] sm:$0xff]
      %v2847 = vld [vmem:[%s2730 + $0xf2] sm:$0xff]
      %v2848 = vld [vmem:[%s2730 + $0xfa] sm:$0xff]
      %v2849 = vld [vmem:[%s2730 + $0x10a] sm:$0xff]
      %v2850 = vld [vmem:[%s2730 + $0x112] sm:$0xff]
      %v2851 = vld [vmem:[%s2730 + $0x122] sm:$0xff]
      %v2852 = vld [vmem:[%s2730 + $0x12a] sm:$0xff]
      %v2853 = vld [vmem:[%s2730 + $0x13a] sm:$0xff]
      %v2854 = vld [vmem:[%s2730 + $0x142] sm:$0xff]
      %v2855 = vld [vmem:[%s2730 + $0x152] sm:$0xff]
      %v2856 = vld [vmem:[%s2730 + $0x15a] sm:$0xff]
      %v2857 = vld [vmem:[%s2730 + $0x16a] sm:$0xff]
      %v2858 = vld [vmem:[%s2730 + $0x172] sm:$0xff]
      %v2859 = vpack.c.bf16 %v2828, %v2827
      %v2860 = vpack.c.bf16 %v2830, %v2829
      %v2861 = vpack.c.bf16 %v2832, %v2831
      %v2862 = vpack.c.bf16 %v2834, %v2833
      %v2863 = vpack.c.bf16 %v2836, %v2835
      %v2864 = vpack.c.bf16 %v2838, %v2837
      %v2865 = vpack.c.bf16 %v2840, %v2839
      %v2866 = vpack.c.bf16 %v2842, %v2841
      %v2867 = vpack.c.bf16 %v2844, %v2843
      %v2868 = vpack.c.bf16 %v2846, %v2845
      %v2869 = vpack.c.bf16 %v2848, %v2847
      %v2870 = vpack.c.bf16 %v2850, %v2849
      %v2871 = vpack.c.bf16 %v2852, %v2851
      %v2872 = vpack.c.bf16 %v2854, %v2853
      %v2873 = vpack.c.bf16 %v2856, %v2855
      %v2874 = vpack.c.bf16 %v2858, %v2857
      %v2875 = vld [vmem:[%s2] sm:$0xf]
      %v2876 = vld [vmem:[%s2 + $0x4] sm:$0xf]
      %v2877 = vld [vmem:[%s2 + $0x8] sm:$0xf]
      %v2878 = vld [vmem:[%s2 + $0xc] sm:$0xf]
      %v2879 = vld [vmem:[%s2 + $0x10] sm:$0xf]
      %v2880 = vld [vmem:[%s2 + $0x14] sm:$0xf]
      %v2881 = vld [vmem:[%s2 + $0x18] sm:$0xf]
      %v2882 = vld [vmem:[%s2 + $0x1c] sm:$0xf]
      %v2883 = vld [vmem:[%s2 + $0x20] sm:$0xf]
      %v2884 = vld [vmem:[%s2 + $0x24] sm:$0xf]
      %v2885 = vld [vmem:[%s2 + $0x28] sm:$0xf]
      %v2886 = vld [vmem:[%s2 + $0x2c] sm:$0xf]
      %v2887 = vld [vmem:[%s2 + $0x30] sm:$0xf]
      %v2888 = vld [vmem:[%s2 + $0x34] sm:$0xf]
      %v2889 = vld [vmem:[%s2 + $0x38] sm:$0xf]
      %v2890 = vld [vmem:[%s2 + $0x3c] sm:$0xf]
      %v2891 = vld [vmem:[%s2 + $0x40] sm:$0xf]
      %v2892 = vld [vmem:[%s2 + $0x44] sm:$0xf]
      %v2893 = vld [vmem:[%s2 + $0x48] sm:$0xf]
      %v2894 = vld [vmem:[%s2 + $0x4c] sm:$0xf]
      %v2895 = vld [vmem:[%s2 + $0x50] sm:$0xf]
      %v2896 = vld [vmem:[%s2 + $0x54] sm:$0xf]
      %v2897 = vld [vmem:[%s2 + $0x58] sm:$0xf]
      %v2898 = vld [vmem:[%s2 + $0x5c] sm:$0xf]
      %v2899 = vld [vmem:[%s2 + $0x60] sm:$0xf]
      %v2900 = vld [vmem:[%s2 + $0x64] sm:$0xf]
      %v2901 = vld [vmem:[%s2 + $0x68] sm:$0xf]
      %v2902 = vld [vmem:[%s2 + $0x6c] sm:$0xf]
      %v2903 = vld [vmem:[%s2 + $0x70] sm:$0xf]
      %v2904 = vld [vmem:[%s2 + $0x74] sm:$0xf]
      %v2905 = vld [vmem:[%s2 + $0x78] sm:$0xf]
      %v2906 = vld [vmem:[%s2 + $0x7c] sm:$0xf]
      %v2907 = vld [vmem:[%s2 + $0x80] sm:$0xf]
      %v2908 = vld [vmem:[%s2 + $0x84] sm:$0xf]
      %v2909 = vld [vmem:[%s2 + $0x88] sm:$0xf]
      %v2910 = vld [vmem:[%s2 + $0x8c] sm:$0xf]
      %v2911 = vld [vmem:[%s2 + $0x90] sm:$0xf]
      %v2912 = vld [vmem:[%s2 + $0x94] sm:$0xf]
      %v2913 = vld [vmem:[%s2 + $0x98] sm:$0xf]
      %v2914 = vld [vmem:[%s2 + $0x9c] sm:$0xf]
      %v2915 = vld [vmem:[%s2 + $0xa0] sm:$0xf]
      %v2916 = vld [vmem:[%s2 + $0xa4] sm:$0xf]
      %v2917 = vld [vmem:[%s2 + $0xa8] sm:$0xf]
      %v2918 = vld [vmem:[%s2 + $0xac] sm:$0xf]
      %v2919 = vld [vmem:[%s2 + $0xb0] sm:$0xf]
      %v2920 = vld [vmem:[%s2 + $0xb4] sm:$0xf]
      %v2921 = vld [vmem:[%s2 + $0xb8] sm:$0xf]
      %v2922 = vld [vmem:[%s2 + $0xbc] sm:$0xf]
      %v2923 = vld [vmem:[%s2 + $0xc0] sm:$0xf]
      %v2924 = vld [vmem:[%s2 + $0xc4] sm:$0xf]
      %v2925 = vld [vmem:[%s2 + $0xc8] sm:$0xf]
      %v2926 = vld [vmem:[%s2 + $0xcc] sm:$0xf]
      %v2927 = vld [vmem:[%s2 + $0xd0] sm:$0xf]
      %v2928 = vld [vmem:[%s2 + $0xd4] sm:$0xf]
      %v2929 = vld [vmem:[%s2 + $0xd8] sm:$0xf]
      %v2930 = vld [vmem:[%s2 + $0xdc] sm:$0xf]
      %v2931 = vld [vmem:[%s2 + $0xe0] sm:$0xf]
      %v2932 = vld [vmem:[%s2 + $0xe4] sm:$0xf]
      %v2933 = vld [vmem:[%s2 + $0xe8] sm:$0xf]
      %v2934 = vld [vmem:[%s2 + $0xec] sm:$0xf]
      %v2935 = vld [vmem:[%s2 + $0xf0] sm:$0xf]
      %v2936 = vld [vmem:[%s2 + $0xf4] sm:$0xf]
      %v2937 = vld [vmem:[%s2 + $0xf8] sm:$0xf]
      %v2938 = vld [vmem:[%s2 + $0xfc] sm:$0xf]
      %v2939 = vld [vmem:[%s2 + $0x100] sm:$0xf]
      %v2940 = vld [vmem:[%s2 + $0x104] sm:$0xf]
      %v2941 = vld [vmem:[%s2 + $0x108] sm:$0xf]
      %v2942 = vld [vmem:[%s2 + $0x10c] sm:$0xf]
      %v2943 = vld [vmem:[%s2 + $0x110] sm:$0xf]
      %v2944 = vld [vmem:[%s2 + $0x114] sm:$0xf]
      %v2945 = vld [vmem:[%s2 + $0x118] sm:$0xf]
      %v2946 = vld [vmem:[%s2 + $0x11c] sm:$0xf]
      %v2947 = vld [vmem:[%s2 + $0x120] sm:$0xf]
      %v2948 = vld [vmem:[%s2 + $0x124] sm:$0xf]
      %v2949 = vld [vmem:[%s2 + $0x128] sm:$0xf]
      %v2950 = vld [vmem:[%s2 + $0x12c] sm:$0xf]
      %v2951 = vld [vmem:[%s2 + $0x130] sm:$0xf]
      %v2952 = vld [vmem:[%s2 + $0x134] sm:$0xf]
      %v2953 = vld [vmem:[%s2 + $0x138] sm:$0xf]
      %v2954 = vld [vmem:[%s2 + $0x13c] sm:$0xf]
      %v2955 = vld [vmem:[%s2 + $0x140] sm:$0xf]
      %v2956 = vld [vmem:[%s2 + $0x144] sm:$0xf]
      %v2957 = vld [vmem:[%s2 + $0x148] sm:$0xf]
      %v2958 = vld [vmem:[%s2 + $0x14c] sm:$0xf]
      %v2959 = vld [vmem:[%s2 + $0x150] sm:$0xf]
      %v2960 = vld [vmem:[%s2 + $0x154] sm:$0xf]
      %v2961 = vld [vmem:[%s2 + $0x158] sm:$0xf]
      %v2962 = vld [vmem:[%s2 + $0x15c] sm:$0xf]
      %v2963 = vld [vmem:[%s2 + $0x160] sm:$0xf]
      %v2964 = vld [vmem:[%s2 + $0x164] sm:$0xf]
      %v2965 = vld [vmem:[%s2 + $0x168] sm:$0xf]
      %v2966 = vld [vmem:[%s2 + $0x16c] sm:$0xf]
      %v2967 = vld [vmem:[%s2 + $0x170] sm:$0xf]
      %v2968 = vld [vmem:[%s2 + $0x174] sm:$0xf]
      %v2969 = vld [vmem:[%s2 + $0x178] sm:$0xf]
      %v2970 = vld [vmem:[%s2 + $0x17c] sm:$0xf]
      %v2971 = vld [vmem:[%s2 + $0x180] sm:$0xf]
      %v2972 = vld [vmem:[%s2 + $0x184] sm:$0xf]
      %v2973 = vld [vmem:[%s2 + $0x188] sm:$0xf]
      %v2974 = vld [vmem:[%s2 + $0x18c] sm:$0xf]
      %v2975 = vld [vmem:[%s2 + $0x190] sm:$0xf]
      %v2976 = vld [vmem:[%s2 + $0x194] sm:$0xf]
      %v2977 = vld [vmem:[%s2 + $0x198] sm:$0xf]
      %v2978 = vld [vmem:[%s2 + $0x19c] sm:$0xf]
      %v2979 = vld [vmem:[%s2 + $0x1a0] sm:$0xf]
      %v2980 = vld [vmem:[%s2 + $0x1a4] sm:$0xf]
      %v2981 = vld [vmem:[%s2 + $0x1a8] sm:$0xf]
      %v2982 = vld [vmem:[%s2 + $0x1ac] sm:$0xf]
      %v2983 = vld [vmem:[%s2 + $0x1b0] sm:$0xf]
      %v2984 = vld [vmem:[%s2 + $0x1b4] sm:$0xf]
      %v2985 = vld [vmem:[%s2 + $0x1b8] sm:$0xf]
      %v2986 = vld [vmem:[%s2 + $0x1bc] sm:$0xf]
      %v2987 = vld [vmem:[%s2 + $0x1c0] sm:$0xf]
      %v2988 = vld [vmem:[%s2 + $0x1c4] sm:$0xf]
      %v2989 = vld [vmem:[%s2 + $0x1c8] sm:$0xf]
      %v2990 = vld [vmem:[%s2 + $0x1cc] sm:$0xf]
      %v2991 = vld [vmem:[%s2 + $0x1d0] sm:$0xf]
      %v2992 = vld [vmem:[%s2 + $0x1d4] sm:$0xf]
      %v2993 = vld [vmem:[%s2 + $0x1d8] sm:$0xf]
      %v2994 = vld [vmem:[%s2 + $0x1dc] sm:$0xf]
      %v2995 = vld [vmem:[%s2 + $0x1e0] sm:$0xf]
      %v2996 = vld [vmem:[%s2 + $0x1e4] sm:$0xf]
      %v2997 = vld [vmem:[%s2 + $0x1e8] sm:$0xf]
      %v2998 = vld [vmem:[%s2 + $0x1ec] sm:$0xf]
      %v2999 = vld [vmem:[%s2 + $0x1f0] sm:$0xf]
      %v3000 = vld [vmem:[%s2 + $0x1f4] sm:$0xf]
      %v3001 = vld [vmem:[%s2 + $0x1f8] sm:$0xf]
      %v3002 = vld [vmem:[%s2 + $0x1fc] sm:$0xf]
      %v3003 = vld [vmem:[%s2 + $0x200] sm:$0xf]
      %v3004 = vld [vmem:[%s2 + $0x204] sm:$0xf]
      %v3005 = vld [vmem:[%s2 + $0x208] sm:$0xf]
      %v3006 = vld [vmem:[%s2 + $0x20c] sm:$0xf]
      %v3007 = vld [vmem:[%s2 + $0x210] sm:$0xf]
      %v3008 = vld [vmem:[%s2 + $0x214] sm:$0xf]
      %v3009 = vld [vmem:[%s2 + $0x218] sm:$0xf]
      %v3010 = vld [vmem:[%s2 + $0x21c] sm:$0xf]
      %v3011 = vld [vmem:[%s2 + $0x220] sm:$0xf]
      %v3012 = vld [vmem:[%s2 + $0x224] sm:$0xf]
      %v3013 = vld [vmem:[%s2 + $0x228] sm:$0xf]
      %v3014 = vld [vmem:[%s2 + $0x22c] sm:$0xf]
      %v3015 = vld [vmem:[%s2 + $0x230] sm:$0xf]
      %v3016 = vld [vmem:[%s2 + $0x234] sm:$0xf]
      %v3017 = vld [vmem:[%s2 + $0x238] sm:$0xf]
      %v3018 = vld [vmem:[%s2 + $0x23c] sm:$0xf]
      %v3163 = vunpack.c.l.b16 %v2875
      %v3164 = vunpack.c.l.b16 %v2876
      %v3165 = vunpack.c.l.b16 %v2877
      %v3166 = vunpack.c.l.b16 %v2878
      %v3167 = vunpack.c.l.b16 %v2879
      %v3168 = vunpack.c.l.b16 %v2880
      %v3169 = vunpack.c.l.b16 %v2881
      %v3170 = vunpack.c.l.b16 %v2882
      %v3171 = vunpack.c.l.b16 %v2883
      %v3172 = vunpack.c.l.b16 %v2884
      %v3173 = vunpack.c.l.b16 %v2885
      %v3174 = vunpack.c.l.b16 %v2886
      %v3175 = vunpack.c.l.b16 %v2887
      %v3176 = vunpack.c.l.b16 %v2888
      %v3177 = vunpack.c.l.b16 %v2889
      %v3178 = vunpack.c.l.b16 %v2890
      %v3179 = vunpack.c.l.b16 %v2891
      %v3180 = vunpack.c.l.b16 %v2892
      %v3181 = vunpack.c.l.b16 %v2893
      %v3182 = vunpack.c.l.b16 %v2894
      %v3183 = vunpack.c.l.b16 %v2895
      %v3184 = vunpack.c.l.b16 %v2896
      %v3185 = vunpack.c.l.b16 %v2897
      %v3186 = vunpack.c.l.b16 %v2898
      %v3187 = vunpack.c.l.b16 %v2899
      %v3188 = vunpack.c.l.b16 %v2900
      %v3189 = vunpack.c.l.b16 %v2901
      %v3190 = vunpack.c.l.b16 %v2902
      %v3191 = vunpack.c.l.b16 %v2903
      %v3192 = vunpack.c.l.b16 %v2904
      %v3193 = vunpack.c.l.b16 %v2905
      %v3194 = vunpack.c.l.b16 %v2906
      %v3195 = vunpack.c.l.b16 %v2907
      %v3196 = vunpack.c.l.b16 %v2908
      %v3197 = vunpack.c.l.b16 %v2909
      %v3198 = vunpack.c.l.b16 %v2910
      %v3199 = vunpack.c.l.b16 %v2911
      %v3200 = vunpack.c.l.b16 %v2912
      %v3201 = vunpack.c.l.b16 %v2913
      %v3202 = vunpack.c.l.b16 %v2914
      %v3203 = vunpack.c.l.b16 %v2915
      %v3204 = vunpack.c.l.b16 %v2916
      %v3205 = vunpack.c.l.b16 %v2917
      %v3206 = vunpack.c.l.b16 %v2918
      %v3207 = vunpack.c.l.b16 %v2919
      %v3208 = vunpack.c.l.b16 %v2920
      %v3209 = vunpack.c.l.b16 %v2921
      %v3210 = vunpack.c.l.b16 %v2922
      %v3211 = vunpack.c.l.b16 %v2923
      %v3212 = vunpack.c.l.b16 %v2924
      %v3213 = vunpack.c.l.b16 %v2925
      %v3214 = vunpack.c.l.b16 %v2926
      %v3215 = vunpack.c.l.b16 %v2927
      %v3216 = vunpack.c.l.b16 %v2928
      %v3217 = vunpack.c.l.b16 %v2929
      %v3218 = vunpack.c.l.b16 %v2930
      %v3219 = vunpack.c.l.b16 %v2931
      %v3220 = vunpack.c.l.b16 %v2932
      %v3221 = vunpack.c.l.b16 %v2933
      %v3222 = vunpack.c.l.b16 %v2934
      %v3223 = vunpack.c.l.b16 %v2935
      %v3224 = vunpack.c.l.b16 %v2936
      %v3225 = vunpack.c.l.b16 %v2937
      %v3226 = vunpack.c.l.b16 %v2938
      %v3227 = vunpack.c.l.b16 %v2939
      %v3228 = vunpack.c.l.b16 %v2940
      %v3229 = vunpack.c.l.b16 %v2941
      %v3230 = vunpack.c.l.b16 %v2942
      %v3231 = vunpack.c.l.b16 %v2943
      %v3232 = vunpack.c.l.b16 %v2944
      %v3233 = vunpack.c.l.b16 %v2945
      %v3234 = vunpack.c.l.b16 %v2946
      %v3235 = vunpack.c.l.b16 %v2947
      %v3236 = vunpack.c.l.b16 %v2948
      %v3237 = vunpack.c.l.b16 %v2949
      %v3238 = vunpack.c.l.b16 %v2950
      %v3239 = vunpack.c.l.b16 %v2951
      %v3240 = vunpack.c.l.b16 %v2952
      %v3241 = vunpack.c.l.b16 %v2953
      %v3242 = vunpack.c.l.b16 %v2954
      %v3243 = vunpack.c.l.b16 %v2955
      %v3244 = vunpack.c.l.b16 %v2956
      %v3245 = vunpack.c.l.b16 %v2957
      %v3246 = vunpack.c.l.b16 %v2958
      %v3247 = vunpack.c.l.b16 %v2959
      %v3248 = vunpack.c.l.b16 %v2960
      %v3249 = vunpack.c.l.b16 %v2961
      %v3250 = vunpack.c.l.b16 %v2962
      %v3251 = vunpack.c.l.b16 %v2963
      %v3252 = vunpack.c.l.b16 %v2964
      %v3253 = vunpack.c.l.b16 %v2965
      %v3254 = vunpack.c.l.b16 %v2966
      %v3255 = vunpack.c.l.b16 %v2967
      %v3256 = vunpack.c.l.b16 %v2968
      %v3257 = vunpack.c.l.b16 %v2969
      %v3258 = vunpack.c.l.b16 %v2970
      %v3259 = vunpack.c.l.b16 %v2971
      %v3260 = vunpack.c.l.b16 %v2972
      %v3261 = vunpack.c.l.b16 %v2973
      %v3262 = vunpack.c.l.b16 %v2974
      %v3263 = vunpack.c.l.b16 %v2975
      %v3264 = vunpack.c.l.b16 %v2976
      %v3265 = vunpack.c.l.b16 %v2977
      %v3266 = vunpack.c.l.b16 %v2978
      %v3267 = vunpack.c.l.b16 %v2979
      %v3268 = vunpack.c.l.b16 %v2980
      %v3269 = vunpack.c.l.b16 %v2981
      %v3270 = vunpack.c.l.b16 %v2982
      %v3271 = vunpack.c.l.b16 %v2983
      %v3272 = vunpack.c.l.b16 %v2984
      %v3273 = vunpack.c.l.b16 %v2985
      %v3274 = vunpack.c.l.b16 %v2986
      %v3275 = vunpack.c.l.b16 %v2987
      %v3276 = vunpack.c.l.b16 %v2988
      %v3277 = vunpack.c.l.b16 %v2989
      %v3278 = vunpack.c.l.b16 %v2990
      %v3279 = vunpack.c.l.b16 %v2991
      %v3280 = vunpack.c.l.b16 %v2992
      %v3281 = vunpack.c.l.b16 %v2993
      %v3282 = vunpack.c.l.b16 %v2994
      %v3283 = vunpack.c.l.b16 %v2995
      %v3284 = vunpack.c.l.b16 %v2996
      %v3285 = vunpack.c.l.b16 %v2997
      %v3286 = vunpack.c.l.b16 %v2998
      %v3287 = vunpack.c.l.b16 %v2999
      %v3288 = vunpack.c.l.b16 %v3000
      %v3289 = vunpack.c.l.b16 %v3001
      %v3290 = vunpack.c.l.b16 %v3002
      %v3291 = vunpack.c.l.b16 %v3003
      %v3292 = vunpack.c.l.b16 %v3004
      %v3293 = vunpack.c.l.b16 %v3005
      %v3294 = vunpack.c.l.b16 %v3006
      %v3295 = vunpack.c.l.b16 %v3007
      %v3296 = vunpack.c.l.b16 %v3008
      %v3297 = vunpack.c.l.b16 %v3009
      %v3298 = vunpack.c.l.b16 %v3010
      %v3299 = vunpack.c.l.b16 %v3011
      %v3300 = vunpack.c.l.b16 %v3012
      %v3301 = vunpack.c.l.b16 %v3013
      %v3302 = vunpack.c.l.b16 %v3014
      %v3303 = vunpack.c.l.b16 %v3015
      %v3304 = vunpack.c.l.b16 %v3016
      %v3305 = vunpack.c.l.b16 %v3017
      %v3306 = vunpack.c.l.b16 %v3018
      %v3307 = vpack.c.b16 %v3164, %v3163
      %v3308 = vpack.c.b16 %v3166, %v3165
      %v3309 = vpack.c.b16 %v3168, %v3167
      %v3310 = vpack.c.b16 %v3170, %v3169
      %v3311 = vpack.c.b16 %v3172, %v3171
      %v3312 = vpack.c.b16 %v3174, %v3173
      %v3313 = vpack.c.b16 %v3176, %v3175
      %v3314 = vpack.c.b16 %v3178, %v3177
      %v3315 = vpack.c.b16 %v3180, %v3179
      %v3316 = vpack.c.b16 %v3182, %v3181
      %v3317 = vpack.c.b16 %v3184, %v3183
      %v3318 = vpack.c.b16 %v3186, %v3185
      %v3319 = vpack.c.b16 %v3188, %v3187
      %v3320 = vpack.c.b16 %v3190, %v3189
      %v3321 = vpack.c.b16 %v3192, %v3191
      %v3322 = vpack.c.b16 %v3194, %v3193
      %v3323 = vpack.c.b16 %v3196, %v3195
      %v3324 = vpack.c.b16 %v3198, %v3197
      %v3325 = vpack.c.b16 %v3200, %v3199
      %v3326 = vpack.c.b16 %v3202, %v3201
      %v3327 = vpack.c.b16 %v3204, %v3203
      %v3328 = vpack.c.b16 %v3206, %v3205
      %v3329 = vpack.c.b16 %v3208, %v3207
      %v3330 = vpack.c.b16 %v3210, %v3209
      %v3331 = vpack.c.b16 %v3212, %v3211
      %v3332 = vpack.c.b16 %v3214, %v3213
      %v3333 = vpack.c.b16 %v3216, %v3215
      %v3334 = vpack.c.b16 %v3218, %v3217
      %v3335 = vpack.c.b16 %v3220, %v3219
      %v3336 = vpack.c.b16 %v3222, %v3221
      %v3337 = vpack.c.b16 %v3224, %v3223
      %v3338 = vpack.c.b16 %v3226, %v3225
      %v3339 = vpack.c.b16 %v3228, %v3227
      %v3340 = vpack.c.b16 %v3230, %v3229
      %v3341 = vpack.c.b16 %v3232, %v3231
      %v3342 = vpack.c.b16 %v3234, %v3233
      %v3343 = vpack.c.b16 %v3236, %v3235
      %v3344 = vpack.c.b16 %v3238, %v3237
      %v3345 = vpack.c.b16 %v3240, %v3239
      %v3346 = vpack.c.b16 %v3242, %v3241
      %v3347 = vpack.c.b16 %v3244, %v3243
      %v3348 = vpack.c.b16 %v3246, %v3245
      %v3349 = vpack.c.b16 %v3248, %v3247
      %v3350 = vpack.c.b16 %v3250, %v3249
      %v3351 = vpack.c.b16 %v3252, %v3251
      %v3352 = vpack.c.b16 %v3254, %v3253
      %v3353 = vpack.c.b16 %v3256, %v3255
      %v3354 = vpack.c.b16 %v3258, %v3257
      %v3355 = vpack.c.b16 %v3260, %v3259
      %v3356 = vpack.c.b16 %v3262, %v3261
      %v3357 = vpack.c.b16 %v3264, %v3263
      %v3358 = vpack.c.b16 %v3266, %v3265
      %v3359 = vpack.c.b16 %v3268, %v3267
      %v3360 = vpack.c.b16 %v3270, %v3269
      %v3361 = vpack.c.b16 %v3272, %v3271
      %v3362 = vpack.c.b16 %v3274, %v3273
      %v3363 = vpack.c.b16 %v3276, %v3275
      %v3364 = vpack.c.b16 %v3278, %v3277
      %v3365 = vpack.c.b16 %v3280, %v3279
      %v3366 = vpack.c.b16 %v3282, %v3281
      %v3367 = vpack.c.b16 %v3284, %v3283
      %v3368 = vpack.c.b16 %v3286, %v3285
      %v3369 = vpack.c.b16 %v3288, %v3287
      %v3370 = vpack.c.b16 %v3290, %v3289
      %v3371 = vpack.c.b16 %v3292, %v3291
      %v3372 = vpack.c.b16 %v3294, %v3293
      %v3373 = vpack.c.b16 %v3296, %v3295
      %v3374 = vpack.c.b16 %v3298, %v3297
      %v3375 = vpack.c.b16 %v3300, %v3299
      %v3376 = vpack.c.b16 %v3302, %v3301
      %v3377 = vpack.c.b16 %v3304, %v3303
      %v3378 = vpack.c.b16 %v3306, %v3305
      %3451 = vmatprep.subr.bf16.mxu0 0
      %3452 = vmatpush1.bf16.msra.mxu0 %v3307
      %3453 = vmatprep.subr.bf16.mxu0 0
      %3454 = vmatpush1.bf16.msra.mxu0 %v3308
      %3455 = vmatprep.subr.bf16.mxu0 0
      %3456 = vmatpush1.bf16.msra.mxu0 %v3309
      %3457 = vmatprep.subr.bf16.mxu0 0
      %3458 = vmatpush1.bf16.msra.mxu0 %v3310
      %3459 = vmatprep.subr.bf16.mxu0 0
      %3460 = vmatpush1.bf16.msra.mxu0 %v3311
      %3461 = vmatprep.subr.bf16.mxu0 0
      %3462 = vmatpush1.bf16.msra.mxu0 %v3312
      %3463 = vmatprep.subr.bf16.mxu0 0
      %3464 = vmatpush1.bf16.msra.mxu0 %v3313
      %3465 = vmatprep.subr.bf16.mxu0 0
      %3466 = vmatpush1.bf16.msra.mxu0 %v3314
      %3467 = vmatprep.subr.bf16.mxu0 0
      %3468 = vmatpush1.bf16.msra.mxu0 %v3315
      %3469 = vmatprep.subr.bf16.mxu0 0
      %3470 = vmatpush1.bf16.msra.mxu0 %v3316
      %3471 = vmatprep.subr.bf16.mxu0 0
      %3472 = vmatpush1.bf16.msra.mxu0 %v3317
      %3473 = vmatprep.subr.bf16.mxu0 0
      %3474 = vmatpush1.bf16.msra.mxu0 %v3318
      %3475 = vmatprep.subr.bf16.mxu0 0
      %3476 = vmatpush1.bf16.msra.mxu0 %v3319
      %3477 = vmatprep.subr.bf16.mxu0 0
      %3478 = vmatpush1.bf16.msra.mxu0 %v3320
      %3479 = vmatprep.subr.bf16.mxu0 0
      %3480 = vmatpush1.bf16.msra.mxu0 %v3321
      %3481 = vmatprep.subr.bf16.mxu0 0
      %3482 = vmatpush1.bf16.msra.mxu0 %v3322
      %3483 = vmatprep.mubr.bf16.mxu0 %v2522
      %3484 = vmatmul.mubr.bf16.gmra.mrb[0].mxu0 %v2474
      %v3485 = vpop.f32.mrb[0].mxu0
      %v3486 = vadd.f32 0.0, %v3485
      %v3487 = vpop.f32.mrb[0].mxu0
      %v3488 = vpop.f32.mrb[0].mxu0
      %v3489 = vadd.f32 0.0, %v3488
      %v3490 = vpop.f32.mrb[0].mxu0
      %3491 = vmatprep.mubr.bf16.mxu0 %v2523
      %3492 = vmatmul.mubr.bf16.gmra.mrb[0].mxu0 %v2475
      %v3493 = vpop.f32.mrb[0].mxu0
      %v3494 = vadd.f32 0.0, %v3493
      %v3495 = vpop.f32.mrb[0].mxu0
      %v3496 = vpop.f32.mrb[0].mxu0
      %v3497 = vadd.f32 0.0, %v3496
      %v3498 = vpop.f32.mrb[0].mxu0
      %3499 = vmatprep.mubr.bf16.mxu0 %v2524
      %3500 = vmatmul.mubr.bf16.gmra.mrb[0].mxu0 %v2476
      %v3501 = vpop.f32.mrb[0].mxu0
      %v3502 = vadd.f32 0.0, %v3501
      %v3503 = vpop.f32.mrb[0].mxu0
      %v3504 = vpop.f32.mrb[0].mxu0
      %v3505 = vadd.f32 0.0, %v3504
      %v3506 = vpop.f32.mrb[0].mxu0
      %3507 = vmatprep.mubr.bf16.mxu0 %v2525
      %3508 = vmatmul.mubr.bf16.gmra.mrb[0].mxu0 %v2477
      %v3509 = vpop.f32.mrb[0].mxu0
      %v3510 = vadd.f32 0.0, %v3509
      %v3511 = vpop.f32.mrb[0].mxu0
      %v3512 = vpop.f32.mrb[0].mxu0
      %v3513 = vadd.f32 0.0, %v3512
      %v3514 = vpop.f32.mrb[0].mxu0
      %3515 = vmatprep.mubr.bf16.mxu0 %v2526
      %3516 = vmatmul.mubr.bf16.gmra.mrb[0].mxu0 %v2478
      %v3517 = vpop.f32.mrb[0].mxu0
      %v3518 = vadd.f32 0.0, %v3517
      %v3519 = vpop.f32.mrb[0].mxu0
      %v3520 = vpop.f32.mrb[0].mxu0
      %v3521 = vadd.f32 0.0, %v3520
      %v3522 = vpop.f32.mrb[0].mxu0
      %3523 = vmatprep.mubr.bf16.mxu0 %v2527
      %3524 = vmatmul.mubr.bf16.gmra.mrb[0].mxu0 %v2479
      %v3525 = vpop.f32.mrb[0].mxu0
      %v3526 = vadd.f32 0.0, %v3525
      %v3527 = vpop.f32.mrb[0].mxu0
      %v3528 = vpop.f32.mrb[0].mxu0
      %v3529 = vadd.f32 0.0, %v3528
      %v3530 = vpop.f32.mrb[0].mxu0
      %3531 = vmatprep.mubr.bf16.mxu0 %v2528
      %3532 = vmatmul.mubr.bf16.gmra.mrb[0].mxu0 %v2480
      %v3533 = vpop.f32.mrb[0].mxu0
      %v3534 = vadd.f32 0.0, %v3533
      %v3535 = vpop.f32.mrb[0].mxu0
      %v3536 = vpop.f32.mrb[0].mxu0
      %v3537 = vadd.f32 0.0, %v3536
      %v3538 = vpop.f32.mrb[0].mxu0
      %3539 = vmatprep.mubr.bf16.mxu0 %v2529
      %3540 = vmatmul.mubr.bf16.gmra.mrb[0].mxu0 %v2481
      %v3541 = vpop.f32.mrb[0].mxu0
      %v3542 = vadd.f32 0.0, %v3541
      %v3543 = vpop.f32.mrb[0].mxu0
      %v3544 = vpop.f32.mrb[0].mxu0
      %v3545 = vadd.f32 0.0, %v3544
      %v3546 = vpop.f32.mrb[0].mxu0
      %3547 = vmatprep.mubr.bf16.mxu0 %v2530
      %3548 = vmatmul.mubr.bf16.gmra.mrb[0].mxu0 %v2482
      %v3549 = vpop.f32.mrb[0].mxu0
      %v3550 = vadd.f32 0.0, %v3549
      %v3551 = vpop.f32.mrb[0].mxu0
      %v3552 = vpop.f32.mrb[0].mxu0
      %v3553 = vadd.f32 0.0, %v3552
      %v3554 = vpop.f32.mrb[0].mxu0
      %3555 = vmatprep.mubr.bf16.mxu0 %v2531
      %3556 = vmatmul.mubr.bf16.gmra.mrb[0].mxu0 %v2483
      %v3557 = vpop.f32.mrb[0].mxu0
      %v3558 = vadd.f32 0.0, %v3557
      %v3559 = vpop.f32.mrb[0].mxu0
      %v3560 = vpop.f32.mrb[0].mxu0
      %v3561 = vadd.f32 0.0, %v3560
      %v3562 = vpop.f32.mrb[0].mxu0
      %3563 = vmatprep.mubr.bf16.mxu0 %v2532
      %3564 = vmatmul.mubr.bf16.gmra.mrb[0].mxu0 %v2484
      %v3565 = vpop.f32.mrb[0].mxu0
      %v3566 = vadd.f32 0.0, %v3565
      %v3567 = vpop.f32.mrb[0].mxu0
      %v3568 = vpop.f32.mrb[0].mxu0
      %v3569 = vadd.f32 0.0, %v3568
      %v3570 = vpop.f32.mrb[0].mxu0
      %3571 = vmatprep.mubr.bf16.mxu0 %v2533
      %3572 = vmatmul.mubr.bf16.gmra.mrb[0].mxu0 %v2485
      %v3573 = vpop.f32.mrb[0].mxu0
      %v3574 = vadd.f32 0.0, %v3573
      %v3575 = vpop.f32.mrb[0].mxu0
      %v3576 = vpop.f32.mrb[0].mxu0
      %v3577 = vadd.f32 0.0, %v3576
      %v3578 = vpop.f32.mrb[0].mxu0
      %3579 = vmatprep.mubr.bf16.mxu0 %v2534
      %3580 = vmatmul.mubr.bf16.gmra.mrb[0].mxu0 %v2486
      %v3581 = vpop.f32.mrb[0].mxu0
      %v3582 = vadd.f32 0.0, %v3581
      %v3583 = vpop.f32.mrb[0].mxu0
      %v3584 = vpop.f32.mrb[0].mxu0
      %v3585 = vadd.f32 0.0, %v3584
      %v3586 = vpop.f32.mrb[0].mxu0
      %3587 = vmatprep.mubr.bf16.mxu0 %v2535
      %3588 = vmatmul.mubr.bf16.gmra.mrb[0].mxu0 %v2487
      %v3589 = vpop.f32.mrb[0].mxu0
      %v3590 = vadd.f32 0.0, %v3589
      %v3591 = vpop.f32.mrb[0].mxu0
      %v3592 = vpop.f32.mrb[0].mxu0
      %v3593 = vadd.f32 0.0, %v3592
      %v3594 = vpop.f32.mrb[0].mxu0
      %3595 = vmatprep.mubr.bf16.mxu0 %v2536
      %3596 = vmatmul.mubr.bf16.gmra.mrb[0].mxu0 %v2488
      %v3597 = vpop.f32.mrb[0].mxu0
      %v3598 = vadd.f32 0.0, %v3597
      %v3599 = vpop.f32.mrb[0].mxu0
      %v3600 = vpop.f32.mrb[0].mxu0
      %v3601 = vadd.f32 0.0, %v3600
      %v3602 = vpop.f32.mrb[0].mxu0
      %3603 = vmatprep.mubr.bf16.mxu0 %v2537
      %3604 = vmatmul.mubr.bf16.gmra.mrb[0].mxu0 %v2489
      %v3605 = vpop.f32.mrb[0].mxu0
      %v3606 = vadd.f32 0.0, %v3605
      %v3607 = vpop.f32.mrb[0].mxu0
      %v3608 = vpop.f32.mrb[0].mxu0
      %v3609 = vadd.f32 0.0, %v3608
      %v3610 = vpop.f32.mrb[0].mxu0
      %3611 = vdwg.mxu0
      %3612 = vmatprep.subr.bf16.mxu0 0
      %3613 = vmatpush1.bf16.msra.mxu0 %v3323
      %3614 = vmatprep.subr.bf16.mxu0 0
      %3615 = vmatpush1.bf16.msra.mxu0 %v3324
      %3616 = vmatprep.subr.bf16.mxu0 0
      %3617 = vmatpush1.bf16.msra.mxu0 %v3325
      %3618 = vmatprep.subr.bf16.mxu0 0
      %3619 = vmatpush1.bf16.msra.mxu0 %v3326
      %3620 = vmatprep.subr.bf16.mxu0 0
      %3621 = vmatpush1.bf16.msra.mxu0 %v3327
      %3622 = vmatprep.subr.bf16.mxu0 0
      %3623 = vmatpush1.bf16.msra.mxu0 %v3328
      %3624 = vmatprep.subr.bf16.mxu0 0
      %3625 = vmatpush1.bf16.msra.mxu0 %v3329
      %3626 = vmatprep.subr.bf16.mxu0 0
      %3627 = vmatpush1.bf16.msra.mxu0 %v3330
      %3628 = vmatprep.subr.bf16.mxu0 0
      %3629 = vmatpush1.bf16.msra.mxu0 %v3331
      %3630 = vmatprep.subr.bf16.mxu0 0
      %3631 = vmatpush1.bf16.msra.mxu0 %v3332
      %3632 = vmatprep.subr.bf16.mxu0 0
      %3633 = vmatpush1.bf16.msra.mxu0 %v3333
      %3634 = vmatprep.subr.bf16.mxu0 0
      %3635 = vmatpush1.bf16.msra.mxu0 %v3334
      %3636 = vmatprep.subr.bf16.mxu0 0
      %3637 = vmatpush1.bf16.msra.mxu0 %v3335
      %3638 = vmatprep.subr.bf16.mxu0 0
      %3639 = vmatpush1.bf16.msra.mxu0 %v3336
      %3640 = vmatprep.subr.bf16.mxu0 0
      %3641 = vmatpush1.bf16.msra.mxu0 %v3337
      %3642 = vmatprep.subr.bf16.mxu0 0
      %3643 = vmatpush1.bf16.msra.mxu0 %v3338
      %3644 = vmatprep.mubr.bf16.mxu0 %v2618
      %3645 = vmatmul.mubr.bf16.gmra.mrb[0].mxu0 %v2570
      %v3646 = vpop.f32.mrb[0].mxu0
      %v3647 = vadd.f32 %v3486, %v3646
      %v3648 = vpop.f32.mrb[0].mxu0
      %v3649 = vpop.f32.mrb[0].mxu0
      %v3650 = vadd.f32 %v3489, %v3649
      %v3651 = vpop.f32.mrb[0].mxu0
      %3652 = vmatprep.mubr.bf16.mxu0 %v2619
      %3653 = vmatmul.mubr.bf16.gmra.mrb[0].mxu0 %v2571
      %v3654 = vpop.f32.mrb[0].mxu0
      %v3655 = vadd.f32 %v3494, %v3654
      %v3656 = vpop.f32.mrb[0].mxu0
      %v3657 = vpop.f32.mrb[0].mxu0
      %v3658 = vadd.f32 %v3497, %v3657
      %v3659 = vpop.f32.mrb[0].mxu0
      %3660 = vmatprep.mubr.bf16.mxu0 %v2620
      %3661 = vmatmul.mubr.bf16.gmra.mrb[0].mxu0 %v2572
      %v3662 = vpop.f32.mrb[0].mxu0
      %v3663 = vadd.f32 %v3502, %v3662
      %v3664 = vpop.f32.mrb[0].mxu0
      %v3665 = vpop.f32.mrb[0].mxu0
      %v3666 = vadd.f32 %v3505, %v3665
      %v3667 = vpop.f32.mrb[0].mxu0
      %3668 = vmatprep.mubr.bf16.mxu0 %v2621
      %3669 = vmatmul.mubr.bf16.gmra.mrb[0].mxu0 %v2573
      %v3670 = vpop.f32.mrb[0].mxu0
      %v3671 = vadd.f32 %v3510, %v3670
      %v3672 = vpop.f32.mrb[0].mxu0
      %v3673 = vpop.f32.mrb[0].mxu0
      %v3674 = vadd.f32 %v3513, %v3673
      %v3675 = vpop.f32.mrb[0].mxu0
      %3676 = vmatprep.mubr.bf16.mxu0 %v2622
      %3677 = vmatmul.mubr.bf16.gmra.mrb[0].mxu0 %v2574
      %v3678 = vpop.f32.mrb[0].mxu0
      %v3679 = vadd.f32 %v3518, %v3678
      %v3680 = vpop.f32.mrb[0].mxu0
      %v3681 = vpop.f32.mrb[0].mxu0
      %v3682 = vadd.f32 %v3521, %v3681
      %v3683 = vpop.f32.mrb[0].mxu0
      %3684 = vmatprep.mubr.bf16.mxu0 %v2623
      %3685 = vmatmul.mubr.bf16.gmra.mrb[0].mxu0 %v2575
      %v3686 = vpop.f32.mrb[0].mxu0
      %v3687 = vadd.f32 %v3526, %v3686
      %v3688 = vpop.f32.mrb[0].mxu0
      %v3689 = vpop.f32.mrb[0].mxu0
      %v3690 = vadd.f32 %v3529, %v3689
      %v3691 = vpop.f32.mrb[0].mxu0
      %3692 = vmatprep.mubr.bf16.mxu0 %v2624
      %3693 = vmatmul.mubr.bf16.gmra.mrb[0].mxu0 %v2576
      %v3694 = vpop.f32.mrb[0].mxu0
      %v3695 = vadd.f32 %v3534, %v3694
      %v3696 = vpop.f32.mrb[0].mxu0
      %v3697 = vpop.f32.mrb[0].mxu0
      %v3698 = vadd.f32 %v3537, %v3697
      %v3699 = vpop.f32.mrb[0].mxu0
      %3700 = vmatprep.mubr.bf16.mxu0 %v2625
      %3701 = vmatmul.mubr.bf16.gmra.mrb[0].mxu0 %v2577
      %v3702 = vpop.f32.mrb[0].mxu0
      %v3703 = vadd.f32 %v3542, %v3702
      %v3704 = vpop.f32.mrb[0].mxu0
      %v3705 = vpop.f32.mrb[0].mxu0
      %v3706 = vadd.f32 %v3545, %v3705
      %v3707 = vpop.f32.mrb[0].mxu0
      %3708 = vmatprep.mubr.bf16.mxu0 %v2626
      %3709 = vmatmul.mubr.bf16.gmra.mrb[0].mxu0 %v2578
      %v3710 = vpop.f32.mrb[0].mxu0
      %v3711 = vadd.f32 %v3550, %v3710
      %v3712 = vpop.f32.mrb[0].mxu0
      %v3713 = vpop.f32.mrb[0].mxu0
      %v3714 = vadd.f32 %v3553, %v3713
      %v3715 = vpop.f32.mrb[0].mxu0
      %3716 = vmatprep.mubr.bf16.mxu0 %v2627
      %3717 = vmatmul.mubr.bf16.gmra.mrb[0].mxu0 %v2579
      %v3718 = vpop.f32.mrb[0].mxu0
      %v3719 = vadd.f32 %v3558, %v3718
      %v3720 = vpop.f32.mrb[0].mxu0
      %v3721 = vpop.f32.mrb[0].mxu0
      %v3722 = vadd.f32 %v3561, %v3721
      %v3723 = vpop.f32.mrb[0].mxu0
      %3724 = vmatprep.mubr.bf16.mxu0 %v2628
      %3725 = vmatmul.mubr.bf16.gmra.mrb[0].mxu0 %v2580
      %v3726 = vpop.f32.mrb[0].mxu0
      %v3727 = vadd.f32 %v3566, %v3726
      %v3728 = vpop.f32.mrb[0].mxu0
      %v3729 = vpop.f32.mrb[0].mxu0
      %v3730 = vadd.f32 %v3569, %v3729
      %v3731 = vpop.f32.mrb[0].mxu0
      %3732 = vmatprep.mubr.bf16.mxu0 %v2629
      %3733 = vmatmul.mubr.bf16.gmra.mrb[0].mxu0 %v2581
      %v3734 = vpop.f32.mrb[0].mxu0
      %v3735 = vadd.f32 %v3574, %v3734
      %v3736 = vpop.f32.mrb[0].mxu0
      %v3737 = vpop.f32.mrb[0].mxu0
      %v3738 = vadd.f32 %v3577, %v3737
      %v3739 = vpop.f32.mrb[0].mxu0
      %3740 = vmatprep.mubr.bf16.mxu0 %v2630
      %3741 = vmatmul.mubr.bf16.gmra.mrb[0].mxu0 %v2582
      %v3742 = vpop.f32.mrb[0].mxu0
      %v3743 = vadd.f32 %v3582, %v3742
      %v3744 = vpop.f32.mrb[0].mxu0
      %v3745 = vpop.f32.mrb[0].mxu0
      %v3746 = vadd.f32 %v3585, %v3745
      %v3747 = vpop.f32.mrb[0].mxu0
      %3748 = vmatprep.mubr.bf16.mxu0 %v2631
      %3749 = vmatmul.mubr.bf16.gmra.mrb[0].mxu0 %v2583
      %v3750 = vpop.f32.mrb[0].mxu0
      %v3751 = vadd.f32 %v3590, %v3750
      %v3752 = vpop.f32.mrb[0].mxu0
      %v3753 = vpop.f32.mrb[0].mxu0
      %v3754 = vadd.f32 %v3593, %v3753
      %v3755 = vpop.f32.mrb[0].mxu0
      %3756 = vmatprep.mubr.bf16.mxu0 %v2632
      %3757 = vmatmul.mubr.bf16.gmra.mrb[0].mxu0 %v2584
      %v3758 = vpop.f32.mrb[0].mxu0
      %v3759 = vadd.f32 %v3598, %v3758
      %v3760 = vpop.f32.mrb[0].mxu0
      %v3761 = vpop.f32.mrb[0].mxu0
      %v3762 = vadd.f32 %v3601, %v3761
      %v3763 = vpop.f32.mrb[0].mxu0
      %3764 = vmatprep.mubr.bf16.mxu0 %v2633
      %3765 = vmatmul.mubr.bf16.gmra.mrb[0].mxu0 %v2585
      %v3766 = vpop.f32.mrb[0].mxu0
      %v3767 = vadd.f32 %v3606, %v3766
      %v3768 = vpop.f32.mrb[0].mxu0
      %v3769 = vpop.f32.mrb[0].mxu0
      %v3770 = vadd.f32 %v3609, %v3769
      %v3771 = vpop.f32.mrb[0].mxu0
      %3772 = vdwg.mxu0
      %3773 = vmatprep.subr.bf16.mxu0 0
      %3774 = vmatpush1.bf16.msra.mxu0 %v3339
      %3775 = vmatprep.subr.bf16.mxu0 0
      %3776 = vmatpush1.bf16.msra.mxu0 %v3340
      %3777 = vmatprep.subr.bf16.mxu0 0
      %3778 = vmatpush1.bf16.msra.mxu0 %v3341
      %3779 = vmatprep.subr.bf16.mxu0 0
      %3780 = vmatpush1.bf16.msra.mxu0 %v3342
      %3781 = vmatprep.subr.bf16.mxu0 0
      %3782 = vmatpush1.bf16.msra.mxu0 %v3343
      %3783 = vmatprep.subr.bf16.mxu0 0
      %3784 = vmatpush1.bf16.msra.mxu0 %v3344
      %3785 = vmatprep.subr.bf16.mxu0 0
      %3786 = vmatpush1.bf16.msra.mxu0 %v3345
      %3787 = vmatprep.subr.bf16.mxu0 0
      %3788 = vmatpush1.bf16.msra.mxu0 %v3346
      %3789 = vmatprep.subr.bf16.mxu0 0
      %3790 = vmatpush1.bf16.msra.mxu0 %v3347
      %3791 = vmatprep.subr.bf16.mxu0 0
      %3792 = vmatpush1.bf16.msra.mxu0 %v3348
      %3793 = vmatprep.subr.bf16.mxu0 0
      %3794 = vmatpush1.bf16.msra.mxu0 %v3349
      %3795 = vmatprep.subr.bf16.mxu0 0
      %3796 = vmatpush1.bf16.msra.mxu0 %v3350
      %3797 = vmatprep.subr.bf16.mxu0 0
      %3798 = vmatpush1.bf16.msra.mxu0 %v3351
      %3799 = vmatprep.subr.bf16.mxu0 0
      %3800 = vmatpush1.bf16.msra.mxu0 %v3352
      %3801 = vmatprep.subr.bf16.mxu0 0
      %3802 = vmatpush1.bf16.msra.mxu0 %v3353
      %3803 = vmatprep.subr.bf16.mxu0 0
      %3804 = vmatpush1.bf16.msra.mxu0 %v3354
      %3805 = vmatprep.mubr.bf16.mxu0 %v2714
      %3806 = vmatmul.mubr.bf16.gmra.mrb[0].mxu0 %v2666
      %v3807 = vpop.f32.mrb[0].mxu0
      %v3808 = vadd.f32 %v3647, %v3807
      %v3809 = vpop.f32.mrb[0].mxu0
      %v3810 = vpop.f32.mrb[0].mxu0
      %v3811 = vadd.f32 %v3650, %v3810
      %v3812 = vpop.f32.mrb[0].mxu0
      %3813 = vmatprep.mubr.bf16.mxu0 %v2715
      %3814 = vmatmul.mubr.bf16.gmra.mrb[0].mxu0 %v2667
      %v3815 = vpop.f32.mrb[0].mxu0
      %v3816 = vadd.f32 %v3655, %v3815
      %v3817 = vpop.f32.mrb[0].mxu0
      %v3818 = vpop.f32.mrb[0].mxu0
      %v3819 = vadd.f32 %v3658, %v3818
      %v3820 = vpop.f32.mrb[0].mxu0
      %3821 = vmatprep.mubr.bf16.mxu0 %v2716
      %3822 = vmatmul.mubr.bf16.gmra.mrb[0].mxu0 %v2668
      %v3823 = vpop.f32.mrb[0].mxu0
      %v3824 = vadd.f32 %v3663, %v3823
      %v3825 = vpop.f32.mrb[0].mxu0
      %v3826 = vpop.f32.mrb[0].mxu0
      %v3827 = vadd.f32 %v3666, %v3826
      %v3828 = vpop.f32.mrb[0].mxu0
      %3829 = vmatprep.mubr.bf16.mxu0 %v2717
      %3830 = vmatmul.mubr.bf16.gmra.mrb[0].mxu0 %v2669
      %v3831 = vpop.f32.mrb[0].mxu0
      %v3832 = vadd.f32 %v3671, %v3831
      %v3833 = vpop.f32.mrb[0].mxu0
      %v3834 = vpop.f32.mrb[0].mxu0
      %v3835 = vadd.f32 %v3674, %v3834
      %v3836 = vpop.f32.mrb[0].mxu0
      %3837 = vmatprep.mubr.bf16.mxu0 %v2718
      %3838 = vmatmul.mubr.bf16.gmra.mrb[0].mxu0 %v2670
      %v3839 = vpop.f32.mrb[0].mxu0
      %v3840 = vadd.f32 %v3679, %v3839
      %v3841 = vpop.f32.mrb[0].mxu0
      %v3842 = vpop.f32.mrb[0].mxu0
      %v3843 = vadd.f32 %v3682, %v3842
      %v3844 = vpop.f32.mrb[0].mxu0
      %3845 = vmatprep.mubr.bf16.mxu0 %v2719
      %3846 = vmatmul.mubr.bf16.gmra.mrb[0].mxu0 %v2671
      %v3847 = vpop.f32.mrb[0].mxu0
      %v3848 = vadd.f32 %v3687, %v3847
      %v3849 = vpop.f32.mrb[0].mxu0
      %v3850 = vpop.f32.mrb[0].mxu0
      %v3851 = vadd.f32 %v3690, %v3850
      %v3852 = vpop.f32.mrb[0].mxu0
      %3853 = vmatprep.mubr.bf16.mxu0 %v2720
      %3854 = vmatmul.mubr.bf16.gmra.mrb[0].mxu0 %v2672
      %v3855 = vpop.f32.mrb[0].mxu0
      %v3856 = vadd.f32 %v3695, %v3855
      %v3857 = vpop.f32.mrb[0].mxu0
      %v3858 = vpop.f32.mrb[0].mxu0
      %v3859 = vadd.f32 %v3698, %v3858
      %v3860 = vpop.f32.mrb[0].mxu0
      %3861 = vmatprep.mubr.bf16.mxu0 %v2721
      %3862 = vmatmul.mubr.bf16.gmra.mrb[0].mxu0 %v2673
      %v3863 = vpop.f32.mrb[0].mxu0
      %v3864 = vadd.f32 %v3703, %v3863
      %v3865 = vpop.f32.mrb[0].mxu0
      %v3866 = vpop.f32.mrb[0].mxu0
      %v3867 = vadd.f32 %v3706, %v3866
      %v3868 = vpop.f32.mrb[0].mxu0
      %3869 = vmatprep.mubr.bf16.mxu0 %v2722
      %3870 = vmatmul.mubr.bf16.gmra.mrb[0].mxu0 %v2674
      %v3871 = vpop.f32.mrb[0].mxu0
      %v3872 = vadd.f32 %v3711, %v3871
      %v3873 = vpop.f32.mrb[0].mxu0
      %v3874 = vpop.f32.mrb[0].mxu0
      %v3875 = vadd.f32 %v3714, %v3874
      %v3876 = vpop.f32.mrb[0].mxu0
      %3877 = vmatprep.mubr.bf16.mxu0 %v2723
      %3878 = vmatmul.mubr.bf16.gmra.mrb[0].mxu0 %v2675
      %v3879 = vpop.f32.mrb[0].mxu0
      %v3880 = vadd.f32 %v3719, %v3879
      %v3881 = vpop.f32.mrb[0].mxu0
      %v3882 = vpop.f32.mrb[0].mxu0
      %v3883 = vadd.f32 %v3722, %v3882
      %v3884 = vpop.f32.mrb[0].mxu0
      %3885 = vmatprep.mubr.bf16.mxu0 %v2724
      %3886 = vmatmul.mubr.bf16.gmra.mrb[0].mxu0 %v2676
      %v3887 = vpop.f32.mrb[0].mxu0
      %v3888 = vadd.f32 %v3727, %v3887
      %v3889 = vpop.f32.mrb[0].mxu0
      %v3890 = vpop.f32.mrb[0].mxu0
      %v3891 = vadd.f32 %v3730, %v3890
      %v3892 = vpop.f32.mrb[0].mxu0
      %3893 = vmatprep.mubr.bf16.mxu0 %v2725
      %3894 = vmatmul.mubr.bf16.gmra.mrb[0].mxu0 %v2677
      %v3895 = vpop.f32.mrb[0].mxu0
      %v3896 = vadd.f32 %v3735, %v3895
      %v3897 = vpop.f32.mrb[0].mxu0
      %v3898 = vpop.f32.mrb[0].mxu0
      %v3899 = vadd.f32 %v3738, %v3898
      %v3900 = vpop.f32.mrb[0].mxu0
      %3901 = vmatprep.mubr.bf16.mxu0 %v2726
      %3902 = vmatmul.mubr.bf16.gmra.mrb[0].mxu0 %v2678
      %v3903 = vpop.f32.mrb[0].mxu0
      %v3904 = vadd.f32 %v3743, %v3903
      %v3905 = vpop.f32.mrb[0].mxu0
      %v3906 = vpop.f32.mrb[0].mxu0
      %v3907 = vadd.f32 %v3746, %v3906
      %v3908 = vpop.f32.mrb[0].mxu0
      %3909 = vmatprep.mubr.bf16.mxu0 %v2727
      %3910 = vmatmul.mubr.bf16.gmra.mrb[0].mxu0 %v2679
      %v3911 = vpop.f32.mrb[0].mxu0
      %v3912 = vadd.f32 %v3751, %v3911
      %v3913 = vpop.f32.mrb[0].mxu0
      %v3914 = vpop.f32.mrb[0].mxu0
      %v3915 = vadd.f32 %v3754, %v3914
      %v3916 = vpop.f32.mrb[0].mxu0
      %3917 = vmatprep.mubr.bf16.mxu0 %v2728
      %3918 = vmatmul.mubr.bf16.gmra.mrb[0].mxu0 %v2680
      %v3919 = vpop.f32.mrb[0].mxu0
      %v3920 = vadd.f32 %v3759, %v3919
      %v3921 = vpop.f32.mrb[0].mxu0
      %v3922 = vpop.f32.mrb[0].mxu0
      %v3923 = vadd.f32 %v3762, %v3922
      %v3924 = vpop.f32.mrb[0].mxu0
      %3925 = vmatprep.mubr.bf16.mxu0 %v2729
      %3926 = vmatmul.mubr.bf16.gmra.mrb[0].mxu0 %v2681
      %v3927 = vpop.f32.mrb[0].mxu0
      %v3928 = vadd.f32 %v3767, %v3927
      %v3929 = vpop.f32.mrb[0].mxu0
      %v3930 = vpop.f32.mrb[0].mxu0
      %v3931 = vadd.f32 %v3770, %v3930
      %v3932 = vpop.f32.mrb[0].mxu0
      %3933 = vdwg.mxu0
      %3934 = vmatprep.subr.bf16.mxu0 0
      %3935 = vmatpush1.bf16.msra.mxu0 %v3355
      %3936 = vmatprep.subr.bf16.mxu0 0
      %3937 = vmatpush1.bf16.msra.mxu0 %v3356
      %3938 = vmatprep.subr.bf16.mxu0 0
      %3939 = vmatpush1.bf16.msra.mxu0 %v3357
      %3940 = vmatprep.subr.bf16.mxu0 0
      %3941 = vmatpush1.bf16.msra.mxu0 %v3358
      %3942 = vmatprep.subr.bf16.mxu0 0
      %3943 = vmatpush1.bf16.msra.mxu0 %v3359
      %3944 = vmatprep.subr.bf16.mxu0 0
      %3945 = vmatpush1.bf16.msra.mxu0 %v3360
      %3946 = vmatprep.subr.bf16.mxu0 0
      %3947 = vmatpush1.bf16.msra.mxu0 %v3361
      %3948 = vmatprep.subr.bf16.mxu0 0
      %3949 = vmatpush1.bf16.msra.mxu0 %v3362
      %3950 = vmatprep.subr.bf16.mxu0 0
      %3951 = vmatpush1.bf16.msra.mxu0 %v3363
      %3952 = vmatprep.subr.bf16.mxu0 0
      %3953 = vmatpush1.bf16.msra.mxu0 %v3364
      %3954 = vmatprep.subr.bf16.mxu0 0
      %3955 = vmatpush1.bf16.msra.mxu0 %v3365
      %3956 = vmatprep.subr.bf16.mxu0 0
      %3957 = vmatpush1.bf16.msra.mxu0 %v3366
      %3958 = vmatprep.subr.bf16.mxu0 0
      %3959 = vmatpush1.bf16.msra.mxu0 %v3367
      %3960 = vmatprep.subr.bf16.mxu0 0
      %3961 = vmatpush1.bf16.msra.mxu0 %v3368
      %3962 = vmatprep.subr.bf16.mxu0 0
      %3963 = vmatpush1.bf16.msra.mxu0 %v3369
      %3964 = vmatprep.subr.bf16.mxu0 0
      %3965 = vmatpush1.bf16.msra.mxu0 %v3370
      %3966 = vmatprep.mubr.bf16.mxu0 %v2811
      %3967 = vmatmul.mubr.bf16.gmra.mrb[0].mxu0 %v2763
      %v3968 = vpop.f32.mrb[0].mxu0
      %v3969 = vadd.f32 %v3808, %v3968
      %v3970 = vpop.f32.mrb[0].mxu0
      %v3971 = vpop.f32.mrb[0].mxu0
      %v3972 = vadd.f32 %v3811, %v3971
      %v3973 = vpop.f32.mrb[0].mxu0
      %3974 = vmatprep.mubr.bf16.mxu0 %v2812
      %3975 = vmatmul.mubr.bf16.gmra.mrb[0].mxu0 %v2764
      %v3976 = vpop.f32.mrb[0].mxu0
      %v3977 = vadd.f32 %v3816, %v3976
      %v3978 = vpop.f32.mrb[0].mxu0
      %v3979 = vpop.f32.mrb[0].mxu0
      %v3980 = vadd.f32 %v3819, %v3979
      %v3981 = vpop.f32.mrb[0].mxu0
      %3982 = vmatprep.mubr.bf16.mxu0 %v2813
      %3983 = vmatmul.mubr.bf16.gmra.mrb[0].mxu0 %v2765
      %v3984 = vpop.f32.mrb[0].mxu0
      %v3985 = vadd.f32 %v3824, %v3984
      %v3986 = vpop.f32.mrb[0].mxu0
      %v3987 = vpop.f32.mrb[0].mxu0
      %v3988 = vadd.f32 %v3827, %v3987
      %v3989 = vpop.f32.mrb[0].mxu0
      %3990 = vmatprep.mubr.bf16.mxu0 %v2814
      %3991 = vmatmul.mubr.bf16.gmra.mrb[0].mxu0 %v2766
      %v3992 = vpop.f32.mrb[0].mxu0
      %v3993 = vadd.f32 %v3832, %v3992
      %v3994 = vpop.f32.mrb[0].mxu0
      %v3995 = vpop.f32.mrb[0].mxu0
      %v3996 = vadd.f32 %v3835, %v3995
      %v3997 = vpop.f32.mrb[0].mxu0
      %3998 = vmatprep.mubr.bf16.mxu0 %v2815
      %3999 = vmatmul.mubr.bf16.gmra.mrb[0].mxu0 %v2767
      %v4000 = vpop.f32.mrb[0].mxu0
      %v4001 = vadd.f32 %v3840, %v4000
      %v4002 = vpop.f32.mrb[0].mxu0
      %v4003 = vpop.f32.mrb[0].mxu0
      %v4004 = vadd.f32 %v3843, %v4003
      %v4005 = vpop.f32.mrb[0].mxu0
      %4006 = vmatprep.mubr.bf16.mxu0 %v2816
      %4007 = vmatmul.mubr.bf16.gmra.mrb[0].mxu0 %v2768
      %v4008 = vpop.f32.mrb[0].mxu0
      %v4009 = vadd.f32 %v3848, %v4008
      %v4010 = vpop.f32.mrb[0].mxu0
      %v4011 = vpop.f32.mrb[0].mxu0
      %v4012 = vadd.f32 %v3851, %v4011
      %v4013 = vpop.f32.mrb[0].mxu0
      %4014 = vmatprep.mubr.bf16.mxu0 %v2817
      %4015 = vmatmul.mubr.bf16.gmra.mrb[0].mxu0 %v2769
      %v4016 = vpop.f32.mrb[0].mxu0
      %v4017 = vadd.f32 %v3856, %v4016
      %v4018 = vpop.f32.mrb[0].mxu0
      %v4019 = vpop.f32.mrb[0].mxu0
      %v4020 = vadd.f32 %v3859, %v4019
      %v4021 = vpop.f32.mrb[0].mxu0
      %4022 = vmatprep.mubr.bf16.mxu0 %v2818
      %4023 = vmatmul.mubr.bf16.gmra.mrb[0].mxu0 %v2770
      %v4024 = vpop.f32.mrb[0].mxu0
      %v4025 = vadd.f32 %v3864, %v4024
      %v4026 = vpop.f32.mrb[0].mxu0
      %v4027 = vpop.f32.mrb[0].mxu0
      %v4028 = vadd.f32 %v3867, %v4027
      %v4029 = vpop.f32.mrb[0].mxu0
      %4030 = vmatprep.mubr.bf16.mxu0 %v2819
      %4031 = vmatmul.mubr.bf16.gmra.mrb[0].mxu0 %v2771
      %v4032 = vpop.f32.mrb[0].mxu0
      %v4033 = vadd.f32 %v3872, %v4032
      %v4034 = vpop.f32.mrb[0].mxu0
      %v4035 = vpop.f32.mrb[0].mxu0
      %v4036 = vadd.f32 %v3875, %v4035
      %v4037 = vpop.f32.mrb[0].mxu0
      %4038 = vmatprep.mubr.bf16.mxu0 %v2820
      %4039 = vmatmul.mubr.bf16.gmra.mrb[0].mxu0 %v2772
      %v4040 = vpop.f32.mrb[0].mxu0
      %v4041 = vadd.f32 %v3880, %v4040
      %v4042 = vpop.f32.mrb[0].mxu0
      %v4043 = vpop.f32.mrb[0].mxu0
      %v4044 = vadd.f32 %v3883, %v4043
      %v4045 = vpop.f32.mrb[0].mxu0
      %4046 = vmatprep.mubr.bf16.mxu0 %v2821
      %4047 = vmatmul.mubr.bf16.gmra.mrb[0].mxu0 %v2773
      %v4048 = vpop.f32.mrb[0].mxu0
      %v4049 = vadd.f32 %v3888, %v4048
      %v4050 = vpop.f32.mrb[0].mxu0
      %v4051 = vpop.f32.mrb[0].mxu0
      %v4052 = vadd.f32 %v3891, %v4051
      %v4053 = vpop.f32.mrb[0].mxu0
      %4054 = vmatprep.mubr.bf16.mxu0 %v2822
      %4055 = vmatmul.mubr.bf16.gmra.mrb[0].mxu0 %v2774
      %v4056 = vpop.f32.mrb[0].mxu0
      %v4057 = vadd.f32 %v3896, %v4056
      %v4058 = vpop.f32.mrb[0].mxu0
      %v4059 = vpop.f32.mrb[0].mxu0
      %v4060 = vadd.f32 %v3899, %v4059
      %v4061 = vpop.f32.mrb[0].mxu0
      %4062 = vmatprep.mubr.bf16.mxu0 %v2823
      %4063 = vmatmul.mubr.bf16.gmra.mrb[0].mxu0 %v2775
      %v4064 = vpop.f32.mrb[0].mxu0
      %v4065 = vadd.f32 %v3904, %v4064
      %v4066 = vpop.f32.mrb[0].mxu0
      %v4067 = vpop.f32.mrb[0].mxu0
      %v4068 = vadd.f32 %v3907, %v4067
      %v4069 = vpop.f32.mrb[0].mxu0
      %4070 = vmatprep.mubr.bf16.mxu0 %v2824
      %4071 = vmatmul.mubr.bf16.gmra.mrb[0].mxu0 %v2776
      %v4072 = vpop.f32.mrb[0].mxu0
      %v4073 = vadd.f32 %v3912, %v4072
      %v4074 = vpop.f32.mrb[0].mxu0
      %v4075 = vpop.f32.mrb[0].mxu0
      %v4076 = vadd.f32 %v3915, %v4075
      %v4077 = vpop.f32.mrb[0].mxu0
      %4078 = vmatprep.mubr.bf16.mxu0 %v2825
      %4079 = vmatmul.mubr.bf16.gmra.mrb[0].mxu0 %v2777
      %v4080 = vpop.f32.mrb[0].mxu0
      %v4081 = vadd.f32 %v3920, %v4080
      %v4082 = vpop.f32.mrb[0].mxu0
      %v4083 = vpop.f32.mrb[0].mxu0
      %v4084 = vadd.f32 %v3923, %v4083
      %v4085 = vpop.f32.mrb[0].mxu0
      %4086 = vmatprep.mubr.bf16.mxu0 %v2826
      %4087 = vmatmul.mubr.bf16.gmra.mrb[0].mxu0 %v2778
      %v4088 = vpop.f32.mrb[0].mxu0
      %v4089 = vadd.f32 %v3928, %v4088
      %v4090 = vpop.f32.mrb[0].mxu0
      %v4091 = vpop.f32.mrb[0].mxu0
      %v4092 = vadd.f32 %v3931, %v4091
      %v4093 = vpop.f32.mrb[0].mxu0
      %4094 = vdwg.mxu0
      %4095 = vmatprep.subr.bf16.mxu0 0
      %4096 = vmatpush1.bf16.msra.mxu0 %v3371
      %4097 = vmatprep.subr.bf16.mxu0 0
      %4098 = vmatpush1.bf16.msra.mxu0 %v3372
      %4099 = vmatprep.subr.bf16.mxu0 0
      %4100 = vmatpush1.bf16.msra.mxu0 %v3373
      %4101 = vmatprep.subr.bf16.mxu0 0
      %4102 = vmatpush1.bf16.msra.mxu0 %v3374
      %4103 = vmatprep.subr.bf16.mxu0 0
      %4104 = vmatpush1.bf16.msra.mxu0 %v3375
      %4105 = vmatprep.subr.bf16.mxu0 0
      %4106 = vmatpush1.bf16.msra.mxu0 %v3376
      %4107 = vmatprep.subr.bf16.mxu0 0
      %4108 = vmatpush1.bf16.msra.mxu0 %v3377
      %4109 = vmatprep.subr.bf16.mxu0 0
      %4110 = vmatpush1.bf16.msra.mxu0 %v3378
      %4111 = vmatprep.subr.bf16.mxu0 0
      %4112 = vmatpush1.bf16.msra.mxu0 0
      %4113 = vmatprep.subr.bf16.mxu0 0
      %4114 = vmatpush1.bf16.msra.mxu0 0
      %4115 = vmatprep.subr.bf16.mxu0 0
      %4116 = vmatpush1.bf16.msra.mxu0 0
      %4117 = vmatprep.subr.bf16.mxu0 0
      %4118 = vmatpush1.bf16.msra.mxu0 0
      %4119 = vmatprep.subr.bf16.mxu0 0
      %4120 = vmatpush1.bf16.msra.mxu0 0
      %4121 = vmatprep.subr.bf16.mxu0 0
      %4122 = vmatpush1.bf16.msra.mxu0 0
      %4123 = vmatprep.subr.bf16.mxu0 0
      %4124 = vmatpush1.bf16.msra.mxu0 0
      %4125 = vmatprep.subr.bf16.mxu0 0
      %4126 = vmatpush1.bf16.msra.mxu0 0
      %4127 = vmatprep.mubr.bf16.mxu0 0
      %4128 = vmatmul.mubr.bf16.gmra.mrb[0].mxu0 %v2859
      %v4129 = vpop.f32.mrb[0].mxu0
      %v4130 = vadd.f32 %v3969, %v4129
      %v4131 = vpop.f32.mrb[0].mxu0
      %v4132 = vpop.f32.mrb[0].mxu0
      %v4133 = vadd.f32 %v3972, %v4132
      %v4134 = vpop.f32.mrb[0].mxu0
      %4135 = vmatprep.mubr.bf16.mxu0 0
      %4136 = vmatmul.mubr.bf16.gmra.mrb[0].mxu0 %v2860
      %v4137 = vpop.f32.mrb[0].mxu0
      %v4138 = vadd.f32 %v3977, %v4137
      %v4139 = vpop.f32.mrb[0].mxu0
      %v4140 = vpop.f32.mrb[0].mxu0
      %v4141 = vadd.f32 %v3980, %v4140
      %v4142 = vpop.f32.mrb[0].mxu0
      %4143 = vmatprep.mubr.bf16.mxu0 0
      %4144 = vmatmul.mubr.bf16.gmra.mrb[0].mxu0 %v2861
      %v4145 = vpop.f32.mrb[0].mxu0
      %v4146 = vadd.f32 %v3985, %v4145
      %v4147 = vpop.f32.mrb[0].mxu0
      %v4148 = vpop.f32.mrb[0].mxu0
      %v4149 = vadd.f32 %v3988, %v4148
      %v4150 = vpop.f32.mrb[0].mxu0
      %4151 = vmatprep.mubr.bf16.mxu0 0
      %4152 = vmatmul.mubr.bf16.gmra.mrb[0].mxu0 %v2862
      %v4153 = vpop.f32.mrb[0].mxu0
      %v4154 = vadd.f32 %v3993, %v4153
      %v4155 = vpop.f32.mrb[0].mxu0
      %v4156 = vpop.f32.mrb[0].mxu0
      %v4157 = vadd.f32 %v3996, %v4156
      %v4158 = vpop.f32.mrb[0].mxu0
      %4159 = vmatprep.mubr.bf16.mxu0 0
      %4160 = vmatmul.mubr.bf16.gmra.mrb[0].mxu0 %v2863
      %v4161 = vpop.f32.mrb[0].mxu0
      %v4162 = vadd.f32 %v4001, %v4161
      %v4163 = vpop.f32.mrb[0].mxu0
      %v4164 = vpop.f32.mrb[0].mxu0
      %v4165 = vadd.f32 %v4004, %v4164
      %v4166 = vpop.f32.mrb[0].mxu0
      %4167 = vmatprep.mubr.bf16.mxu0 0
      %4168 = vmatmul.mubr.bf16.gmra.mrb[0].mxu0 %v2864
      %v4169 = vpop.f32.mrb[0].mxu0
      %v4170 = vadd.f32 %v4009, %v4169
      %v4171 = vpop.f32.mrb[0].mxu0
      %v4172 = vpop.f32.mrb[0].mxu0
      %v4173 = vadd.f32 %v4012, %v4172
      %v4174 = vpop.f32.mrb[0].mxu0
      %4175 = vmatprep.mubr.bf16.mxu0 0
      %4176 = vmatmul.mubr.bf16.gmra.mrb[0].mxu0 %v2865
      %v4177 = vpop.f32.mrb[0].mxu0
      %v4178 = vadd.f32 %v4017, %v4177
      %v4179 = vpop.f32.mrb[0].mxu0
      %v4180 = vpop.f32.mrb[0].mxu0
      %v4181 = vadd.f32 %v4020, %v4180
      %v4182 = vpop.f32.mrb[0].mxu0
      %4183 = vmatprep.mubr.bf16.mxu0 0
      %4184 = vmatmul.mubr.bf16.gmra.mrb[0].mxu0 %v2866
      %v4185 = vpop.f32.mrb[0].mxu0
      %v4186 = vadd.f32 %v4025, %v4185
      %v4187 = vpop.f32.mrb[0].mxu0
      %v4188 = vpop.f32.mrb[0].mxu0
      %v4189 = vadd.f32 %v4028, %v4188
      %v4190 = vpop.f32.mrb[0].mxu0
      %4191 = vmatprep.mubr.bf16.mxu0 0
      %4192 = vmatmul.mubr.bf16.gmra.mrb[0].mxu0 %v2867
      %v4193 = vpop.f32.mrb[0].mxu0
      %v4194 = vadd.f32 %v4033, %v4193
      %v4195 = vpop.f32.mrb[0].mxu0
      %v4196 = vpop.f32.mrb[0].mxu0
      %v4197 = vadd.f32 %v4036, %v4196
      %v4198 = vpop.f32.mrb[0].mxu0
      %4199 = vmatprep.mubr.bf16.mxu0 0
      %4200 = vmatmul.mubr.bf16.gmra.mrb[0].mxu0 %v2868
      %v4201 = vpop.f32.mrb[0].mxu0
      %v4202 = vadd.f32 %v4041, %v4201
      %v4203 = vpop.f32.mrb[0].mxu0
      %v4204 = vpop.f32.mrb[0].mxu0
      %v4205 = vadd.f32 %v4044, %v4204
      %v4206 = vpop.f32.mrb[0].mxu0
      %4207 = vmatprep.mubr.bf16.mxu0 0
      %4208 = vmatmul.mubr.bf16.gmra.mrb[0].mxu0 %v2869
      %v4209 = vpop.f32.mrb[0].mxu0
      %v4210 = vadd.f32 %v4049, %v4209
      %v4211 = vpop.f32.mrb[0].mxu0
      %v4212 = vpop.f32.mrb[0].mxu0
      %v4213 = vadd.f32 %v4052, %v4212
      %v4214 = vpop.f32.mrb[0].mxu0
      %4215 = vmatprep.mubr.bf16.mxu0 0
      %4216 = vmatmul.mubr.bf16.gmra.mrb[0].mxu0 %v2870
      %v4217 = vpop.f32.mrb[0].mxu0
      %v4218 = vadd.f32 %v4057, %v4217
      %v4219 = vpop.f32.mrb[0].mxu0
      %v4220 = vpop.f32.mrb[0].mxu0
      %v4221 = vadd.f32 %v4060, %v4220
      %v4222 = vpop.f32.mrb[0].mxu0
      %4223 = vmatprep.mubr.bf16.mxu0 0
      %4224 = vmatmul.mubr.bf16.gmra.mrb[0].mxu0 %v2871
      %v4225 = vpop.f32.mrb[0].mxu0
      %v4226 = vadd.f32 %v4065, %v4225
      %v4227 = vpop.f32.mrb[0].mxu0
      %v4228 = vpop.f32.mrb[0].mxu0
      %v4229 = vadd.f32 %v4068, %v4228
      %v4230 = vpop.f32.mrb[0].mxu0
      %4231 = vmatprep.mubr.bf16.mxu0 0
      %4232 = vmatmul.mubr.bf16.gmra.mrb[0].mxu0 %v2872
      %v4233 = vpop.f32.mrb[0].mxu0
      %v4234 = vadd.f32 %v4073, %v4233
      %v4235 = vpop.f32.mrb[0].mxu0
      %v4236 = vpop.f32.mrb[0].mxu0
      %v4237 = vadd.f32 %v4076, %v4236
      %v4238 = vpop.f32.mrb[0].mxu0
      %4239 = vmatprep.mubr.bf16.mxu0 0
      %4240 = vmatmul.mubr.bf16.gmra.mrb[0].mxu0 %v2873
      %v4241 = vpop.f32.mrb[0].mxu0
      %v4242 = vadd.f32 %v4081, %v4241
      %v4243 = vpop.f32.mrb[0].mxu0
      %v4244 = vpop.f32.mrb[0].mxu0
      %v4245 = vadd.f32 %v4084, %v4244
      %v4246 = vpop.f32.mrb[0].mxu0
      %4247 = vmatprep.mubr.bf16.mxu0 0
      %4248 = vmatmul.mubr.bf16.gmra.mrb[0].mxu0 %v2874
      %v4249 = vpop.f32.mrb[0].mxu0
      %v4250 = vadd.f32 %v4089, %v4249
      %v4251 = vpop.f32.mrb[0].mxu0
      %v4252 = vpop.f32.mrb[0].mxu0
      %v4253 = vadd.f32 %v4092, %v4252
      %v4254 = vpop.f32.mrb[0].mxu0
      %4255 = vdwg.mxu0
      %v4256 = vld [vmem:[%s5] sm:$0x1]
      %v4258 = vlaneseq
      %v4259 = vshrl.u32 %v4258, 7
      %v4260 = vsub.s32 0, %v4259
      %v4261 = vrot.slane %v4256, %v4260
      %v4263 = vmul.f32 %v4130, %v4261
      %v4264 = vmul.f32 %v4133, %v4261
      %v4265 = vmul.f32 %v4138, %v4261
      %v4266 = vmul.f32 %v4141, %v4261
      %v4267 = vmul.f32 %v4146, %v4261
      %v4268 = vmul.f32 %v4149, %v4261
      %v4269 = vmul.f32 %v4154, %v4261
      %v4270 = vmul.f32 %v4157, %v4261
      %v4271 = vmul.f32 %v4162, %v4261
      %v4272 = vmul.f32 %v4165, %v4261
      %v4273 = vmul.f32 %v4170, %v4261
      %v4274 = vmul.f32 %v4173, %v4261
      %v4275 = vmul.f32 %v4178, %v4261
      %v4276 = vmul.f32 %v4181, %v4261
      %v4277 = vmul.f32 %v4186, %v4261
      %v4278 = vmul.f32 %v4189, %v4261
      %v4279 = vmul.f32 %v4194, %v4261
      %v4280 = vmul.f32 %v4197, %v4261
      %v4281 = vmul.f32 %v4202, %v4261
      %v4282 = vmul.f32 %v4205, %v4261
      %v4283 = vmul.f32 %v4210, %v4261
      %v4284 = vmul.f32 %v4213, %v4261
      %v4285 = vmul.f32 %v4218, %v4261
      %v4286 = vmul.f32 %v4221, %v4261
      %v4287 = vmul.f32 %v4226, %v4261
      %v4288 = vmul.f32 %v4229, %v4261
      %v4289 = vmul.f32 %v4234, %v4261
      %v4290 = vmul.f32 %v4237, %v4261
      %v4291 = vmul.f32 %v4242, %v4261
      %v4292 = vmul.f32 %v4245, %v4261
      %v4293 = vmul.f32 %v4250, %v4261
      %v4294 = vmul.f32 %v4253, %v4261
      %v4295 = vld [vmem:[%s6] sm:$0x1]
      %v4297 = vlaneseq
      %v4298 = vshrl.u32 %v4297, 7
      %v4299 = vsub.s32 0, %v4298
      %v4300 = vrot.slane %v4295, %v4299
      %v4302 = vadd.f32 %v4263, %v4300
      %v4303 = vadd.f32 %v4264, %v4300
      %v4304 = vadd.f32 %v4265, %v4300
      %v4305 = vadd.f32 %v4266, %v4300
      %v4306 = vadd.f32 %v4267, %v4300
      %v4307 = vadd.f32 %v4268, %v4300
      %v4308 = vadd.f32 %v4269, %v4300
      %v4309 = vadd.f32 %v4270, %v4300
      %v4310 = vadd.f32 %v4271, %v4300
      %v4311 = vadd.f32 %v4272, %v4300
      %v4312 = vadd.f32 %v4273, %v4300
      %v4313 = vadd.f32 %v4274, %v4300
      %v4314 = vadd.f32 %v4275, %v4300
      %v4315 = vadd.f32 %v4276, %v4300
      %v4316 = vadd.f32 %v4277, %v4300
      %v4317 = vadd.f32 %v4278, %v4300
      %v4318 = vadd.f32 %v4279, %v4300
      %v4319 = vadd.f32 %v4280, %v4300
      %v4320 = vadd.f32 %v4281, %v4300
      %v4321 = vadd.f32 %v4282, %v4300
      %v4322 = vadd.f32 %v4283, %v4300
      %v4323 = vadd.f32 %v4284, %v4300
      %v4324 = vadd.f32 %v4285, %v4300
      %v4325 = vadd.f32 %v4286, %v4300
      %v4326 = vadd.f32 %v4287, %v4300
      %v4327 = vadd.f32 %v4288, %v4300
      %v4328 = vadd.f32 %v4289, %v4300
      %v4329 = vadd.f32 %v4290, %v4300
      %v4330 = vadd.f32 %v4291, %v4300
      %v4331 = vadd.f32 %v4292, %v4300
      %v4332 = vadd.f32 %v4293, %v4300
      %v4333 = vadd.f32 %v4294, %v4300
      %v4334 = vadd.f32 %v4302, %v312
      %v4335 = vadd.f32 %v4303, %v313
      %v4336 = vadd.f32 %v4304, %v314
      %v4337 = vadd.f32 %v4305, %v315
      %v4338 = vadd.f32 %v4306, %v316
      %v4339 = vadd.f32 %v4307, %v317
      %v4340 = vadd.f32 %v4308, %v318
      %v4341 = vadd.f32 %v4309, %v319
      %v4342 = vadd.f32 %v4310, %v320
      %v4343 = vadd.f32 %v4311, %v321
      %v4344 = vadd.f32 %v4312, %v322
      %v4345 = vadd.f32 %v4313, %v323
      %v4346 = vadd.f32 %v4314, %v324
      %v4347 = vadd.f32 %v4315, %v325
      %v4348 = vadd.f32 %v4316, %v326
      %v4349 = vadd.f32 %v4317, %v327
      %v4350 = vadd.f32 %v4318, %v328
      %v4351 = vadd.f32 %v4319, %v329
      %v4352 = vadd.f32 %v4320, %v330
      %v4353 = vadd.f32 %v4321, %v331
      %v4354 = vadd.f32 %v4322, %v332
      %v4355 = vadd.f32 %v4323, %v333
      %v4356 = vadd.f32 %v4324, %v334
      %v4357 = vadd.f32 %v4325, %v335
      %v4358 = vadd.f32 %v4326, %v336
      %v4359 = vadd.f32 %v4327, %v337
      %v4360 = vadd.f32 %v4328, %v338
      %v4361 = vadd.f32 %v4329, %v339
      %v4362 = vadd.f32 %v4330, %v340
      %v4363 = vadd.f32 %v4331, %v341
      %v4364 = vadd.f32 %v4332, %v342
      %v4365 = vadd.f32 %v4333, %v343
      %v4366 = vmax.f32 %v4334, 0.0
      %v4367 = vmax.f32 %v4335, 0.0
      %v4368 = vmax.f32 %v4336, 0.0
      %v4369 = vmax.f32 %v4337, 0.0
      %v4370 = vmax.f32 %v4338, 0.0
      %v4371 = vmax.f32 %v4339, 0.0
      %v4372 = vmax.f32 %v4340, 0.0
      %v4373 = vmax.f32 %v4341, 0.0
      %v4374 = vmax.f32 %v4342, 0.0
      %v4375 = vmax.f32 %v4343, 0.0
      %v4376 = vmax.f32 %v4344, 0.0
      %v4377 = vmax.f32 %v4345, 0.0
      %v4378 = vmax.f32 %v4346, 0.0
      %v4379 = vmax.f32 %v4347, 0.0
      %v4380 = vmax.f32 %v4348, 0.0
      %v4381 = vmax.f32 %v4349, 0.0
      %v4382 = vmax.f32 %v4350, 0.0
      %v4383 = vmax.f32 %v4351, 0.0
      %v4384 = vmax.f32 %v4352, 0.0
      %v4385 = vmax.f32 %v4353, 0.0
      %v4386 = vmax.f32 %v4354, 0.0
      %v4387 = vmax.f32 %v4355, 0.0
      %v4388 = vmax.f32 %v4356, 0.0
      %v4389 = vmax.f32 %v4357, 0.0
      %v4390 = vmax.f32 %v4358, 0.0
      %v4391 = vmax.f32 %v4359, 0.0
      %v4392 = vmax.f32 %v4360, 0.0
      %v4393 = vmax.f32 %v4361, 0.0
      %v4394 = vmax.f32 %v4362, 0.0
      %v4395 = vmax.f32 %v4363, 0.0
      %v4396 = vmax.f32 %v4364, 0.0
      %v4397 = vmax.f32 %v4365, 0.0
      %4398 = vst [vmem:[%s278] sm:$0xff] %v4366
      %4399 = vst [vmem:[%s278 + $0x8] sm:$0xff] %v4367
      %4400 = vst [vmem:[%s278 + $0x10] sm:$0xff] %v4368
      %4401 = vst [vmem:[%s278 + $0x18] sm:$0xff] %v4369
      %4402 = vst [vmem:[%s278 + $0x20] sm:$0xff] %v4370
      %4403 = vst [vmem:[%s278 + $0x28] sm:$0xff] %v4371
      %4404 = vst [vmem:[%s278 + $0x30] sm:$0xff] %v4372
      %4405 = vst [vmem:[%s278 + $0x38] sm:$0xff] %v4373
      %4406 = vst [vmem:[%s278 + $0x40] sm:$0xff] %v4374
      %4407 = vst [vmem:[%s278 + $0x48] sm:$0xff] %v4375
      %4408 = vst [vmem:[%s278 + $0x50] sm:$0xff] %v4376
      %4409 = vst [vmem:[%s278 + $0x58] sm:$0xff] %v4377
      %4410 = vst [vmem:[%s278 + $0x60] sm:$0xff] %v4378
      %4411 = vst [vmem:[%s278 + $0x68] sm:$0xff] %v4379
      %4412 = vst [vmem:[%s278 + $0x70] sm:$0xff] %v4380
      %4413 = vst [vmem:[%s278 + $0x78] sm:$0xff] %v4381
      %4414 = vst [vmem:[%s278 + $0x80] sm:$0xff] %v4382
      %4415 = vst [vmem:[%s278 + $0x88] sm:$0xff] %v4383
      %4416 = vst [vmem:[%s278 + $0x90] sm:$0xff] %v4384
      %4417 = vst [vmem:[%s278 + $0x98] sm:$0xff] %v4385
      %4418 = vst [vmem:[%s278 + $0xa0] sm:$0xff] %v4386
      %4419 = vst [vmem:[%s278 + $0xa8] sm:$0xff] %v4387
      %4420 = vst [vmem:[%s278 + $0xb0] sm:$0xff] %v4388
      %4421 = vst [vmem:[%s278 + $0xb8] sm:$0xff] %v4389
      %4422 = vst [vmem:[%s278 + $0xc0] sm:$0xff] %v4390
      %4423 = vst [vmem:[%s278 + $0xc8] sm:$0xff] %v4391
      %4424 = vst [vmem:[%s278 + $0xd0] sm:$0xff] %v4392
      %4425 = vst [vmem:[%s278 + $0xd8] sm:$0xff] %v4393
      %4426 = vst [vmem:[%s278 + $0xe0] sm:$0xff] %v4394
      %4427 = vst [vmem:[%s278 + $0xe8] sm:$0xff] %v4395
      %4428 = vst [vmem:[%s278 + $0xf0] sm:$0xff] %v4396
      %4429 = vst [vmem:[%s278 + $0xf8] sm:$0xff] %v4397
      %p4430 = scmp.lt.s32.totalorder %s18, 1
      %s4431 = scalar_select %p4430, %s18, 1
      %s4432 = smul.addr %s4431, 32
      %s4433 = smul.addr %s4432, 8
      %s4434 = scalar_lea.vmem %s7, %s4433
      // Predicated region
      $region49: #{basic_block_forward.1} parent=47 // pred_check
        %p4435 = pneg %p188
      $region50: #{basic_block_forward.1} parent=47 // pred_check_branch
        %4437 = sbr.rel (%p4435) target = $region52
      $region51: #{basic_block_forward.1} parent=47 // pred_region
        _
      $region52: #{basic_block_forward.1} parent=47 // pred_fallthru
        _
    $region48: #{basic_block_forward.1} parent=5 // pred_fallthru
      _
    %p4438 = scmp.le.s32.totalorder 2, %s13
    // Predicated region
    $region53: #{basic_block_forward.1} parent=5 // pred_check
      %p4439 = pneg %p4438
    $region54: #{basic_block_forward.1} parent=5 // pred_check_branch
      %4441 = sbr.rel (%p4439) target = $region56
    $region55: #{basic_block_forward.1} parent=5 // pred_region
      %s4442 = ssub.s32 %s13, 2
      // Predicated region
      $region57: #{basic_block_forward.1} parent=55 // pred_check
        %p4443 = pneg %p194
      $region58: #{basic_block_forward.1} parent=55 // pred_check_branch
        %4445 = sbr.rel (%p4443) target = $region60
      $region59: #{basic_block_forward.1} parent=55 // pred_region
        %p4446 = scmp.lt.s32.totalorder %s19, 1
        %s4447 = scalar_select %p4446, %s19, 1
        %s4448 = smul.addr %s4447, 32
        %s4449 = smul.addr %s4448, 8
        %s4450 = scalar_lea.vmem %s7, %s4449
      $region60: #{basic_block_forward.1} parent=55 // pred_fallthru
        _
    $region56: #{basic_block_forward.1} parent=5 // pred_fallthru
      _
  $region6: #{basic_block_forward.1} parent=0 // loop_footer
    %s17 = sadd.s32 1, %s13
  $region7: #{basic_block_forward.1} parent=0 // loop_footer_branch
    %12 = sbr.rel target = $region3
  $region8: #{basic_block_forward.1} parent=0 // loop_exit
    _

</llo_original>
